<compile_context>
chip_gen: v7x
topology: tpu7x:2x2x1
jax: 0.10.0
libtpu: 0.0.40
codegen_flags: <defaults>
</compile_context>

<pallas_src>
import functools

import numpy as np

import jax
import jax.numpy as jnp
from jax.experimental import pallas as pl

LANES = 128  # TPU lane width; all matmul outputs are padded to this.


# ----------------------------------------------------------------------------
# Pallas kernels
# ----------------------------------------------------------------------------
def _matmul_bias_act_kernel(x_ref, w_ref, b_ref, o_ref, *, relu):
    """out = act(x @ w + b); whole arrays in VMEM, lane-dense (M, 128*) store."""
    acc = jnp.dot(x_ref[...], w_ref[...], preferred_element_type=jnp.float32)
    acc = acc + b_ref[...]
    if relu:
        acc = jnp.maximum(acc, 0.0)
    o_ref[...] = acc.astype(o_ref.dtype)


def fused_matmul(x, w, b, *, relu=False):
    """act(x @ w + b).  Single whole-array block (grid=(1,)): these matmuls are
    tiny, so any grid split only adds per-step overhead."""
    M, K = x.shape
    Np = w.shape[1]
    return pl.pallas_call(
        functools.partial(_matmul_bias_act_kernel, relu=relu),
        grid=(1,),
        in_specs=[
            pl.BlockSpec((M, K), lambda i: (0, 0)),
            pl.BlockSpec((K, Np), lambda i: (0, 0)),
            pl.BlockSpec((1, Np), lambda i: (0, 0)),
        ],
        out_specs=pl.BlockSpec((M, Np), lambda i: (0, 0)),
        out_shape=jax.ShapeDtypeStruct((M, Np), jnp.float32),
    )(x, w, b.reshape(1, Np))


def _pool_max_kernel(x_ref, o_ref):
    """Max over the leading tap axis; last axis is a dense N*oh*ow*C lane axis."""
    kk = x_ref.shape[0]
    acc = x_ref[0, :]
    for k in range(1, kk):
        acc = jnp.maximum(acc, x_ref[k, :])
    o_ref[0, :] = acc


def _res_block_kernel(x1_ref, w1_ref, b1_ref, s2_ref, c2_ref, g_ref, w2_ref,
                      b2_ref, xds_ref, wds_ref, bds_ref, o_ref):
    """Whole ResBlock fused: relu(bn2(conv1(bn1(x)))) -> relu(bn2(conv2(bn1(.))))
    plus downscale(x) residual add.  Everything stays in VMEM/vregs; the only
    HBM store is the final lane-dense (M2, 128) output."""
    # block conv1: bn1 was applied in glue (pre zero-pad), bn2 folded into w1/b1
    y1 = jnp.dot(x1_ref[...], w1_ref[...], preferred_element_type=jnp.float32)
    y1 = jnp.maximum(y1 + b1_ref[...], 0.0)                       # (M2, C1)

    # bn1 of block conv2, applied BEFORE the conv's implicit zero padding
    y1a = y1 * s2_ref[...] + c2_ref[...]                          # (M2, C1)

    # block conv2 as 9 tap accumulations: gather (0/1 matrix, zero rows encode
    # the zero padding) then tap-weight matmul; bn2 folded into w2/b2.
    m2 = o_ref.shape[0]
    acc = jnp.zeros((m2, o_ref.shape[1]), jnp.float32)
    for t in range(g_ref.shape[0]):
        gathered = jnp.dot(g_ref[t], y1a, preferred_element_type=jnp.float32)
        acc = acc + jnp.dot(gathered, w2_ref[t],
                            preferred_element_type=jnp.float32)
    y2 = jnp.maximum(acc + b2_ref[...], 0.0)                      # (M2, 128)

    # downscale 1x1 conv (stride applied in glue) + residual add, fused epilogue
    ds = jnp.dot(xds_ref[...], wds_ref[...], preferred_element_type=jnp.float32)
    o_ref[...] = (y2 + ds + bds_ref[...]).astype(o_ref.dtype)


# ----------------------------------------------------------------------------
# Glue: BN folding, padding helpers, im2col, gather matrices
# ----------------------------------------------------------------------------
def bn_affine(p, eps=1e-5):
    scale = p["gamma"] / jnp.sqrt(p["var"] + eps)
    shift = p["beta"] - p["mean"] * scale
    return scale, shift


def round_up(n, m):
    return ((n + m - 1) // m) * m


def pad_axis(a, axis, target):
    pad = target - a.shape[axis]
    if pad == 0:
        return a
    cfg = [(0, 0)] * a.ndim
    cfg[axis] = (0, pad)
    return jnp.pad(a, cfg)


def im2col(x_nhwc, kh, kw, stride, pad):
    x = jnp.pad(x_nhwc, ((0, 0), (pad, pad), (pad, pad), (0, 0)))
    N, H, W, C = x.shape
    oh = (H - kh) // stride + 1
    ow = (W - kw) // stride + 1
    cols = []
    for i in range(kh):
        for j in range(kw):
            cols.append(x[:, i:i + stride * oh:stride, j:j + stride * ow:stride, :])
    cols = jnp.stack(cols, axis=3)  # (N, oh, ow, kh*kw, C)
    return cols, (N, oh, ow)


def _conv_gather_mats(n, h, w, k, pad):
    """G[t, m, m'] = 1 iff output row m takes its tap-t input from row m' of a
    stride-1 'same' conv; out-of-bounds taps are all-zero rows (== zero pad)."""
    m_total = n * h * w
    g = np.zeros((k * k, m_total, m_total), np.float32)
    for m in range(m_total):
        b = m // (h * w)
        rem = m % (h * w)
        i, j = rem // w, rem % w
        for di in range(k):
            for dj in range(k):
                si, sj = i + di - pad, j + dj - pad
                if 0 <= si < h and 0 <= sj < w:
                    g[di * k + dj, m, (b * h + si) * w + sj] = 1.0
    return jnp.asarray(g)


# ----------------------------------------------------------------------------
# Network pieces
# ----------------------------------------------------------------------------
def cnn_block(x_nhwc, params, stride, pad):
    """relu(bn2(conv(bn1(x)))).  bn1 applied to x BEFORE zero padding
    (correctness fix); bn2 folded into the conv weight/bias."""
    O, I, kh, kw = params["w"].shape
    a1, c1 = bn_affine(params["bn1"])
    a2, c2 = bn_affine(params["bn2"])
    xa = x_nhwc * a1 + c1
    cols, (N, oh, ow) = im2col(xa, kh, kw, stride, pad)
    K = kh * kw * I
    Kp = round_up(K, LANES)
    x_mat = pad_axis(cols.reshape(N * oh * ow, K), 1, Kp)
    w_mat = jnp.transpose(params["w"], (2, 3, 1, 0)).reshape(K, O) * a2[None, :]
    w_mat = pad_axis(pad_axis(w_mat, 0, Kp), 1, LANES)      # lane-dense output
    b = pad_axis(c2, 0, LANES)
    y = fused_matmul(x_mat, w_mat, b, relu=True)            # (M, 128)
    return y[:, :O].reshape(N, oh, ow, O)


def maxpool2d(x_nhwc, k, stride, pad):
    # Input is post-ReLU (>= 0) and every window contains at least one real
    # element, so 0-padding here is numerically identical to PyTorch's -inf pad.
    C = x_nhwc.shape[-1]
    cols, (N, oh, ow) = im2col(x_nhwc, k, k, stride, pad)
    L = N * oh * ow * C
    windows = jnp.moveaxis(cols, 3, 0).reshape(k * k, L)    # taps leading, dense lanes
    y = pl.pallas_call(
        _pool_max_kernel,
        out_shape=jax.ShapeDtypeStruct((1, L), jnp.float32),
    )(windows)
    return y.reshape(N, oh, ow, C)


def res_block(x_nhwc, params, stride):
    N, H, W, Cin = x_nhwc.shape
    p1, p2 = params["conv1"], params["conv2"]
    C1 = p1["w"].shape[0]
    C2 = p2["w"].shape[0]
    oh = (H + 2 - 3) // stride + 1
    ow = (W + 2 - 3) // stride + 1
    M2 = N * oh * ow

    # block conv1: bn1 pre-applied (before padding), bn2 folded
    a11, c11 = bn_affine(p1["bn1"])
    a12, c12 = bn_affine(p1["bn2"])
    cols, _ = im2col(x_nhwc * a11 + c11, 3, 3, stride, 1)
    K1 = 9 * Cin
    K1p = round_up(K1, LANES)
    x1_mat = pad_axis(cols.reshape(M2, K1), 1, K1p)
    w1_mat = jnp.transpose(p1["w"], (2, 3, 1, 0)).reshape(K1, C1) * a12[None, :]
    w1_mat = pad_axis(w1_mat, 0, K1p)
    b1 = c12.reshape(1, C1)

    # block conv2: bn1 affine applied in-kernel (pre zero-pad), bn2 folded
    a21, c21 = bn_affine(p2["bn1"])
    a22, c22 = bn_affine(p2["bn2"])
    s2 = a21.reshape(1, C1)
    t2 = c21.reshape(1, C1)
    w2 = jnp.transpose(p2["w"], (2, 3, 1, 0)).reshape(9, C1, C2) * a22[None, None, :]
    w2 = pad_axis(w2, 2, LANES)                             # (9, C1, 128)
    b2 = pad_axis(c22, 0, LANES).reshape(1, LANES)
    g = _conv_gather_mats(N, oh, ow, 3, 1)                  # (9, M2, M2) constants

    # downscale: plain 1x1 strided conv with bias (no BN, no relu)
    xds_mat = x_nhwc[:, ::stride, ::stride, :].reshape(M2, Cin)
    wds = pad_axis(params["ds_w"].reshape(C2, Cin).T, 1, LANES)
    bds = pad_axis(params["ds_b"], 0, LANES).reshape(1, LANES)

    out = pl.pallas_call(
        _res_block_kernel,
        out_shape=jax.ShapeDtypeStruct((M2, LANES), jnp.float32),
    )(x1_mat, w1_mat, b1, s2, t2, g, w2, b2, xds_mat, wds, bds)
    return out[:, :C2].reshape(N, oh, ow, C2)


def adaptive_maxpool2d(x_nhwc, out_size):
    N, H, W, C = x_nhwc.shape

    def bounds(insz):
        return [((i * insz) // out_size, -(-((i + 1) * insz) // out_size))
                for i in range(out_size)]

    hb, wb = bounds(H), bounds(W)
    if all(e - s == 1 for s, e in hb) and all(e - s == 1 for s, e in wb):
        # Degenerate (input <= output): every window has exactly one element,
        # i.e. a nearest-neighbour gather — no reduction, no kernel needed.
        hi = jnp.asarray([s for s, _ in hb])
        wi = jnp.asarray([s for s, _ in wb])
        return x_nhwc[:, hi][:, :, wi]
    # TODO(synk): general adaptive max pooling path left as XLA glue (tiny tensor).
    rows = []
    for hs, he in hb:
        rows.append(jnp.stack([jnp.max(x_nhwc[:, hs:he, ws:we, :], axis=(1, 2))
                               for ws, we in wb], axis=1))
    return jnp.stack(rows, axis=1)


def resnet_forward(x_nchw, params):
    x = jnp.transpose(x_nchw, (0, 2, 3, 1)).astype(jnp.float32)   # NCHW -> NHWC
    x = cnn_block(x, params["conv1"], stride=1, pad=3)            # (N,16,16,8)
    x = maxpool2d(x, 3, 2, 1)                                     # (N, 8, 8,8)
    x = res_block(x, params["res1"], 2)                           # (N, 4, 4,16)
    x = res_block(x, params["res2"], 2)                           # (N, 2, 2,32)
    x = adaptive_maxpool2d(x, 4)                                  # (N, 4, 4,32)
    # back to NCHW, flatten exactly like torch's x.view(N, -1)
    n = x.shape[0]
    x = jnp.transpose(x, (0, 3, 1, 2)).reshape(n, -1)             # (N, 512)
    # BatchNorm1d(512) folded into the final Linear, output padded lane-dense
    a, c = bn_affine(params["bn"])
    W = params["fc_w"]
    b = params["fc_b"]
    nc = W.shape[0]
    w_mat = pad_axis((W * a[None, :]).T, 1, LANES)                # (512, 128)
    b_eff = pad_axis(b + W @ c, 0, LANES)
    y = fused_matmul(x, w_mat, b_eff, relu=False)                 # (N, 128)
    return y[:, :nc]


# ----------------------------------------------------------------------------
# Deterministic parameter initialization (shapes match the PyTorch module)
# ----------------------------------------------------------------------------
def init_bn(key, n):
    k1, k2, k3, k4 = jax.random.split(key, 4)
    return dict(
        gamma=1.0 + 0.1 * jax.random.normal(k1, (n,), jnp.float32),
        beta=0.1 * jax.random.normal(k2, (n,), jnp.float32),
        mean=0.1 * jax.random.normal(k3, (n,), jnp.float32),
        var=1.0 + 0.1 * jnp.abs(jax.random.normal(k4, (n,), jnp.float32)),
    )


def init_cnn_block(key, cin, cout, k):
    k1, k2, k3 = jax.random.split(key, 3)
    w = jax.random.normal(k1, (cout, cin, k, k), jnp.float32) / jnp.sqrt(cin * k * k)
    return dict(bn1=init_bn(k2, cin), w=w, bn2=init_bn(k3, cout))


def init_res_block(key, cin, cout):
    k1, k2, k3, k4 = jax.random.split(key, 4)
    return dict(
        conv1=init_cnn_block(k1, cin, cout, 3),
        conv2=init_cnn_block(k2, cout, cout, 3),
        ds_w=jax.random.normal(k3, (cout, cin, 1, 1), jnp.float32) / jnp.sqrt(cin),
        ds_b=0.1 * jax.random.normal(k4, (cout,), jnp.float32),
    )


def init_params(key, in_channels, num_classes):
    keys = jax.random.split(key, 6)
    return dict(
        conv1=init_cnn_block(keys[0], in_channels, 8, 7),
        res1=init_res_block(keys[1], 8, 16),
        res2=init_res_block(keys[2], 16, 32),
        bn=init_bn(keys[3], 512),
        fc_w=jax.random.normal(keys[4], (num_classes, 512), jnp.float32) / jnp.sqrt(512.0),
        fc_b=0.1 * jax.random.normal(keys[5], (num_classes,), jnp.float32),
    )


if __name__ == "__main__":
    key = jax.random.PRNGKey(0)
    kx, kp = jax.random.split(key)
    in_channels, num_classes = 4, 10
    x = jax.random.normal(kx, (2, in_channels, 16, 16), jnp.float32)  # NCHW
    params = init_params(kp, in_channels, num_classes)

    out = jax.jit(resnet_forward)(x, params)
    out = jax.block_until_ready(out)
    assert out.shape == (2, num_classes), out.shape
    assert bool(jnp.all(jnp.isfinite(out)))
    print("KERNEL_OK")
</pallas_src>

<mosaic_0001>
module attributes {stable_mosaic.version = 11 : i64} {
  func.func @_matmul_bias_act_kernel(%arg0: i32, %arg1: memref<512x256xf32, #tpu.memory_space<vmem>>, %arg2: memref<256x128xf32, #tpu.memory_space<vmem>>, %arg3: memref<1x128xf32, #tpu.memory_space<vmem>>, %arg4: memref<512x128xf32, #tpu.memory_space<vmem>>) attributes {dimension_semantics = [#tpu.dimension_semantics<arbitrary>], iteration_bounds = array<i64: 1>, scalar_prefetch = 0 : i64, scratch_operands = 0 : i64, tpu.core_type = #tpu.core_type<tc>, window_params = [{pipeline_mode = #tpu.pipeline_mode<synchronous>, transform_indices = @transform_0, window_bounds = array<i64: 512, 256>}, {pipeline_mode = #tpu.pipeline_mode<synchronous>, transform_indices = @transform_1, window_bounds = array<i64: 256, 128>}, {pipeline_mode = #tpu.pipeline_mode<synchronous>, transform_indices = @transform_2, window_bounds = array<i64: 1, 128>}, {pipeline_mode = #tpu.pipeline_mode<synchronous>, transform_indices = @transform_3, window_bounds = array<i64: 512, 128>}]} {
    %c0 = arith.constant 0 : index
    %c0_0 = arith.constant 0 : index
    %0 = vector.load %arg1[%c0, %c0_0] : memref<512x256xf32, #tpu.memory_space<vmem>>, vector<512x256xf32>
    %c0_1 = arith.constant 0 : index
    %c0_2 = arith.constant 0 : index
    %1 = vector.load %arg2[%c0_1, %c0_2] : memref<256x128xf32, #tpu.memory_space<vmem>>, vector<256x128xf32>
    %cst = arith.constant dense<0.000000e+00> : vector<512x128xf32>
    %2 = tpu.matmul %0, %1, %cst {dimension_numbers = #tpu.dot_dimension_numbers<[1], [0], [0], [1], [0, 0, 1, 1], [], []>} : vector<512x256xf32>, vector<256x128xf32>, vector<512x128xf32> -> vector<512x128xf32>
    %c0_3 = arith.constant 0 : index
    %c0_4 = arith.constant 0 : index
    %3 = vector.load %arg3[%c0_3, %c0_4] : memref<1x128xf32, #tpu.memory_space<vmem>>, vector<1x128xf32>
    %4 = vector.broadcast %3 : vector<1x128xf32> to vector<512x128xf32>
    %5 = arith.addf %2, %4 : vector<512x128xf32>
    %cst_5 = arith.constant 0.000000e+00 : f32
    %6 = vector.broadcast %cst_5 : f32 to vector<512x128xf32>
    %7 = arith.maximumf %5, %6 : vector<512x128xf32>
    %c0_6 = arith.constant 0 : index
    %c0_7 = arith.constant 0 : index
    %8 = vector.load %arg4[%c0_6, %c0_7] : memref<512x128xf32, #tpu.memory_space<vmem>>, vector<512x128xf32>
    tpu.vector_store %arg4[%c0_6, %c0_7], %7 {strides = array<i32>} : memref<512x128xf32, #tpu.memory_space<vmem>>, vector<512x128xf32>,
    return
  }
  func.func @transform_0(%arg0: i32) -> (i32, i32) {
    %c0_i32 = arith.constant 0 : i32
    %c0_i32_0 = arith.constant 0 : i32
    %c0_i32_1 = arith.constant 0 : i32
    return %c0_i32, %c0_i32_0 : i32, i32
  }
  func.func @transform_1(%arg0: i32) -> (i32, i32) {
    %c0_i32 = arith.constant 0 : i32
    %c0_i32_0 = arith.constant 0 : i32
    %c0_i32_1 = arith.constant 0 : i32
    return %c0_i32, %c0_i32_0 : i32, i32
  }
  func.func @transform_2(%arg0: i32) -> (i32, i32) {
    %c0_i32 = arith.constant 0 : i32
    %c0_i32_0 = arith.constant 0 : i32
    %c0_i32_1 = arith.constant 0 : i32
    return %c0_i32, %c0_i32_0 : i32, i32
  }
  func.func @transform_3(%arg0: i32) -> (i32, i32) {
    %c0_i32 = arith.constant 0 : i32
    %c0_i32_0 = arith.constant 0 : i32
    %c0_i32_1 = arith.constant 0 : i32
    return %c0_i32, %c0_i32_0 : i32, i32
  }
}

module attributes {stable_mosaic.version = 11 : i64} {
  func.func @_pool_max_kernel(%arg0: memref<9x1024xf32, #tpu.memory_space<vmem>>, %arg1: memref<1x1024xf32, #tpu.memory_space<vmem>>) attributes {dimension_semantics = [], scalar_prefetch = 0 : i64, scratch_operands = 0 : i64, tpu.core_type = #tpu.core_type<tc>} {
    %c0 = arith.constant 0 : index
    %c0_0 = arith.constant 0 : index
    %0 = vector.load %arg0[%c0, %c0_0] : memref<9x1024xf32, #tpu.memory_space<vmem>>, vector<1x1024xf32>
    %1 = vector.shape_cast %0 : vector<1x1024xf32> to vector<1024xf32>
    %c1 = arith.constant 1 : index
    %c0_1 = arith.constant 0 : index
    %2 = vector.load %arg0[%c1, %c0_1] : memref<9x1024xf32, #tpu.memory_space<vmem>>, vector<1x1024xf32>
    %3 = vector.shape_cast %2 : vector<1x1024xf32> to vector<1024xf32>
    %4 = arith.maximumf %1, %3 : vector<1024xf32>
    %c2 = arith.constant 2 : index
    %c0_2 = arith.constant 0 : index
    %5 = vector.load %arg0[%c2, %c0_2] : memref<9x1024xf32, #tpu.memory_space<vmem>>, vector<1x1024xf32>
    %6 = vector.shape_cast %5 : vector<1x1024xf32> to vector<1024xf32>
    %7 = arith.maximumf %4, %6 : vector<1024xf32>
    %c3 = arith.constant 3 : index
    %c0_3 = arith.constant 0 : index
    %8 = vector.load %arg0[%c3, %c0_3] : memref<9x1024xf32, #tpu.memory_space<vmem>>, vector<1x1024xf32>
    %9 = vector.shape_cast %8 : vector<1x1024xf32> to vector<1024xf32>
    %10 = arith.maximumf %7, %9 : vector<1024xf32>
    %c4 = arith.constant 4 : index
    %c0_4 = arith.constant 0 : index
    %11 = vector.load %arg0[%c4, %c0_4] : memref<9x1024xf32, #tpu.memory_space<vmem>>, vector<1x1024xf32>
    %12 = vector.shape_cast %11 : vector<1x1024xf32> to vector<1024xf32>
    %13 = arith.maximumf %10, %12 : vector<1024xf32>
    %c5 = arith.constant 5 : index
    %c0_5 = arith.constant 0 : index
    %14 = vector.load %arg0[%c5, %c0_5] : memref<9x1024xf32, #tpu.memory_space<vmem>>, vector<1x1024xf32>
    %15 = vector.shape_cast %14 : vector<1x1024xf32> to vector<1024xf32>
    %16 = arith.maximumf %13, %15 : vector<1024xf32>
    %c6 = arith.constant 6 : index
    %c0_6 = arith.constant 0 : index
    %17 = vector.load %arg0[%c6, %c0_6] : memref<9x1024xf32, #tpu.memory_space<vmem>>, vector<1x1024xf32>
    %18 = vector.shape_cast %17 : vector<1x1024xf32> to vector<1024xf32>
    %19 = arith.maximumf %16, %18 : vector<1024xf32>
    %c7 = arith.constant 7 : index
    %c0_7 = arith.constant 0 : index
    %20 = vector.load %arg0[%c7, %c0_7] : memref<9x1024xf32, #tpu.memory_space<vmem>>, vector<1x1024xf32>
    %21 = vector.shape_cast %20 : vector<1x1024xf32> to vector<1024xf32>
    %22 = arith.maximumf %19, %21 : vector<1024xf32>
    %c8 = arith.constant 8 : index
    %c0_8 = arith.constant 0 : index
    %23 = vector.load %arg0[%c8, %c0_8] : memref<9x1024xf32, #tpu.memory_space<vmem>>, vector<1x1024xf32>
    %24 = vector.shape_cast %23 : vector<1x1024xf32> to vector<1024xf32>
    %25 = arith.maximumf %22, %24 : vector<1024xf32>
    %c0_9 = arith.constant 0 : index
    %c0_10 = arith.constant 0 : index
    %26 = vector.load %arg1[%c0_9, %c0_10] : memref<1x1024xf32, #tpu.memory_space<vmem>>, vector<1x1024xf32>
    %27 = vector.shape_cast %26 : vector<1x1024xf32> to vector<1024xf32>
    %28 = vector.shape_cast %25 : vector<1024xf32> to vector<1x1024xf32>
    tpu.vector_store %arg1[%c0_9, %c0_10], %28 {strides = array<i32>} : memref<1x1024xf32, #tpu.memory_space<vmem>>, vector<1x1024xf32>,
    return
  }
}

module attributes {stable_mosaic.version = 11 : i64} {
  func.func @_res_block_kernel(%arg0: memref<32x128xf32, #tpu.memory_space<vmem>>, %arg1: memref<128x16xf32, #tpu.memory_space<vmem>>, %arg2: memref<1x16xf32, #tpu.memory_space<vmem>>, %arg3: memref<1x16xf32, #tpu.memory_space<vmem>>, %arg4: memref<1x16xf32, #tpu.memory_space<vmem>>, %arg5: memref<9x32x32xf32, #tpu.memory_space<vmem>>, %arg6: memref<9x16x128xf32, #tpu.memory_space<vmem>>, %arg7: memref<1x128xf32, #tpu.memory_space<vmem>>, %arg8: memref<32x8xf32, #tpu.memory_space<vmem>>, %arg9: memref<8x128xf32, #tpu.memory_space<vmem>>, %arg10: memref<1x128xf32, #tpu.memory_space<vmem>>, %arg11: memref<32x128xf32, #tpu.memory_space<vmem>>) attributes {dimension_semantics = [], scalar_prefetch = 0 : i64, scratch_operands = 0 : i64, tpu.core_type = #tpu.core_type<tc>} {
    %c0 = arith.constant 0 : index
    %c0_0 = arith.constant 0 : index
    %0 = vector.load %arg0[%c0, %c0_0] : memref<32x128xf32, #tpu.memory_space<vmem>>, vector<32x128xf32>
    %c0_1 = arith.constant 0 : index
    %c0_2 = arith.constant 0 : index
    %1 = vector.load %arg1[%c0_1, %c0_2] : memref<128x16xf32, #tpu.memory_space<vmem>>, vector<128x16xf32>
    %cst = arith.constant dense<0.000000e+00> : vector<32x16xf32>
    %2 = tpu.matmul %0, %1, %cst {dimension_numbers = #tpu.dot_dimension_numbers<[1], [0], [0], [1], [0, 0, 1, 1], [], []>} : vector<32x128xf32>, vector<128x16xf32>, vector<32x16xf32> -> vector<32x16xf32>
    %c0_3 = arith.constant 0 : index
    %c0_4 = arith.constant 0 : index
    %3 = vector.load %arg2[%c0_3, %c0_4] : memref<1x16xf32, #tpu.memory_space<vmem>>, vector<1x16xf32>
    %4 = vector.broadcast %3 : vector<1x16xf32> to vector<32x16xf32>
    %5 = arith.addf %2, %4 : vector<32x16xf32>
    %cst_5 = arith.constant 0.000000e+00 : f32
    %6 = vector.broadcast %cst_5 : f32 to vector<32x16xf32>
    %7 = arith.maximumf %5, %6 : vector<32x16xf32>
    %c0_6 = arith.constant 0 : index
    %c0_7 = arith.constant 0 : index
    %8 = vector.load %arg3[%c0_6, %c0_7] : memref<1x16xf32, #tpu.memory_space<vmem>>, vector<1x16xf32>
    %9 = vector.broadcast %8 : vector<1x16xf32> to vector<32x16xf32>
    %10 = arith.mulf %7, %9 : vector<32x16xf32>
    %c0_8 = arith.constant 0 : index
    %c0_9 = arith.constant 0 : index
    %11 = vector.load %arg4[%c0_8, %c0_9] : memref<1x16xf32, #tpu.memory_space<vmem>>, vector<1x16xf32>
    %12 = vector.broadcast %11 : vector<1x16xf32> to vector<32x16xf32>
    %13 = arith.addf %10, %12 : vector<32x16xf32>
    %cst_10 = arith.constant 0.000000e+00 : f32
    %14 = vector.broadcast %cst_10 : f32 to vector<32x128xf32>
    %c0_11 = arith.constant 0 : index
    %c0_12 = arith.constant 0 : index
    %c0_13 = arith.constant 0 : index
    %15 = vector.load %arg5[%c0_11, %c0_12, %c0_13] : memref<9x32x32xf32, #tpu.memory_space<vmem>>, vector<1x32x32xf32>
    %16 = vector.shape_cast %15 : vector<1x32x32xf32> to vector<32x32xf32>
    %cst_14 = arith.constant dense<0.000000e+00> : vector<32x16xf32>
    %17 = tpu.matmul %16, %13, %cst_14 {dimension_numbers = #tpu.dot_dimension_numbers<[1], [0], [0], [1], [0, 0, 1, 1], [], []>} : vector<32x32xf32>, vector<32x16xf32>, vector<32x16xf32> -> vector<32x16xf32>
    %c0_15 = arith.constant 0 : index
    %c0_16 = arith.constant 0 : index
    %c0_17 = arith.constant 0 : index
    %18 = vector.load %arg6[%c0_15, %c0_16, %c0_17] : memref<9x16x128xf32, #tpu.memory_space<vmem>>, vector<1x16x128xf32>
    %19 = vector.shape_cast %18 : vector<1x16x128xf32> to vector<16x128xf32>
    %cst_18 = arith.constant dense<0.000000e+00> : vector<32x128xf32>
    %20 = tpu.matmul %17, %19, %cst_18 {dimension_numbers = #tpu.dot_dimension_numbers<[1], [0], [0], [1], [0, 0, 1, 1], [], []>} : vector<32x16xf32>, vector<16x128xf32>, vector<32x128xf32> -> vector<32x128xf32>
    %21 = arith.addf %14, %20 : vector<32x128xf32>
    %c1 = arith.constant 1 : index
    %c0_19 = arith.constant 0 : index
    %c0_20 = arith.constant 0 : index
    %22 = vector.load %arg5[%c1, %c0_19, %c0_20] : memref<9x32x32xf32, #tpu.memory_space<vmem>>, vector<1x32x32xf32>
    %23 = vector.shape_cast %22 : vector<1x32x32xf32> to vector<32x32xf32>
    %cst_21 = arith.constant dense<0.000000e+00> : vector<32x16xf32>
    %24 = tpu.matmul %23, %13, %cst_21 {dimension_numbers = #tpu.dot_dimension_numbers<[1], [0], [0], [1], [0, 0, 1, 1], [], []>} : vector<32x32xf32>, vector<32x16xf32>, vector<32x16xf32> -> vector<32x16xf32>
    %c1_22 = arith.constant 1 : index
    %c0_23 = arith.constant 0 : index
    %c0_24 = arith.constant 0 : index
    %25 = vector.load %arg6[%c1_22, %c0_23, %c0_24] : memref<9x16x128xf32, #tpu.memory_space<vmem>>, vector<1x16x128xf32>
    %26 = vector.shape_cast %25 : vector<1x16x128xf32> to vector<16x128xf32>
    %cst_25 = arith.constant dense<0.000000e+00> : vector<32x128xf32>
    %27 = tpu.matmul %24, %26, %cst_25 {dimension_numbers = #tpu.dot_dimension_numbers<[1], [0], [0], [1], [0, 0, 1, 1], [], []>} : vector<32x16xf32>, vector<16x128xf32>, vector<32x128xf32> -> vector<32x128xf32>
    %28 = arith.addf %21, %27 : vector<32x128xf32>
    %c2 = arith.constant 2 : index
    %c0_26 = arith.constant 0 : index
    %c0_27 = arith.constant 0 : index
    %29 = vector.load %arg5[%c2, %c0_26, %c0_27] : memref<9x32x32xf32, #tpu.memory_space<vmem>>, vector<1x32x32xf32>
    %30 = vector.shape_cast %29 : vector<1x32x32xf32> to vector<32x32xf32>
    %cst_28 = arith.constant dense<0.000000e+00> : vector<32x16xf32>
    %31 = tpu.matmul %30, %13, %cst_28 {dimension_numbers = #tpu.dot_dimension_numbers<[1], [0], [0], [1], [0, 0, 1, 1], [], []>} : vector<32x32xf32>, vector<32x16xf32>, vector<32x16xf32> -> vector<32x16xf32>
    %c2_29 = arith.constant 2 : index
    %c0_30 = arith.constant 0 : index
    %c0_31 = arith.constant 0 : index
    %32 = vector.load %arg6[%c2_29, %c0_30, %c0_31] : memref<9x16x128xf32, #tpu.memory_space<vmem>>, vector<1x16x128xf32>
    %33 = vector.shape_cast %32 : vector<1x16x128xf32> to vector<16x128xf32>
    %cst_32 = arith.constant dense<0.000000e+00> : vector<32x128xf32>
    %34 = tpu.matmul %31, %33, %cst_32 {dimension_numbers = #tpu.dot_dimension_numbers<[1], [0], [0], [1], [0, 0, 1, 1], [], []>} : vector<32x16xf32>, vector<16x128xf32>, vector<32x128xf32> -> vector<32x128xf32>
    %35 = arith.addf %28, %34 : vector<32x128xf32>
    %c3 = arith.constant 3 : index
    %c0_33 = arith.constant 0 : index
    %c0_34 = arith.constant 0 : index
    %36 = vector.load %arg5[%c3, %c0_33, %c0_34] : memref<9x32x32xf32, #tpu.memory_space<vmem>>, vector<1x32x32xf32>
    %37 = vector.shape_cast %36 : vector<1x32x32xf32> to vector<32x32xf32>
    %cst_35 = arith.constant dense<0.000000e+00> : vector<32x16xf32>
    %38 = tpu.matmul %37, %13, %cst_35 {dimension_numbers = #tpu.dot_dimension_numbers<[1], [0], [0], [1], [0, 0, 1, 1], [], []>} : vector<32x32xf32>, vector<32x16xf32>, vector<32x16xf32> -> vector<32x16xf32>
    %c3_36 = arith.constant 3 : index
    %c0_37 = arith.constant 0 : index
    %c0_38 = arith.constant 0 : index
    %39 = vector.load %arg6[%c3_36, %c0_37, %c0_38] : memref<9x16x128xf32, #tpu.memory_space<vmem>>, vector<1x16x128xf32>
    %40 = vector.shape_cast %39 : vector<1x16x128xf32> to vector<16x128xf32>
    %cst_39 = arith.constant dense<0.000000e+00> : vector<32x128xf32>
    %41 = tpu.matmul %38, %40, %cst_39 {dimension_numbers = #tpu.dot_dimension_numbers<[1], [0], [0], [1], [0, 0, 1, 1], [], []>} : vector<32x16xf32>, vector<16x128xf32>, vector<32x128xf32> -> vector<32x128xf32>
    %42 = arith.addf %35, %41 : vector<32x128xf32>
    %c4 = arith.constant 4 : index
    %c0_40 = arith.constant 0 : index
    %c0_41 = arith.constant 0 : index
    %43 = vector.load %arg5[%c4, %c0_40, %c0_41] : memref<9x32x32xf32, #tpu.memory_space<vmem>>, vector<1x32x32xf32>
    %44 = vector.shape_cast %43 : vector<1x32x32xf32> to vector<32x32xf32>
    %cst_42 = arith.constant dense<0.000000e+00> : vector<32x16xf32>
    %45 = tpu.matmul %44, %13, %cst_42 {dimension_numbers = #tpu.dot_dimension_numbers<[1], [0], [0], [1], [0, 0, 1, 1], [], []>} : vector<32x32xf32>, vector<32x16xf32>, vector<32x16xf32> -> vector<32x16xf32>
    %c4_43 = arith.constant 4 : index
    %c0_44 = arith.constant 0 : index
    %c0_45 = arith.constant 0 : index
    %46 = vector.load %arg6[%c4_43, %c0_44, %c0_45] : memref<9x16x128xf32, #tpu.memory_space<vmem>>, vector<1x16x128xf32>
    %47 = vector.shape_cast %46 : vector<1x16x128xf32> to vector<16x128xf32>
    %cst_46 = arith.constant dense<0.000000e+00> : vector<32x128xf32>
    %48 = tpu.matmul %45, %47, %cst_46 {dimension_numbers = #tpu.dot_dimension_numbers<[1], [0], [0], [1], [0, 0, 1, 1], [], []>} : vector<32x16xf32>, vector<16x128xf32>, vector<32x128xf32> -> vector<32x128xf32>
    %49 = arith.addf %42, %48 : vector<32x128xf32>
    %c5 = arith.constant 5 : index
    %c0_47 = arith.constant 0 : index
    %c0_48 = arith.constant 0 : index
    %50 = vector.load %arg5[%c5, %c0_47, %c0_48] : memref<9x32x32xf32, #tpu.memory_space<vmem>>, vector<1x32x32xf32>
    %51 = vector.shape_cast %50 : vector<1x32x32xf32> to vector<32x32xf32>
    %cst_49 = arith.constant dense<0.000000e+00> : vector<32x16xf32>
    %52 = tpu.matmul %51, %13, %cst_49 {dimension_numbers = #tpu.dot_dimension_numbers<[1], [0], [0], [1], [0, 0, 1, 1], [], []>} : vector<32x32xf32>, vector<32x16xf32>, vector<32x16xf32> -> vector<32x16xf32>
    %c5_50 = arith.constant 5 : index
    %c0_51 = arith.constant 0 : index
    %c0_52 = arith.constant 0 : index
    %53 = vector.load %arg6[%c5_50, %c0_51, %c0_52] : memref<9x16x128xf32, #tpu.memory_space<vmem>>, vector<1x16x128xf32>
    %54 = vector.shape_cast %53 : vector<1x16x128xf32> to vector<16x128xf32>
    %cst_53 = arith.constant dense<0.000000e+00> : vector<32x128xf32>
    %55 = tpu.matmul %52, %54, %cst_53 {dimension_numbers = #tpu.dot_dimension_numbers<[1], [0], [0], [1], [0, 0, 1, 1], [], []>} : vector<32x16xf32>, vector<16x128xf32>, vector<32x128xf32> -> vector<32x128xf32>
    %56 = arith.addf %49, %55 : vector<32x128xf32>
    %c6 = arith.constant 6 : index
    %c0_54 = arith.constant 0 : index
    %c0_55 = arith.constant 0 : index
    %57 = vector.load %arg5[%c6, %c0_54, %c0_55] : memref<9x32x32xf32, #tpu.memory_space<vmem>>, vector<1x32x32xf32>
    %58 = vector.shape_cast %57 : vector<1x32x32xf32> to vector<32x32xf32>
    %cst_56 = arith.constant dense<0.000000e+00> : vector<32x16xf32>
    %59 = tpu.matmul %58, %13, %cst_56 {dimension_numbers = #tpu.dot_dimension_numbers<[1], [0], [0], [1], [0, 0, 1, 1], [], []>} : vector<32x32xf32>, vector<32x16xf32>, vector<32x16xf32> -> vector<32x16xf32>
    %c6_57 = arith.constant 6 : index
    %c0_58 = arith.constant 0 : index
    %c0_59 = arith.constant 0 : index
    %60 = vector.load %arg6[%c6_57, %c0_58, %c0_59] : memref<9x16x128xf32, #tpu.memory_space<vmem>>, vector<1x16x128xf32>
    %61 = vector.shape_cast %60 : vector<1x16x128xf32> to vector<16x128xf32>
    %cst_60 = arith.constant dense<0.000000e+00> : vector<32x128xf32>
    %62 = tpu.matmul %59, %61, %cst_60 {dimension_numbers = #tpu.dot_dimension_numbers<[1], [0], [0], [1], [0, 0, 1, 1], [], []>} : vector<32x16xf32>, vector<16x128xf32>, vector<32x128xf32> -> vector<32x128xf32>
    %63 = arith.addf %56, %62 : vector<32x128xf32>
    %c7 = arith.constant 7 : index
    %c0_61 = arith.constant 0 : index
    %c0_62 = arith.constant 0 : index
    %64 = vector.load %arg5[%c7, %c0_61, %c0_62] : memref<9x32x32xf32, #tpu.memory_space<vmem>>, vector<1x32x32xf32>
    %65 = vector.shape_cast %64 : vector<1x32x32xf32> to vector<32x32xf32>
    %cst_63 = arith.constant dense<0.000000e+00> : vector<32x16xf32>
    %66 = tpu.matmul %65, %13, %cst_63 {dimension_numbers = #tpu.dot_dimension_numbers<[1], [0], [0], [1], [0, 0, 1, 1], [], []>} : vector<32x32xf32>, vector<32x16xf32>, vector<32x16xf32> -> vector<32x16xf32>
    %c7_64 = arith.constant 7 : index
    %c0_65 = arith.constant 0 : index
    %c0_66 = arith.constant 0 : index
    %67 = vector.load %arg6[%c7_64, %c0_65, %c0_66] : memref<9x16x128xf32, #tpu.memory_space<vmem>>, vector<1x16x128xf32>
    %68 = vector.shape_cast %67 : vector<1x16x128xf32> to vector<16x128xf32>
    %cst_67 = arith.constant dense<0.000000e+00> : vector<32x128xf32>
    %69 = tpu.matmul %66, %68, %cst_67 {dimension_numbers = #tpu.dot_dimension_numbers<[1], [0], [0], [1], [0, 0, 1, 1], [], []>} : vector<32x16xf32>, vector<16x128xf32>, vector<32x128xf32> -> vector<32x128xf32>
    %70 = arith.addf %63, %69 : vector<32x128xf32>
    %c8 = arith.constant 8 : index
    %c0_68 = arith.constant 0 : index
    %c0_69 = arith.constant 0 : index
    %71 = vector.load %arg5[%c8, %c0_68, %c0_69] : memref<9x32x32xf32, #tpu.memory_space<vmem>>, vector<1x32x32xf32>
    %72 = vector.shape_cast %71 : vector<1x32x32xf32> to vector<32x32xf32>
    %cst_70 = arith.constant dense<0.000000e+00> : vector<32x16xf32>
    %73 = tpu.matmul %72, %13, %cst_70 {dimension_numbers = #tpu.dot_dimension_numbers<[1], [0], [0], [1], [0, 0, 1, 1], [], []>} : vector<32x32xf32>, vector<32x16xf32>, vector<32x16xf32> -> vector<32x16xf32>
    %c8_71 = arith.constant 8 : index
    %c0_72 = arith.constant 0 : index
    %c0_73 = arith.constant 0 : index
    %74 = vector.load %arg6[%c8_71, %c0_72, %c0_73] : memref<9x16x128xf32, #tpu.memory_space<vmem>>, vector<1x16x128xf32>
    %75 = vector.shape_cast %74 : vector<1x16x128xf32> to vector<16x128xf32>
    %cst_74 = arith.constant dense<0.000000e+00> : vector<32x128xf32>
    %76 = tpu.matmul %73, %75, %cst_74 {dimension_numbers = #tpu.dot_dimension_numbers<[1], [0], [0], [1], [0, 0, 1, 1], [], []>} : vector<32x16xf32>, vector<16x128xf32>, vector<32x128xf32> -> vector<32x128xf32>
    %77 = arith.addf %70, %76 : vector<32x128xf32>
    %c0_75 = arith.constant 0 : index
    %c0_76 = arith.constant 0 : index
    %78 = vector.load %arg7[%c0_75, %c0_76] : memref<1x128xf32, #tpu.memory_space<vmem>>, vector<1x128xf32>
    %79 = vector.broadcast %78 : vector<1x128xf32> to vector<32x128xf32>
    %80 = arith.addf %77, %79 : vector<32x128xf32>
    %cst_77 = arith.constant 0.000000e+00 : f32
    %81 = vector.broadcast %cst_77 : f32 to vector<32x128xf32>
    %82 = arith.maximumf %80, %81 : vector<32x128xf32>
    %c0_78 = arith.constant 0 : index
    %c0_79 = arith.constant 0 : index
    %83 = vector.load %arg8[%c0_78, %c0_79] : memref<32x8xf32, #tpu.memory_space<vmem>>, vector<32x8xf32>
    %c0_80 = arith.constant 0 : index
    %c0_81 = arith.constant 0 : index
    %84 = vector.load %arg9[%c0_80, %c0_81] : memref<8x128xf32, #tpu.memory_space<vmem>>, vector<8x128xf32>
    %cst_82 = arith.constant dense<0.000000e+00> : vector<32x128xf32>
    %85 = tpu.matmul %83, %84, %cst_82 {dimension_numbers = #tpu.dot_dimension_numbers<[1], [0], [0], [1], [0, 0, 1, 1], [], []>} : vector<32x8xf32>, vector<8x128xf32>, vector<32x128xf32> -> vector<32x128xf32>
    %86 = arith.addf %82, %85 : vector<32x128xf32>
    %c0_83 = arith.constant 0 : index
    %c0_84 = arith.constant 0 : index
    %87 = vector.load %arg10[%c0_83, %c0_84] : memref<1x128xf32, #tpu.memory_space<vmem>>, vector<1x128xf32>
    %88 = vector.broadcast %87 : vector<1x128xf32> to vector<32x128xf32>
    %89 = arith.addf %86, %88 : vector<32x128xf32>
    %c0_85 = arith.constant 0 : index
    %c0_86 = arith.constant 0 : index
    %90 = vector.load %arg11[%c0_85, %c0_86] : memref<32x128xf32, #tpu.memory_space<vmem>>, vector<32x128xf32>
    tpu.vector_store %arg11[%c0_85, %c0_86], %89 {strides = array<i32>} : memref<32x128xf32, #tpu.memory_space<vmem>>, vector<32x128xf32>,
    return
  }
}

module attributes {stable_mosaic.version = 11 : i64} {
  func.func @_res_block_kernel(%arg0: memref<8x256xf32, #tpu.memory_space<vmem>>, %arg1: memref<256x32xf32, #tpu.memory_space<vmem>>, %arg2: memref<1x32xf32, #tpu.memory_space<vmem>>, %arg3: memref<1x32xf32, #tpu.memory_space<vmem>>, %arg4: memref<1x32xf32, #tpu.memory_space<vmem>>, %arg5: memref<9x8x8xf32, #tpu.memory_space<vmem>>, %arg6: memref<9x32x128xf32, #tpu.memory_space<vmem>>, %arg7: memref<1x128xf32, #tpu.memory_space<vmem>>, %arg8: memref<8x16xf32, #tpu.memory_space<vmem>>, %arg9: memref<16x128xf32, #tpu.memory_space<vmem>>, %arg10: memref<1x128xf32, #tpu.memory_space<vmem>>, %arg11: memref<8x128xf32, #tpu.memory_space<vmem>>) attributes {dimension_semantics = [], scalar_prefetch = 0 : i64, scratch_operands = 0 : i64, tpu.core_type = #tpu.core_type<tc>} {
    %c0 = arith.constant 0 : index
    %c0_0 = arith.constant 0 : index
    %0 = vector.load %arg0[%c0, %c0_0] : memref<8x256xf32, #tpu.memory_space<vmem>>, vector<8x256xf32>
    %c0_1 = arith.constant 0 : index
    %c0_2 = arith.constant 0 : index
    %1 = vector.load %arg1[%c0_1, %c0_2] : memref<256x32xf32, #tpu.memory_space<vmem>>, vector<256x32xf32>
    %cst = arith.constant dense<0.000000e+00> : vector<8x32xf32>
    %2 = tpu.matmul %0, %1, %cst {dimension_numbers = #tpu.dot_dimension_numbers<[1], [0], [0], [1], [0, 0, 1, 1], [], []>} : vector<8x256xf32>, vector<256x32xf32>, vector<8x32xf32> -> vector<8x32xf32>
    %c0_3 = arith.constant 0 : index
    %c0_4 = arith.constant 0 : index
    %3 = vector.load %arg2[%c0_3, %c0_4] : memref<1x32xf32, #tpu.memory_space<vmem>>, vector<1x32xf32>
    %4 = vector.broadcast %3 : vector<1x32xf32> to vector<8x32xf32>
    %5 = arith.addf %2, %4 : vector<8x32xf32>
    %cst_5 = arith.constant 0.000000e+00 : f32
    %6 = vector.broadcast %cst_5 : f32 to vector<8x32xf32>
    %7 = arith.maximumf %5, %6 : vector<8x32xf32>
    %c0_6 = arith.constant 0 : index
    %c0_7 = arith.constant 0 : index
    %8 = vector.load %arg3[%c0_6, %c0_7] : memref<1x32xf32, #tpu.memory_space<vmem>>, vector<1x32xf32>
    %9 = vector.broadcast %8 : vector<1x32xf32> to vector<8x32xf32>
    %10 = arith.mulf %7, %9 : vector<8x32xf32>
    %c0_8 = arith.constant 0 : index
    %c0_9 = arith.constant 0 : index
    %11 = vector.load %arg4[%c0_8, %c0_9] : memref<1x32xf32, #tpu.memory_space<vmem>>, vector<1x32xf32>
    %12 = vector.broadcast %11 : vector<1x32xf32> to vector<8x32xf32>
    %13 = arith.addf %10, %12 : vector<8x32xf32>
    %cst_10 = arith.constant 0.000000e+00 : f32
    %14 = vector.broadcast %cst_10 : f32 to vector<8x128xf32>
    %c0_11 = arith.constant 0 : index
    %c0_12 = arith.constant 0 : index
    %c0_13 = arith.constant 0 : index
    %15 = vector.load %arg5[%c0_11, %c0_12, %c0_13] : memref<9x8x8xf32, #tpu.memory_space<vmem>>, vector<1x8x8xf32>
    %16 = vector.shape_cast %15 : vector<1x8x8xf32> to vector<8x8xf32>
    %cst_14 = arith.constant dense<0.000000e+00> : vector<8x32xf32>
    %17 = tpu.matmul %16, %13, %cst_14 {dimension_numbers = #tpu.dot_dimension_numbers<[1], [0], [0], [1], [0, 0, 1, 1], [], []>} : vector<8x8xf32>, vector<8x32xf32>, vector<8x32xf32> -> vector<8x32xf32>
    %c0_15 = arith.constant 0 : index
    %c0_16 = arith.constant 0 : index
    %c0_17 = arith.constant 0 : index
    %18 = vector.load %arg6[%c0_15, %c0_16, %c0_17] : memref<9x32x128xf32, #tpu.memory_space<vmem>>, vector<1x32x128xf32>
    %19 = vector.shape_cast %18 : vector<1x32x128xf32> to vector<32x128xf32>
    %cst_18 = arith.constant dense<0.000000e+00> : vector<8x128xf32>
    %20 = tpu.matmul %17, %19, %cst_18 {dimension_numbers = #tpu.dot_dimension_numbers<[1], [0], [0], [1], [0, 0, 1, 1], [], []>} : vector<8x32xf32>, vector<32x128xf32>, vector<8x128xf32> -> vector<8x128xf32>
    %21 = arith.addf %14, %20 : vector<8x128xf32>
    %c1 = arith.constant 1 : index
    %c0_19 = arith.constant 0 : index
    %c0_20 = arith.constant 0 : index
    %22 = vector.load %arg5[%c1, %c0_19, %c0_20] : memref<9x8x8xf32, #tpu.memory_space<vmem>>, vector<1x8x8xf32>
    %23 = vector.shape_cast %22 : vector<1x8x8xf32> to vector<8x8xf32>
    %cst_21 = arith.constant dense<0.000000e+00> : vector<8x32xf32>
    %24 = tpu.matmul %23, %13, %cst_21 {dimension_numbers = #tpu.dot_dimension_numbers<[1], [0], [0], [1], [0, 0, 1, 1], [], []>} : vector<8x8xf32>, vector<8x32xf32>, vector<8x32xf32> -> vector<8x32xf32>
    %c1_22 = arith.constant 1 : index
    %c0_23 = arith.constant 0 : index
    %c0_24 = arith.constant 0 : index
    %25 = vector.load %arg6[%c1_22, %c0_23, %c0_24] : memref<9x32x128xf32, #tpu.memory_space<vmem>>, vector<1x32x128xf32>
    %26 = vector.shape_cast %25 : vector<1x32x128xf32> to vector<32x128xf32>
    %cst_25 = arith.constant dense<0.000000e+00> : vector<8x128xf32>
    %27 = tpu.matmul %24, %26, %cst_25 {dimension_numbers = #tpu.dot_dimension_numbers<[1], [0], [0], [1], [0, 0, 1, 1], [], []>} : vector<8x32xf32>, vector<32x128xf32>, vector<8x128xf32> -> vector<8x128xf32>
    %28 = arith.addf %21, %27 : vector<8x128xf32>
    %c2 = arith.constant 2 : index
    %c0_26 = arith.constant 0 : index
    %c0_27 = arith.constant 0 : index
    %29 = vector.load %arg5[%c2, %c0_26, %c0_27] : memref<9x8x8xf32, #tpu.memory_space<vmem>>, vector<1x8x8xf32>
    %30 = vector.shape_cast %29 : vector<1x8x8xf32> to vector<8x8xf32>
    %cst_28 = arith.constant dense<0.000000e+00> : vector<8x32xf32>
    %31 = tpu.matmul %30, %13, %cst_28 {dimension_numbers = #tpu.dot_dimension_numbers<[1], [0], [0], [1], [0, 0, 1, 1], [], []>} : vector<8x8xf32>, vector<8x32xf32>, vector<8x32xf32> -> vector<8x32xf32>
    %c2_29 = arith.constant 2 : index
    %c0_30 = arith.constant 0 : index
    %c0_31 = arith.constant 0 : index
    %32 = vector.load %arg6[%c2_29, %c0_30, %c0_31] : memref<9x32x128xf32, #tpu.memory_space<vmem>>, vector<1x32x128xf32>
    %33 = vector.shape_cast %32 : vector<1x32x128xf32> to vector<32x128xf32>
    %cst_32 = arith.constant dense<0.000000e+00> : vector<8x128xf32>
    %34 = tpu.matmul %31, %33, %cst_32 {dimension_numbers = #tpu.dot_dimension_numbers<[1], [0], [0], [1], [0, 0, 1, 1], [], []>} : vector<8x32xf32>, vector<32x128xf32>, vector<8x128xf32> -> vector<8x128xf32>
    %35 = arith.addf %28, %34 : vector<8x128xf32>
    %c3 = arith.constant 3 : index
    %c0_33 = arith.constant 0 : index
    %c0_34 = arith.constant 0 : index
    %36 = vector.load %arg5[%c3, %c0_33, %c0_34] : memref<9x8x8xf32, #tpu.memory_space<vmem>>, vector<1x8x8xf32>
    %37 = vector.shape_cast %36 : vector<1x8x8xf32> to vector<8x8xf32>
    %cst_35 = arith.constant dense<0.000000e+00> : vector<8x32xf32>
    %38 = tpu.matmul %37, %13, %cst_35 {dimension_numbers = #tpu.dot_dimension_numbers<[1], [0], [0], [1], [0, 0, 1, 1], [], []>} : vector<8x8xf32>, vector<8x32xf32>, vector<8x32xf32> -> vector<8x32xf32>
    %c3_36 = arith.constant 3 : index
    %c0_37 = arith.constant 0 : index
    %c0_38 = arith.constant 0 : index
    %39 = vector.load %arg6[%c3_36, %c0_37, %c0_38] : memref<9x32x128xf32, #tpu.memory_space<vmem>>, vector<1x32x128xf32>
    %40 = vector.shape_cast %39 : vector<1x32x128xf32> to vector<32x128xf32>
    %cst_39 = arith.constant dense<0.000000e+00> : vector<8x128xf32>
    %41 = tpu.matmul %38, %40, %cst_39 {dimension_numbers = #tpu.dot_dimension_numbers<[1], [0], [0], [1], [0, 0, 1, 1], [], []>} : vector<8x32xf32>, vector<32x128xf32>, vector<8x128xf32> -> vector<8x128xf32>
    %42 = arith.addf %35, %41 : vector<8x128xf32>
    %c4 = arith.constant 4 : index
    %c0_40 = arith.constant 0 : index
    %c0_41 = arith.constant 0 : index
    %43 = vector.load %arg5[%c4, %c0_40, %c0_41] : memref<9x8x8xf32, #tpu.memory_space<vmem>>, vector<1x8x8xf32>
    %44 = vector.shape_cast %43 : vector<1x8x8xf32> to vector<8x8xf32>
    %cst_42 = arith.constant dense<0.000000e+00> : vector<8x32xf32>
    %45 = tpu.matmul %44, %13, %cst_42 {dimension_numbers = #tpu.dot_dimension_numbers<[1], [0], [0], [1], [0, 0, 1, 1], [], []>} : vector<8x8xf32>, vector<8x32xf32>, vector<8x32xf32> -> vector<8x32xf32>
    %c4_43 = arith.constant 4 : index
    %c0_44 = arith.constant 0 : index
    %c0_45 = arith.constant 0 : index
    %46 = vector.load %arg6[%c4_43, %c0_44, %c0_45] : memref<9x32x128xf32, #tpu.memory_space<vmem>>, vector<1x32x128xf32>
    %47 = vector.shape_cast %46 : vector<1x32x128xf32> to vector<32x128xf32>
    %cst_46 = arith.constant dense<0.000000e+00> : vector<8x128xf32>
    %48 = tpu.matmul %45, %47, %cst_46 {dimension_numbers = #tpu.dot_dimension_numbers<[1], [0], [0], [1], [0, 0, 1, 1], [], []>} : vector<8x32xf32>, vector<32x128xf32>, vector<8x128xf32> -> vector<8x128xf32>
    %49 = arith.addf %42, %48 : vector<8x128xf32>
    %c5 = arith.constant 5 : index
    %c0_47 = arith.constant 0 : index
    %c0_48 = arith.constant 0 : index
    %50 = vector.load %arg5[%c5, %c0_47, %c0_48] : memref<9x8x8xf32, #tpu.memory_space<vmem>>, vector<1x8x8xf32>
    %51 = vector.shape_cast %50 : vector<1x8x8xf32> to vector<8x8xf32>
    %cst_49 = arith.constant dense<0.000000e+00> : vector<8x32xf32>
    %52 = tpu.matmul %51, %13, %cst_49 {dimension_numbers = #tpu.dot_dimension_numbers<[1], [0], [0], [1], [0, 0, 1, 1], [], []>} : vector<8x8xf32>, vector<8x32xf32>, vector<8x32xf32> -> vector<8x32xf32>
    %c5_50 = arith.constant 5 : index
    %c0_51 = arith.constant 0 : index
    %c0_52 = arith.constant 0 : index
    %53 = vector.load %arg6[%c5_50, %c0_51, %c0_52] : memref<9x32x128xf32, #tpu.memory_space<vmem>>, vector<1x32x128xf32>
    %54 = vector.shape_cast %53 : vector<1x32x128xf32> to vector<32x128xf32>
    %cst_53 = arith.constant dense<0.000000e+00> : vector<8x128xf32>
    %55 = tpu.matmul %52, %54, %cst_53 {dimension_numbers = #tpu.dot_dimension_numbers<[1], [0], [0], [1], [0, 0, 1, 1], [], []>} : vector<8x32xf32>, vector<32x128xf32>, vector<8x128xf32> -> vector<8x128xf32>
    %56 = arith.addf %49, %55 : vector<8x128xf32>
    %c6 = arith.constant 6 : index
    %c0_54 = arith.constant 0 : index
    %c0_55 = arith.constant 0 : index
    %57 = vector.load %arg5[%c6, %c0_54, %c0_55] : memref<9x8x8xf32, #tpu.memory_space<vmem>>, vector<1x8x8xf32>
    %58 = vector.shape_cast %57 : vector<1x8x8xf32> to vector<8x8xf32>
    %cst_56 = arith.constant dense<0.000000e+00> : vector<8x32xf32>
    %59 = tpu.matmul %58, %13, %cst_56 {dimension_numbers = #tpu.dot_dimension_numbers<[1], [0], [0], [1], [0, 0, 1, 1], [], []>} : vector<8x8xf32>, vector<8x32xf32>, vector<8x32xf32> -> vector<8x32xf32>
    %c6_57 = arith.constant 6 : index
    %c0_58 = arith.constant 0 : index
    %c0_59 = arith.constant 0 : index
    %60 = vector.load %arg6[%c6_57, %c0_58, %c0_59] : memref<9x32x128xf32, #tpu.memory_space<vmem>>, vector<1x32x128xf32>
    %61 = vector.shape_cast %60 : vector<1x32x128xf32> to vector<32x128xf32>
    %cst_60 = arith.constant dense<0.000000e+00> : vector<8x128xf32>
    %62 = tpu.matmul %59, %61, %cst_60 {dimension_numbers = #tpu.dot_dimension_numbers<[1], [0], [0], [1], [0, 0, 1, 1], [], []>} : vector<8x32xf32>, vector<32x128xf32>, vector<8x128xf32> -> vector<8x128xf32>
    %63 = arith.addf %56, %62 : vector<8x128xf32>
    %c7 = arith.constant 7 : index
    %c0_61 = arith.constant 0 : index
    %c0_62 = arith.constant 0 : index
    %64 = vector.load %arg5[%c7, %c0_61, %c0_62] : memref<9x8x8xf32, #tpu.memory_space<vmem>>, vector<1x8x8xf32>
    %65 = vector.shape_cast %64 : vector<1x8x8xf32> to vector<8x8xf32>
    %cst_63 = arith.constant dense<0.000000e+00> : vector<8x32xf32>
    %66 = tpu.matmul %65, %13, %cst_63 {dimension_numbers = #tpu.dot_dimension_numbers<[1], [0], [0], [1], [0, 0, 1, 1], [], []>} : vector<8x8xf32>, vector<8x32xf32>, vector<8x32xf32> -> vector<8x32xf32>
    %c7_64 = arith.constant 7 : index
    %c0_65 = arith.constant 0 : index
    %c0_66 = arith.constant 0 : index
    %67 = vector.load %arg6[%c7_64, %c0_65, %c0_66] : memref<9x32x128xf32, #tpu.memory_space<vmem>>, vector<1x32x128xf32>
    %68 = vector.shape_cast %67 : vector<1x32x128xf32> to vector<32x128xf32>
    %cst_67 = arith.constant dense<0.000000e+00> : vector<8x128xf32>
    %69 = tpu.matmul %66, %68, %cst_67 {dimension_numbers = #tpu.dot_dimension_numbers<[1], [0], [0], [1], [0, 0, 1, 1], [], []>} : vector<8x32xf32>, vector<32x128xf32>, vector<8x128xf32> -> vector<8x128xf32>
    %70 = arith.addf %63, %69 : vector<8x128xf32>
    %c8 = arith.constant 8 : index
    %c0_68 = arith.constant 0 : index
    %c0_69 = arith.constant 0 : index
    %71 = vector.load %arg5[%c8, %c0_68, %c0_69] : memref<9x8x8xf32, #tpu.memory_space<vmem>>, vector<1x8x8xf32>
    %72 = vector.shape_cast %71 : vector<1x8x8xf32> to vector<8x8xf32>
    %cst_70 = arith.constant dense<0.000000e+00> : vector<8x32xf32>
    %73 = tpu.matmul %72, %13, %cst_70 {dimension_numbers = #tpu.dot_dimension_numbers<[1], [0], [0], [1], [0, 0, 1, 1], [], []>} : vector<8x8xf32>, vector<8x32xf32>, vector<8x32xf32> -> vector<8x32xf32>
    %c8_71 = arith.constant 8 : index
    %c0_72 = arith.constant 0 : index
    %c0_73 = arith.constant 0 : index
    %74 = vector.load %arg6[%c8_71, %c0_72, %c0_73] : memref<9x32x128xf32, #tpu.memory_space<vmem>>, vector<1x32x128xf32>
    %75 = vector.shape_cast %74 : vector<1x32x128xf32> to vector<32x128xf32>
    %cst_74 = arith.constant dense<0.000000e+00> : vector<8x128xf32>
    %76 = tpu.matmul %73, %75, %cst_74 {dimension_numbers = #tpu.dot_dimension_numbers<[1], [0], [0], [1], [0, 0, 1, 1], [], []>} : vector<8x32xf32>, vector<32x128xf32>, vector<8x128xf32> -> vector<8x128xf32>
    %77 = arith.addf %70, %76 : vector<8x128xf32>
    %c0_75 = arith.constant 0 : index
    %c0_76 = arith.constant 0 : index
    %78 = vector.load %arg7[%c0_75, %c0_76] : memref<1x128xf32, #tpu.memory_space<vmem>>, vector<1x128xf32>
    %79 = vector.broadcast %78 : vector<1x128xf32> to vector<8x128xf32>
    %80 = arith.addf %77, %79 : vector<8x128xf32>
    %cst_77 = arith.constant 0.000000e+00 : f32
    %81 = vector.broadcast %cst_77 : f32 to vector<8x128xf32>
    %82 = arith.maximumf %80, %81 : vector<8x128xf32>
    %c0_78 = arith.constant 0 : index
    %c0_79 = arith.constant 0 : index
    %83 = vector.load %arg8[%c0_78, %c0_79] : memref<8x16xf32, #tpu.memory_space<vmem>>, vector<8x16xf32>
    %c0_80 = arith.constant 0 : index
    %c0_81 = arith.constant 0 : index
    %84 = vector.load %arg9[%c0_80, %c0_81] : memref<16x128xf32, #tpu.memory_space<vmem>>, vector<16x128xf32>
    %cst_82 = arith.constant dense<0.000000e+00> : vector<8x128xf32>
    %85 = tpu.matmul %83, %84, %cst_82 {dimension_numbers = #tpu.dot_dimension_numbers<[1], [0], [0], [1], [0, 0, 1, 1], [], []>} : vector<8x16xf32>, vector<16x128xf32>, vector<8x128xf32> -> vector<8x128xf32>
    %86 = arith.addf %82, %85 : vector<8x128xf32>
    %c0_83 = arith.constant 0 : index
    %c0_84 = arith.constant 0 : index
    %87 = vector.load %arg10[%c0_83, %c0_84] : memref<1x128xf32, #tpu.memory_space<vmem>>, vector<1x128xf32>
    %88 = vector.broadcast %87 : vector<1x128xf32> to vector<8x128xf32>
    %89 = arith.addf %86, %88 : vector<8x128xf32>
    %c0_85 = arith.constant 0 : index
    %c0_86 = arith.constant 0 : index
    %90 = vector.load %arg11[%c0_85, %c0_86] : memref<8x128xf32, #tpu.memory_space<vmem>>, vector<8x128xf32>
    tpu.vector_store %arg11[%c0_85, %c0_86], %89 {strides = array<i32>} : memref<8x128xf32, #tpu.memory_space<vmem>>, vector<8x128xf32>,
    return
  }
}

module attributes {stable_mosaic.version = 11 : i64} {
  func.func @_matmul_bias_act_kernel(%arg0: i32, %arg1: memref<2x512xf32, #tpu.memory_space<vmem>>, %arg2: memref<512x128xf32, #tpu.memory_space<vmem>>, %arg3: memref<1x128xf32, #tpu.memory_space<vmem>>, %arg4: memref<2x128xf32, #tpu.memory_space<vmem>>) attributes {dimension_semantics = [#tpu.dimension_semantics<arbitrary>], iteration_bounds = array<i64: 1>, scalar_prefetch = 0 : i64, scratch_operands = 0 : i64, tpu.core_type = #tpu.core_type<tc>, window_params = [{pipeline_mode = #tpu.pipeline_mode<synchronous>, transform_indices = @transform_0, window_bounds = array<i64: 2, 512>}, {pipeline_mode = #tpu.pipeline_mode<synchronous>, transform_indices = @transform_1, window_bounds = array<i64: 512, 128>}, {pipeline_mode = #tpu.pipeline_mode<synchronous>, transform_indices = @transform_2, window_bounds = array<i64: 1, 128>}, {pipeline_mode = #tpu.pipeline_mode<synchronous>, transform_indices = @transform_3, window_bounds = array<i64: 2, 128>}]} {
    %c0 = arith.constant 0 : index
    %c0_0 = arith.constant 0 : index
    %0 = vector.load %arg1[%c0, %c0_0] : memref<2x512xf32, #tpu.memory_space<vmem>>, vector<2x512xf32>
    %c0_1 = arith.constant 0 : index
    %c0_2 = arith.constant 0 : index
    %1 = vector.load %arg2[%c0_1, %c0_2] : memref<512x128xf32, #tpu.memory_space<vmem>>, vector<512x128xf32>
    %cst = arith.constant dense<0.000000e+00> : vector<2x128xf32>
    %2 = tpu.matmul %0, %1, %cst {dimension_numbers = #tpu.dot_dimension_numbers<[1], [0], [0], [1], [0, 0, 1, 1], [], []>} : vector<2x512xf32>, vector<512x128xf32>, vector<2x128xf32> -> vector<2x128xf32>
    %c0_3 = arith.constant 0 : index
    %c0_4 = arith.constant 0 : index
    %3 = vector.load %arg3[%c0_3, %c0_4] : memref<1x128xf32, #tpu.memory_space<vmem>>, vector<1x128xf32>
    %4 = vector.broadcast %3 : vector<1x128xf32> to vector<2x128xf32>
    %5 = arith.addf %2, %4 : vector<2x128xf32>
    %c0_5 = arith.constant 0 : index
    %c0_6 = arith.constant 0 : index
    %6 = vector.load %arg4[%c0_5, %c0_6] : memref<2x128xf32, #tpu.memory_space<vmem>>, vector<2x128xf32>
    tpu.vector_store %arg4[%c0_5, %c0_6], %5 {strides = array<i32>} : memref<2x128xf32, #tpu.memory_space<vmem>>, vector<2x128xf32>,
    return
  }
  func.func @transform_0(%arg0: i32) -> (i32, i32) {
    %c0_i32 = arith.constant 0 : i32
    %c0_i32_0 = arith.constant 0 : i32
    %c0_i32_1 = arith.constant 0 : i32
    return %c0_i32, %c0_i32_0 : i32, i32
  }
  func.func @transform_1(%arg0: i32) -> (i32, i32) {
    %c0_i32 = arith.constant 0 : i32
    %c0_i32_0 = arith.constant 0 : i32
    %c0_i32_1 = arith.constant 0 : i32
    return %c0_i32, %c0_i32_0 : i32, i32
  }
  func.func @transform_2(%arg0: i32) -> (i32, i32) {
    %c0_i32 = arith.constant 0 : i32
    %c0_i32_0 = arith.constant 0 : i32
    %c0_i32_1 = arith.constant 0 : i32
    return %c0_i32, %c0_i32_0 : i32, i32
  }
  func.func @transform_3(%arg0: i32) -> (i32, i32) {
    %c0_i32 = arith.constant 0 : i32
    %c0_i32_0 = arith.constant 0 : i32
    %c0_i32_1 = arith.constant 0 : i32
    return %c0_i32, %c0_i32_0 : i32, i32
  }
}

</mosaic_0001>

<llo_original>
// kernel: resnet_forward.5
$region0: #{resnet_forward.5}
  #allocation0 [shape = 'u32[]', space=smem, size = 0x4, offset = 0x4, fixed_abs, tag = 'smem constant byte address 0x4 - core index']
  #allocation1 [shape = 'u32[144,128]{1,0:T(1,128)}', space=vmem, size = 0x12000, scoped, tag = 'internal scratch']
  %s0 = inlined_call_operand.vmem [shape: f32[512,256], index: 0, kind: input, shape index: {}]
  %s1 = inlined_call_operand.vmem [shape: f32[256,128], index: 1, kind: input, shape index: {}]
  %s2 = inlined_call_operand.vmem [shape: f32[1,128], index: 2, kind: input, shape index: {}]
  %s3 = inlined_call_operand.vmem [shape: f32[512,128], index: 3, kind: output, shape index: {}]
  %s4 = sld [smem:[#allocation0]]
  $region22: #{resnet_forward.5} parent=0
    _
  %s6 = ssub.s32 1, %s4
  %s7 = scalar_select 0, %s6, %s4
  // Predicated region
  $region2: #{resnet_forward.5} parent=0 // pred_check
    _
  $region3: #{resnet_forward.5} parent=0 // pred_check_branch
    %9 = sbr.rel (0) target = $region5
  $region4: #{resnet_forward.5} parent=0 // pred_region
    _
  $region5: #{resnet_forward.5} parent=0 // pred_fallthru
    _
  // Predicated region
  $region6: #{resnet_forward.5} parent=0 // pred_check
    _
  $region7: #{resnet_forward.5} parent=0 // pred_check_branch
    %11 = sbr.rel (0) target = $region9
  $region8: #{resnet_forward.5} parent=0 // pred_region
    _
  $region9: #{resnet_forward.5} parent=0 // pred_fallthru
    _
  // Predicated region
  $region10: #{resnet_forward.5} parent=0 // pred_check
    _
  $region11: #{resnet_forward.5} parent=0 // pred_check_branch
    %13 = sbr.rel (0) target = $region13
  $region12: #{resnet_forward.5} parent=0 // pred_region
    _
  $region13: #{resnet_forward.5} parent=0 // pred_fallthru
    _
  %v14 = vld [vmem:[%s0] sm:$0xff]
  %v15 = vld [vmem:[%s0 + $0x8] sm:$0xff]
  %v16 = vld [vmem:[%s0 + $0x10] sm:$0xff]
  %v17 = vld [vmem:[%s0 + $0x18] sm:$0xff]
  %v18 = vld [vmem:[%s0 + $0x20] sm:$0xff]
  %v19 = vld [vmem:[%s0 + $0x28] sm:$0xff]
  %v20 = vld [vmem:[%s0 + $0x30] sm:$0xff]
  %v21 = vld [vmem:[%s0 + $0x38] sm:$0xff]
  %v22 = vld [vmem:[%s0 + $0x40] sm:$0xff]
  %v23 = vld [vmem:[%s0 + $0x48] sm:$0xff]
  %v24 = vld [vmem:[%s0 + $0x50] sm:$0xff]
  %v25 = vld [vmem:[%s0 + $0x58] sm:$0xff]
  %v26 = vld [vmem:[%s0 + $0x60] sm:$0xff]
  %v27 = vld [vmem:[%s0 + $0x68] sm:$0xff]
  %v28 = vld [vmem:[%s0 + $0x70] sm:$0xff]
  %v29 = vld [vmem:[%s0 + $0x78] sm:$0xff]
  %v30 = vld [vmem:[%s0 + $0x80] sm:$0xff]
  %v31 = vld [vmem:[%s0 + $0x88] sm:$0xff]
  %v32 = vld [vmem:[%s0 + $0x90] sm:$0xff]
  %v33 = vld [vmem:[%s0 + $0x98] sm:$0xff]
  %v34 = vld [vmem:[%s0 + $0xa0] sm:$0xff]
  %v35 = vld [vmem:[%s0 + $0xa8] sm:$0xff]
  %v36 = vld [vmem:[%s0 + $0xb0] sm:$0xff]
  %v37 = vld [vmem:[%s0 + $0xb8] sm:$0xff]
  %v38 = vld [vmem:[%s0 + $0xc0] sm:$0xff]
  %v39 = vld [vmem:[%s0 + $0xc8] sm:$0xff]
  %v40 = vld [vmem:[%s0 + $0xd0] sm:$0xff]
  %v41 = vld [vmem:[%s0 + $0xd8] sm:$0xff]
  %v42 = vld [vmem:[%s0 + $0xe0] sm:$0xff]
  %v43 = vld [vmem:[%s0 + $0xe8] sm:$0xff]
  %v44 = vld [vmem:[%s0 + $0xf0] sm:$0xff]
  %v45 = vld [vmem:[%s0 + $0xf8] sm:$0xff]
  %v46 = vld [vmem:[%s0 + $0x100] sm:$0xff]
  %v47 = vld [vmem:[%s0 + $0x108] sm:$0xff]
  %v48 = vld [vmem:[%s0 + $0x110] sm:$0xff]
  %v49 = vld [vmem:[%s0 + $0x118] sm:$0xff]
  %v50 = vld [vmem:[%s0 + $0x120] sm:$0xff]
  %v51 = vld [vmem:[%s0 + $0x128] sm:$0xff]
  %v52 = vld [vmem:[%s0 + $0x130] sm:$0xff]
  %v53 = vld [vmem:[%s0 + $0x138] sm:$0xff]
  %v54 = vld [vmem:[%s0 + $0x140] sm:$0xff]
  %v55 = vld [vmem:[%s0 + $0x148] sm:$0xff]
  %v56 = vld [vmem:[%s0 + $0x150] sm:$0xff]
  %v57 = vld [vmem:[%s0 + $0x158] sm:$0xff]
  %v58 = vld [vmem:[%s0 + $0x160] sm:$0xff]
  %v59 = vld [vmem:[%s0 + $0x168] sm:$0xff]
  %v60 = vld [vmem:[%s0 + $0x170] sm:$0xff]
  %v61 = vld [vmem:[%s0 + $0x178] sm:$0xff]
  %v62 = vld [vmem:[%s0 + $0x180] sm:$0xff]
  %v63 = vld [vmem:[%s0 + $0x188] sm:$0xff]
  %v64 = vld [vmem:[%s0 + $0x190] sm:$0xff]
  %v65 = vld [vmem:[%s0 + $0x198] sm:$0xff]
  %v66 = vld [vmem:[%s0 + $0x1a0] sm:$0xff]
  %v67 = vld [vmem:[%s0 + $0x1a8] sm:$0xff]
  %v68 = vld [vmem:[%s0 + $0x1b0] sm:$0xff]
  %v69 = vld [vmem:[%s0 + $0x1b8] sm:$0xff]
  %v70 = vld [vmem:[%s0 + $0x1c0] sm:$0xff]
  %v71 = vld [vmem:[%s0 + $0x1c8] sm:$0xff]
  %v72 = vld [vmem:[%s0 + $0x1d0] sm:$0xff]
  %v73 = vld [vmem:[%s0 + $0x1d8] sm:$0xff]
  %v74 = vld [vmem:[%s0 + $0x1e0] sm:$0xff]
  %v75 = vld [vmem:[%s0 + $0x1e8] sm:$0xff]
  %v76 = vld [vmem:[%s0 + $0x1f0] sm:$0xff]
  %v77 = vld [vmem:[%s0 + $0x1f8] sm:$0xff]
  %v78 = vld [vmem:[%s0 + $0x200] sm:$0xff]
  %v79 = vld [vmem:[%s0 + $0x208] sm:$0xff]
  %v80 = vld [vmem:[%s0 + $0x210] sm:$0xff]
  %v81 = vld [vmem:[%s0 + $0x218] sm:$0xff]
  %v82 = vld [vmem:[%s0 + $0x220] sm:$0xff]
  %v83 = vld [vmem:[%s0 + $0x228] sm:$0xff]
  %v84 = vld [vmem:[%s0 + $0x230] sm:$0xff]
  %v85 = vld [vmem:[%s0 + $0x238] sm:$0xff]
  %v86 = vld [vmem:[%s0 + $0x240] sm:$0xff]
  %v87 = vld [vmem:[%s0 + $0x248] sm:$0xff]
  %v88 = vld [vmem:[%s0 + $0x250] sm:$0xff]
  %v89 = vld [vmem:[%s0 + $0x258] sm:$0xff]
  %v90 = vld [vmem:[%s0 + $0x260] sm:$0xff]
  %v91 = vld [vmem:[%s0 + $0x268] sm:$0xff]
  %v92 = vld [vmem:[%s0 + $0x270] sm:$0xff]
  %v93 = vld [vmem:[%s0 + $0x278] sm:$0xff]
  %v94 = vld [vmem:[%s0 + $0x280] sm:$0xff]
  %v95 = vld [vmem:[%s0 + $0x288] sm:$0xff]
  %v96 = vld [vmem:[%s0 + $0x290] sm:$0xff]
  %v97 = vld [vmem:[%s0 + $0x298] sm:$0xff]
  %v98 = vld [vmem:[%s0 + $0x2a0] sm:$0xff]
  %v99 = vld [vmem:[%s0 + $0x2a8] sm:$0xff]
  %v100 = vld [vmem:[%s0 + $0x2b0] sm:$0xff]
  %v101 = vld [vmem:[%s0 + $0x2b8] sm:$0xff]
  %v102 = vld [vmem:[%s0 + $0x2c0] sm:$0xff]
  %v103 = vld [vmem:[%s0 + $0x2c8] sm:$0xff]
  %v104 = vld [vmem:[%s0 + $0x2d0] sm:$0xff]
  %v105 = vld [vmem:[%s0 + $0x2d8] sm:$0xff]
  %v106 = vld [vmem:[%s0 + $0x2e0] sm:$0xff]
  %v107 = vld [vmem:[%s0 + $0x2e8] sm:$0xff]
  %v108 = vld [vmem:[%s0 + $0x2f0] sm:$0xff]
  %v109 = vld [vmem:[%s0 + $0x2f8] sm:$0xff]
  %v110 = vld [vmem:[%s0 + $0x300] sm:$0xff]
  %v111 = vld [vmem:[%s0 + $0x308] sm:$0xff]
  %v112 = vld [vmem:[%s0 + $0x310] sm:$0xff]
  %v113 = vld [vmem:[%s0 + $0x318] sm:$0xff]
  %v114 = vld [vmem:[%s0 + $0x320] sm:$0xff]
  %v115 = vld [vmem:[%s0 + $0x328] sm:$0xff]
  %v116 = vld [vmem:[%s0 + $0x330] sm:$0xff]
  %v117 = vld [vmem:[%s0 + $0x338] sm:$0xff]
  %v118 = vld [vmem:[%s0 + $0x340] sm:$0xff]
  %v119 = vld [vmem:[%s0 + $0x348] sm:$0xff]
  %v120 = vld [vmem:[%s0 + $0x350] sm:$0xff]
  %v121 = vld [vmem:[%s0 + $0x358] sm:$0xff]
  %v122 = vld [vmem:[%s0 + $0x360] sm:$0xff]
  %v123 = vld [vmem:[%s0 + $0x368] sm:$0xff]
  %v124 = vld [vmem:[%s0 + $0x370] sm:$0xff]
  %v125 = vld [vmem:[%s0 + $0x378] sm:$0xff]
  %v126 = vld [vmem:[%s0 + $0x380] sm:$0xff]
  %v127 = vld [vmem:[%s0 + $0x388] sm:$0xff]
  %v128 = vld [vmem:[%s0 + $0x390] sm:$0xff]
  %v129 = vld [vmem:[%s0 + $0x398] sm:$0xff]
  %v130 = vld [vmem:[%s0 + $0x3a0] sm:$0xff]
  %v131 = vld [vmem:[%s0 + $0x3a8] sm:$0xff]
  %v132 = vld [vmem:[%s0 + $0x3b0] sm:$0xff]
  %v133 = vld [vmem:[%s0 + $0x3b8] sm:$0xff]
  %v134 = vld [vmem:[%s0 + $0x3c0] sm:$0xff]
  %v135 = vld [vmem:[%s0 + $0x3c8] sm:$0xff]
  %v136 = vld [vmem:[%s0 + $0x3d0] sm:$0xff]
  %v137 = vld [vmem:[%s0 + $0x3d8] sm:$0xff]
  %v138 = vld [vmem:[%s0 + $0x3e0] sm:$0xff]
  %v139 = vld [vmem:[%s0 + $0x3e8] sm:$0xff]
  %v140 = vld [vmem:[%s0 + $0x3f0] sm:$0xff]
  %v141 = vld [vmem:[%s0 + $0x3f8] sm:$0xff]
  %v142 = vld [vmem:[%s1] sm:$0xff]
  %v143 = vld [vmem:[%s1 + $0x8] sm:$0xff]
  %v144 = vld [vmem:[%s1 + $0x10] sm:$0xff]
  %v145 = vld [vmem:[%s1 + $0x18] sm:$0xff]
  %v146 = vld [vmem:[%s1 + $0x20] sm:$0xff]
  %v147 = vld [vmem:[%s1 + $0x28] sm:$0xff]
  %v148 = vld [vmem:[%s1 + $0x30] sm:$0xff]
  %v149 = vld [vmem:[%s1 + $0x38] sm:$0xff]
  %v150 = vld [vmem:[%s1 + $0x40] sm:$0xff]
  %v151 = vld [vmem:[%s1 + $0x48] sm:$0xff]
  %v152 = vld [vmem:[%s1 + $0x50] sm:$0xff]
  %v153 = vld [vmem:[%s1 + $0x58] sm:$0xff]
  %v154 = vld [vmem:[%s1 + $0x60] sm:$0xff]
  %v155 = vld [vmem:[%s1 + $0x68] sm:$0xff]
  %v156 = vld [vmem:[%s1 + $0x70] sm:$0xff]
  %v157 = vld [vmem:[%s1 + $0x78] sm:$0xff]
  %v158 = vld [vmem:[%s1 + $0x80] sm:$0xff]
  %v159 = vld [vmem:[%s1 + $0x88] sm:$0xff]
  %v160 = vld [vmem:[%s1 + $0x90] sm:$0xff]
  %v161 = vld [vmem:[%s1 + $0x98] sm:$0xff]
  %v162 = vld [vmem:[%s1 + $0xa0] sm:$0xff]
  %v163 = vld [vmem:[%s1 + $0xa8] sm:$0xff]
  %v164 = vld [vmem:[%s1 + $0xb0] sm:$0xff]
  %v165 = vld [vmem:[%s1 + $0xb8] sm:$0xff]
  %v166 = vld [vmem:[%s1 + $0xc0] sm:$0xff]
  %v167 = vld [vmem:[%s1 + $0xc8] sm:$0xff]
  %v168 = vld [vmem:[%s1 + $0xd0] sm:$0xff]
  %v169 = vld [vmem:[%s1 + $0xd8] sm:$0xff]
  %v170 = vld [vmem:[%s1 + $0xe0] sm:$0xff]
  %v171 = vld [vmem:[%s1 + $0xe8] sm:$0xff]
  %v172 = vld [vmem:[%s1 + $0xf0] sm:$0xff]
  %v173 = vld [vmem:[%s1 + $0xf8] sm:$0xff]
  %v174 = vld [vmem:[%s2] sm:$0x1]
  %v176 = vlaneseq
  %v177 = vshrl.u32 %v176, 7
  %v178 = vsub.s32 0, %v177
  %v179 = vrot.slane %v174, %v178
  %181 = vmatprep.subr.mxu0 0.0
  %182 = vmatpush1.msra.mxu0 %v142
  %183 = vmatprep.subr.mxu0 0.0
  %184 = vmatpush1.msra.mxu0 %v143
  %185 = vmatprep.subr.mxu0 0.0
  %186 = vmatpush1.msra.mxu0 %v144
  %187 = vmatprep.subr.mxu0 0.0
  %188 = vmatpush1.msra.mxu0 %v145
  %189 = vmatprep.subr.mxu0 0.0
  %190 = vmatpush1.msra.mxu0 %v146
  %191 = vmatprep.subr.mxu0 0.0
  %192 = vmatpush1.msra.mxu0 %v147
  %193 = vmatprep.subr.mxu0 0.0
  %194 = vmatpush1.msra.mxu0 %v148
  %195 = vmatprep.subr.mxu0 0.0
  %196 = vmatpush1.msra.mxu0 %v149
  %197 = vmatprep.subr.mxu0 0.0
  %198 = vmatpush1.msra.mxu0 %v150
  %199 = vmatprep.subr.mxu0 0.0
  %200 = vmatpush1.msra.mxu0 %v151
  %201 = vmatprep.subr.mxu0 0.0
  %202 = vmatpush1.msra.mxu0 %v152
  %203 = vmatprep.subr.mxu0 0.0
  %204 = vmatpush1.msra.mxu0 %v153
  %205 = vmatprep.subr.mxu0 0.0
  %206 = vmatpush1.msra.mxu0 %v154
  %207 = vmatprep.subr.mxu0 0.0
  %208 = vmatpush1.msra.mxu0 %v155
  %209 = vmatprep.subr.mxu0 0.0
  %210 = vmatpush1.msra.mxu0 %v156
  %211 = vmatprep.subr.mxu0 0.0
  %212 = vmatpush1.msra.mxu0 %v157
  %213 = vmatprep.subr.mxu0 0.0
  %214 = vmatpush1.msra.mxu0 %v158
  %215 = vmatprep.subr.mxu0 0.0
  %216 = vmatpush1.msra.mxu0 %v159
  %217 = vmatprep.subr.mxu0 0.0
  %218 = vmatpush1.msra.mxu0 %v160
  %219 = vmatprep.subr.mxu0 0.0
  %220 = vmatpush1.msra.mxu0 %v161
  %221 = vmatprep.subr.mxu0 0.0
  %222 = vmatpush1.msra.mxu0 %v162
  %223 = vmatprep.subr.mxu0 0.0
  %224 = vmatpush1.msra.mxu0 %v163
  %225 = vmatprep.subr.mxu0 0.0
  %226 = vmatpush1.msra.mxu0 %v164
  %227 = vmatprep.subr.mxu0 0.0
  %228 = vmatpush1.msra.mxu0 %v165
  %229 = vmatprep.subr.mxu0 0.0
  %230 = vmatpush1.msra.mxu0 %v166
  %231 = vmatprep.subr.mxu0 0.0
  %232 = vmatpush1.msra.mxu0 %v167
  %233 = vmatprep.subr.mxu0 0.0
  %234 = vmatpush1.msra.mxu0 %v168
  %235 = vmatprep.subr.mxu0 0.0
  %236 = vmatpush1.msra.mxu0 %v169
  %237 = vmatprep.subr.mxu0 0.0
  %238 = vmatpush1.msra.mxu0 %v170
  %239 = vmatprep.subr.mxu0 0.0
  %240 = vmatpush1.msra.mxu0 %v171
  %241 = vmatprep.subr.mxu0 0.0
  %242 = vmatpush1.msra.mxu0 %v172
  %243 = vmatprep.subr.mxu0 0.0
  %244 = vmatpush1.msra.mxu0 %v173
  %245 = vmatprep.mubr.f32.mxu0 %v15
  %246 = vmatmul.mubr.f32.gmra.mrb[0].mxu0 %v14
  %v247 = vpop.f32.mrb[0].mxu0
  %v248 = vadd.f32 %v179, %v247
  %v249 = vpop.f32.mrb[0].mxu0
  %250 = vmatprep.mubr.f32.mxu0 %v17
  %251 = vmatmul.mubr.f32.gmra.mrb[0].mxu0 %v16
  %v252 = vpop.f32.mrb[0].mxu0
  %v253 = vadd.f32 %v179, %v252
  %v254 = vpop.f32.mrb[0].mxu0
  %255 = vmatprep.mubr.f32.mxu0 %v19
  %256 = vmatmul.mubr.f32.gmra.mrb[0].mxu0 %v18
  %v257 = vpop.f32.mrb[0].mxu0
  %v258 = vadd.f32 %v179, %v257
  %v259 = vpop.f32.mrb[0].mxu0
  %260 = vmatprep.mubr.f32.mxu0 %v21
  %261 = vmatmul.mubr.f32.gmra.mrb[0].mxu0 %v20
  %v262 = vpop.f32.mrb[0].mxu0
  %v263 = vadd.f32 %v179, %v262
  %v264 = vpop.f32.mrb[0].mxu0
  %265 = vmatprep.mubr.f32.mxu0 %v23
  %266 = vmatmul.mubr.f32.gmra.mrb[0].mxu0 %v22
  %v267 = vpop.f32.mrb[0].mxu0
  %v268 = vadd.f32 %v179, %v267
  %v269 = vpop.f32.mrb[0].mxu0
  %270 = vmatprep.mubr.f32.mxu0 %v25
  %271 = vmatmul.mubr.f32.gmra.mrb[0].mxu0 %v24
  %v272 = vpop.f32.mrb[0].mxu0
  %v273 = vadd.f32 %v179, %v272
  %v274 = vpop.f32.mrb[0].mxu0
  %275 = vmatprep.mubr.f32.mxu0 %v27
  %276 = vmatmul.mubr.f32.gmra.mrb[0].mxu0 %v26
  %v277 = vpop.f32.mrb[0].mxu0
  %v278 = vadd.f32 %v179, %v277
  %v279 = vpop.f32.mrb[0].mxu0
  %280 = vmatprep.mubr.f32.mxu0 %v29
  %281 = vmatmul.mubr.f32.gmra.mrb[0].mxu0 %v28
  %v282 = vpop.f32.mrb[0].mxu0
  %v283 = vadd.f32 %v179, %v282
  %v284 = vpop.f32.mrb[0].mxu0
  %285 = vmatprep.mubr.f32.mxu0 %v31
  %286 = vmatmul.mubr.f32.gmra.mrb[0].mxu0 %v30
  %v287 = vpop.f32.mrb[0].mxu0
  %v288 = vadd.f32 %v179, %v287
  %v289 = vpop.f32.mrb[0].mxu0
  %290 = vmatprep.mubr.f32.mxu0 %v33
  %291 = vmatmul.mubr.f32.gmra.mrb[0].mxu0 %v32
  %v292 = vpop.f32.mrb[0].mxu0
  %v293 = vadd.f32 %v179, %v292
  %v294 = vpop.f32.mrb[0].mxu0
  %295 = vmatprep.mubr.f32.mxu0 %v35
  %296 = vmatmul.mubr.f32.gmra.mrb[0].mxu0 %v34
  %v297 = vpop.f32.mrb[0].mxu0
  %v298 = vadd.f32 %v179, %v297
  %v299 = vpop.f32.mrb[0].mxu0
  %300 = vmatprep.mubr.f32.mxu0 %v37
  %301 = vmatmul.mubr.f32.gmra.mrb[0].mxu0 %v36
  %v302 = vpop.f32.mrb[0].mxu0
  %v303 = vadd.f32 %v179, %v302
  %v304 = vpop.f32.mrb[0].mxu0
  %305 = vmatprep.mubr.f32.mxu0 %v39
  %306 = vmatmul.mubr.f32.gmra.mrb[0].mxu0 %v38
  %v307 = vpop.f32.mrb[0].mxu0
  %v308 = vadd.f32 %v179, %v307
  %v309 = vpop.f32.mrb[0].mxu0
  %310 = vmatprep.mubr.f32.mxu0 %v41
  %311 = vmatmul.mubr.f32.gmra.mrb[0].mxu0 %v40
  %v312 = vpop.f32.mrb[0].mxu0
  %v313 = vadd.f32 %v179, %v312
  %v314 = vpop.f32.mrb[0].mxu0
  %315 = vmatprep.mubr.f32.mxu0 %v43
  %316 = vmatmul.mubr.f32.gmra.mrb[0].mxu0 %v42
  %v317 = vpop.f32.mrb[0].mxu0
  %v318 = vadd.f32 %v179, %v317
  %v319 = vpop.f32.mrb[0].mxu0
  %320 = vmatprep.mubr.f32.mxu0 %v45
  %321 = vmatmul.mubr.f32.gmra.mrb[0].mxu0 %v44
  %v322 = vpop.f32.mrb[0].mxu0
  %v323 = vadd.f32 %v179, %v322
  %v324 = vpop.f32.mrb[0].mxu0
  %325 = vmatprep.mubr.f32.mxu0 %v47
  %326 = vmatmul.mubr.f32.gmra.mrb[0].mxu0 %v46
  %v327 = vpop.f32.mrb[0].mxu0
  %v328 = vadd.f32 %v179, %v327
  %v329 = vpop.f32.mrb[0].mxu0
  %330 = vmatprep.mubr.f32.mxu0 %v49
  %331 = vmatmul.mubr.f32.gmra.mrb[0].mxu0 %v48
  %v332 = vpop.f32.mrb[0].mxu0
  %v333 = vadd.f32 %v179, %v332
  %v334 = vpop.f32.mrb[0].mxu0
  %335 = vmatprep.mubr.f32.mxu0 %v51
  %336 = vmatmul.mubr.f32.gmra.mrb[0].mxu0 %v50
  %v337 = vpop.f32.mrb[0].mxu0
  %v338 = vadd.f32 %v179, %v337
  %v339 = vpop.f32.mrb[0].mxu0
  %340 = vmatprep.mubr.f32.mxu0 %v53
  %341 = vmatmul.mubr.f32.gmra.mrb[0].mxu0 %v52
  %v342 = vpop.f32.mrb[0].mxu0
  %v343 = vadd.f32 %v179, %v342
  %v344 = vpop.f32.mrb[0].mxu0
  %345 = vmatprep.mubr.f32.mxu0 %v55
  %346 = vmatmul.mubr.f32.gmra.mrb[0].mxu0 %v54
  %v347 = vpop.f32.mrb[0].mxu0
  %v348 = vadd.f32 %v179, %v347
  %v349 = vpop.f32.mrb[0].mxu0
  %350 = vmatprep.mubr.f32.mxu0 %v57
  %351 = vmatmul.mubr.f32.gmra.mrb[0].mxu0 %v56
  %v352 = vpop.f32.mrb[0].mxu0
  %v353 = vadd.f32 %v179, %v352
  %v354 = vpop.f32.mrb[0].mxu0
  %355 = vmatprep.mubr.f32.mxu0 %v59
  %356 = vmatmul.mubr.f32.gmra.mrb[0].mxu0 %v58
  %v357 = vpop.f32.mrb[0].mxu0
  %v358 = vadd.f32 %v179, %v357
  %v359 = vpop.f32.mrb[0].mxu0
  %360 = vmatprep.mubr.f32.mxu0 %v61
  %361 = vmatmul.mubr.f32.gmra.mrb[0].mxu0 %v60
  %v362 = vpop.f32.mrb[0].mxu0
  %v363 = vadd.f32 %v179, %v362
  %v364 = vpop.f32.mrb[0].mxu0
  %365 = vmatprep.mubr.f32.mxu0 %v63
  %366 = vmatmul.mubr.f32.gmra.mrb[0].mxu0 %v62
  %v367 = vpop.f32.mrb[0].mxu0
  %v368 = vadd.f32 %v179, %v367
  %v369 = vpop.f32.mrb[0].mxu0
  %370 = vmatprep.mubr.f32.mxu0 %v65
  %371 = vmatmul.mubr.f32.gmra.mrb[0].mxu0 %v64
  %v372 = vpop.f32.mrb[0].mxu0
  %v373 = vadd.f32 %v179, %v372
  %v374 = vpop.f32.mrb[0].mxu0
  %375 = vmatprep.mubr.f32.mxu0 %v67
  %376 = vmatmul.mubr.f32.gmra.mrb[0].mxu0 %v66
  %v377 = vpop.f32.mrb[0].mxu0
  %v378 = vadd.f32 %v179, %v377
  %v379 = vpop.f32.mrb[0].mxu0
  %380 = vmatprep.mubr.f32.mxu0 %v69
  %381 = vmatmul.mubr.f32.gmra.mrb[0].mxu0 %v68
  %v382 = vpop.f32.mrb[0].mxu0
  %v383 = vadd.f32 %v179, %v382
  %v384 = vpop.f32.mrb[0].mxu0
  %385 = vmatprep.mubr.f32.mxu0 %v71
  %386 = vmatmul.mubr.f32.gmra.mrb[0].mxu0 %v70
  %v387 = vpop.f32.mrb[0].mxu0
  %v388 = vadd.f32 %v179, %v387
  %v389 = vpop.f32.mrb[0].mxu0
  %390 = vmatprep.mubr.f32.mxu0 %v73
  %391 = vmatmul.mubr.f32.gmra.mrb[0].mxu0 %v72
  %v392 = vpop.f32.mrb[0].mxu0
  %v393 = vadd.f32 %v179, %v392
  %v394 = vpop.f32.mrb[0].mxu0
  %395 = vmatprep.mubr.f32.mxu0 %v75
  %396 = vmatmul.mubr.f32.gmra.mrb[0].mxu0 %v74
  %v397 = vpop.f32.mrb[0].mxu0
  %v398 = vadd.f32 %v179, %v397
  %v399 = vpop.f32.mrb[0].mxu0
  %400 = vmatprep.mubr.f32.mxu0 %v77
  %401 = vmatmul.mubr.f32.gmra.mrb[0].mxu0 %v76
  %v402 = vpop.f32.mrb[0].mxu0
  %v403 = vadd.f32 %v179, %v402
  %v404 = vpop.f32.mrb[0].mxu0
  %405 = vmatprep.mubr.f32.mxu0 %v79
  %406 = vmatmul.mubr.f32.gmra.mrb[0].mxu0 %v78
  %v407 = vpop.f32.mrb[0].mxu0
  %v408 = vadd.f32 %v179, %v407
  %v409 = vpop.f32.mrb[0].mxu0
  %410 = vmatprep.mubr.f32.mxu0 %v81
  %411 = vmatmul.mubr.f32.gmra.mrb[0].mxu0 %v80
  %v412 = vpop.f32.mrb[0].mxu0
  %v413 = vadd.f32 %v179, %v412
  %v414 = vpop.f32.mrb[0].mxu0
  %415 = vmatprep.mubr.f32.mxu0 %v83
  %416 = vmatmul.mubr.f32.gmra.mrb[0].mxu0 %v82
  %v417 = vpop.f32.mrb[0].mxu0
  %v418 = vadd.f32 %v179, %v417
  %v419 = vpop.f32.mrb[0].mxu0
  %420 = vmatprep.mubr.f32.mxu0 %v85
  %421 = vmatmul.mubr.f32.gmra.mrb[0].mxu0 %v84
  %v422 = vpop.f32.mrb[0].mxu0
  %v423 = vadd.f32 %v179, %v422
  %v424 = vpop.f32.mrb[0].mxu0
  %425 = vmatprep.mubr.f32.mxu0 %v87
  %426 = vmatmul.mubr.f32.gmra.mrb[0].mxu0 %v86
  %v427 = vpop.f32.mrb[0].mxu0
  %v428 = vadd.f32 %v179, %v427
  %v429 = vpop.f32.mrb[0].mxu0
  %430 = vmatprep.mubr.f32.mxu0 %v89
  %431 = vmatmul.mubr.f32.gmra.mrb[0].mxu0 %v88
  %v432 = vpop.f32.mrb[0].mxu0
  %v433 = vadd.f32 %v179, %v432
  %v434 = vpop.f32.mrb[0].mxu0
  %435 = vmatprep.mubr.f32.mxu0 %v91
  %436 = vmatmul.mubr.f32.gmra.mrb[0].mxu0 %v90
  %v437 = vpop.f32.mrb[0].mxu0
  %v438 = vadd.f32 %v179, %v437
  %v439 = vpop.f32.mrb[0].mxu0
  %440 = vmatprep.mubr.f32.mxu0 %v93
  %441 = vmatmul.mubr.f32.gmra.mrb[0].mxu0 %v92
  %v442 = vpop.f32.mrb[0].mxu0
  %v443 = vadd.f32 %v179, %v442
  %v444 = vpop.f32.mrb[0].mxu0
  %445 = vmatprep.mubr.f32.mxu0 %v95
  %446 = vmatmul.mubr.f32.gmra.mrb[0].mxu0 %v94
  %v447 = vpop.f32.mrb[0].mxu0
  %v448 = vadd.f32 %v179, %v447
  %v449 = vpop.f32.mrb[0].mxu0
  %450 = vmatprep.mubr.f32.mxu0 %v97
  %451 = vmatmul.mubr.f32.gmra.mrb[0].mxu0 %v96
  %v452 = vpop.f32.mrb[0].mxu0
  %v453 = vadd.f32 %v179, %v452
  %v454 = vpop.f32.mrb[0].mxu0
  %455 = vmatprep.mubr.f32.mxu0 %v99
  %456 = vmatmul.mubr.f32.gmra.mrb[0].mxu0 %v98
  %v457 = vpop.f32.mrb[0].mxu0
  %v458 = vadd.f32 %v179, %v457
  %v459 = vpop.f32.mrb[0].mxu0
  %460 = vmatprep.mubr.f32.mxu0 %v101
  %461 = vmatmul.mubr.f32.gmra.mrb[0].mxu0 %v100
  %v462 = vpop.f32.mrb[0].mxu0
  %v463 = vadd.f32 %v179, %v462
  %v464 = vpop.f32.mrb[0].mxu0
  %465 = vmatprep.mubr.f32.mxu0 %v103
  %466 = vmatmul.mubr.f32.gmra.mrb[0].mxu0 %v102
  %v467 = vpop.f32.mrb[0].mxu0
  %v468 = vadd.f32 %v179, %v467
  %v469 = vpop.f32.mrb[0].mxu0
  %470 = vmatprep.mubr.f32.mxu0 %v105
  %471 = vmatmul.mubr.f32.gmra.mrb[0].mxu0 %v104
  %v472 = vpop.f32.mrb[0].mxu0
  %v473 = vadd.f32 %v179, %v472
  %v474 = vpop.f32.mrb[0].mxu0
  %475 = vmatprep.mubr.f32.mxu0 %v107
  %476 = vmatmul.mubr.f32.gmra.mrb[0].mxu0 %v106
  %v477 = vpop.f32.mrb[0].mxu0
  %v478 = vadd.f32 %v179, %v477
  %v479 = vpop.f32.mrb[0].mxu0
  %480 = vmatprep.mubr.f32.mxu0 %v109
  %481 = vmatmul.mubr.f32.gmra.mrb[0].mxu0 %v108
  %v482 = vpop.f32.mrb[0].mxu0
  %v483 = vadd.f32 %v179, %v482
  %v484 = vpop.f32.mrb[0].mxu0
  %485 = vmatprep.mubr.f32.mxu0 %v111
  %486 = vmatmul.mubr.f32.gmra.mrb[0].mxu0 %v110
  %v487 = vpop.f32.mrb[0].mxu0
  %v488 = vadd.f32 %v179, %v487
  %v489 = vpop.f32.mrb[0].mxu0
  %490 = vmatprep.mubr.f32.mxu0 %v113
  %491 = vmatmul.mubr.f32.gmra.mrb[0].mxu0 %v112
  %v492 = vpop.f32.mrb[0].mxu0
  %v493 = vadd.f32 %v179, %v492
  %v494 = vpop.f32.mrb[0].mxu0
  %495 = vmatprep.mubr.f32.mxu0 %v115
  %496 = vmatmul.mubr.f32.gmra.mrb[0].mxu0 %v114
  %v497 = vpop.f32.mrb[0].mxu0
  %v498 = vadd.f32 %v179, %v497
  %v499 = vpop.f32.mrb[0].mxu0
  %500 = vmatprep.mubr.f32.mxu0 %v117
  %501 = vmatmul.mubr.f32.gmra.mrb[0].mxu0 %v116
  %v502 = vpop.f32.mrb[0].mxu0
  %v503 = vadd.f32 %v179, %v502
  %v504 = vpop.f32.mrb[0].mxu0
  %505 = vmatprep.mubr.f32.mxu0 %v119
  %506 = vmatmul.mubr.f32.gmra.mrb[0].mxu0 %v118
  %v507 = vpop.f32.mrb[0].mxu0
  %v508 = vadd.f32 %v179, %v507
  %v509 = vpop.f32.mrb[0].mxu0
  %510 = vmatprep.mubr.f32.mxu0 %v121
  %511 = vmatmul.mubr.f32.gmra.mrb[0].mxu0 %v120
  %v512 = vpop.f32.mrb[0].mxu0
  %v513 = vadd.f32 %v179, %v512
  %v514 = vpop.f32.mrb[0].mxu0
  %515 = vmatprep.mubr.f32.mxu0 %v123
  %516 = vmatmul.mubr.f32.gmra.mrb[0].mxu0 %v122
  %v517 = vpop.f32.mrb[0].mxu0
  %v518 = vadd.f32 %v179, %v517
  %v519 = vpop.f32.mrb[0].mxu0
  %520 = vmatprep.mubr.f32.mxu0 %v125
  %521 = vmatmul.mubr.f32.gmra.mrb[0].mxu0 %v124
  %v522 = vpop.f32.mrb[0].mxu0
  %v523 = vadd.f32 %v179, %v522
  %v524 = vpop.f32.mrb[0].mxu0
  %525 = vmatprep.mubr.f32.mxu0 %v127
  %526 = vmatmul.mubr.f32.gmra.mrb[0].mxu0 %v126
  %v527 = vpop.f32.mrb[0].mxu0
  %v528 = vadd.f32 %v179, %v527
  %v529 = vpop.f32.mrb[0].mxu0
  %530 = vmatprep.mubr.f32.mxu0 %v129
  %531 = vmatmul.mubr.f32.gmra.mrb[0].mxu0 %v128
  %v532 = vpop.f32.mrb[0].mxu0
  %v533 = vadd.f32 %v179, %v532
  %v534 = vpop.f32.mrb[0].mxu0
  %535 = vmatprep.mubr.f32.mxu0 %v131
  %536 = vmatmul.mubr.f32.gmra.mrb[0].mxu0 %v130
  %v537 = vpop.f32.mrb[0].mxu0
  %v538 = vadd.f32 %v179, %v537
  %v539 = vpop.f32.mrb[0].mxu0
  %540 = vmatprep.mubr.f32.mxu0 %v133
  %541 = vmatmul.mubr.f32.gmra.mrb[0].mxu0 %v132
  %v542 = vpop.f32.mrb[0].mxu0
  %v543 = vadd.f32 %v179, %v542
  %v544 = vpop.f32.mrb[0].mxu0
  %545 = vmatprep.mubr.f32.mxu0 %v135
  %546 = vmatmul.mubr.f32.gmra.mrb[0].mxu0 %v134
  %v547 = vpop.f32.mrb[0].mxu0
  %v548 = vadd.f32 %v179, %v547
  %v549 = vpop.f32.mrb[0].mxu0
  %550 = vmatprep.mubr.f32.mxu0 %v137
  %551 = vmatmul.mubr.f32.gmra.mrb[0].mxu0 %v136
  %v552 = vpop.f32.mrb[0].mxu0
  %v553 = vadd.f32 %v179, %v552
  %v554 = vpop.f32.mrb[0].mxu0
  %555 = vmatprep.mubr.f32.mxu0 %v139
  %556 = vmatmul.mubr.f32.gmra.mrb[0].mxu0 %v138
  %v557 = vpop.f32.mrb[0].mxu0
  %v558 = vadd.f32 %v179, %v557
  %v559 = vpop.f32.mrb[0].mxu0
  %560 = vmatprep.mubr.f32.mxu0 %v141
  %561 = vmatmul.mubr.f32.gmra.mrb[0].mxu0 %v140
  %v562 = vpop.f32.mrb[0].mxu0
  %v563 = vadd.f32 %v179, %v562
  %v564 = vpop.f32.mrb[0].mxu0
  %565 = vdwg.mxu0
  %v566 = vmax.f32 %v248, 0.0
  %v567 = vmax.f32 %v253, 0.0
  %v568 = vmax.f32 %v258, 0.0
  %v569 = vmax.f32 %v263, 0.0
  %v570 = vmax.f32 %v268, 0.0
  %v571 = vmax.f32 %v273, 0.0
  %v572 = vmax.f32 %v278, 0.0
  %v573 = vmax.f32 %v283, 0.0
  %v574 = vmax.f32 %v288, 0.0
  %v575 = vmax.f32 %v293, 0.0
  %v576 = vmax.f32 %v298, 0.0
  %v577 = vmax.f32 %v303, 0.0
  %v578 = vmax.f32 %v308, 0.0
  %v579 = vmax.f32 %v313, 0.0
  %v580 = vmax.f32 %v318, 0.0
  %v581 = vmax.f32 %v323, 0.0
  %v582 = vmax.f32 %v328, 0.0
  %v583 = vmax.f32 %v333, 0.0
  %v584 = vmax.f32 %v338, 0.0
  %v585 = vmax.f32 %v343, 0.0
  %v586 = vmax.f32 %v348, 0.0
  %v587 = vmax.f32 %v353, 0.0
  %v588 = vmax.f32 %v358, 0.0
  %v589 = vmax.f32 %v363, 0.0
  %v590 = vmax.f32 %v368, 0.0
  %v591 = vmax.f32 %v373, 0.0
  %v592 = vmax.f32 %v378, 0.0
  %v593 = vmax.f32 %v383, 0.0
  %v594 = vmax.f32 %v388, 0.0
  %v595 = vmax.f32 %v393, 0.0
  %v596 = vmax.f32 %v398, 0.0
  %v597 = vmax.f32 %v403, 0.0
  %v598 = vmax.f32 %v408, 0.0
  %v599 = vmax.f32 %v413, 0.0
  %v600 = vmax.f32 %v418, 0.0
  %v601 = vmax.f32 %v423, 0.0
  %v602 = vmax.f32 %v428, 0.0
  %v603 = vmax.f32 %v433, 0.0
  %v604 = vmax.f32 %v438, 0.0
  %v605 = vmax.f32 %v443, 0.0
  %v606 = vmax.f32 %v448, 0.0
  %v607 = vmax.f32 %v453, 0.0
  %v608 = vmax.f32 %v458, 0.0
  %v609 = vmax.f32 %v463, 0.0
  %v610 = vmax.f32 %v468, 0.0
  %v611 = vmax.f32 %v473, 0.0
  %v612 = vmax.f32 %v478, 0.0
  %v613 = vmax.f32 %v483, 0.0
  %v614 = vmax.f32 %v488, 0.0
  %v615 = vmax.f32 %v493, 0.0
  %v616 = vmax.f32 %v498, 0.0
  %v617 = vmax.f32 %v503, 0.0
  %v618 = vmax.f32 %v508, 0.0
  %v619 = vmax.f32 %v513, 0.0
  %v620 = vmax.f32 %v518, 0.0
  %v621 = vmax.f32 %v523, 0.0
  %v622 = vmax.f32 %v528, 0.0
  %v623 = vmax.f32 %v533, 0.0
  %v624 = vmax.f32 %v538, 0.0
  %v625 = vmax.f32 %v543, 0.0
  %v626 = vmax.f32 %v548, 0.0
  %v627 = vmax.f32 %v553, 0.0
  %v628 = vmax.f32 %v558, 0.0
  %v629 = vmax.f32 %v563, 0.0
  %630 = vst [vmem:[%s3] sm:$0xff] %v566
  %631 = vst [vmem:[%s3 + $0x8] sm:$0xff] %v567
  %632 = vst [vmem:[%s3 + $0x10] sm:$0xff] %v568
  %633 = vst [vmem:[%s3 + $0x18] sm:$0xff] %v569
  %634 = vst [vmem:[%s3 + $0x20] sm:$0xff] %v570
  %635 = vst [vmem:[%s3 + $0x28] sm:$0xff] %v571
  %636 = vst [vmem:[%s3 + $0x30] sm:$0xff] %v572
  %637 = vst [vmem:[%s3 + $0x38] sm:$0xff] %v573
  %638 = vst [vmem:[%s3 + $0x40] sm:$0xff] %v574
  %639 = vst [vmem:[%s3 + $0x48] sm:$0xff] %v575
  %640 = vst [vmem:[%s3 + $0x50] sm:$0xff] %v576
  %641 = vst [vmem:[%s3 + $0x58] sm:$0xff] %v577
  %642 = vst [vmem:[%s3 + $0x60] sm:$0xff] %v578
  %643 = vst [vmem:[%s3 + $0x68] sm:$0xff] %v579
  %644 = vst [vmem:[%s3 + $0x70] sm:$0xff] %v580
  %645 = vst [vmem:[%s3 + $0x78] sm:$0xff] %v581
  %646 = vst [vmem:[%s3 + $0x80] sm:$0xff] %v582
  %647 = vst [vmem:[%s3 + $0x88] sm:$0xff] %v583
  %648 = vst [vmem:[%s3 + $0x90] sm:$0xff] %v584
  %649 = vst [vmem:[%s3 + $0x98] sm:$0xff] %v585
  %650 = vst [vmem:[%s3 + $0xa0] sm:$0xff] %v586
  %651 = vst [vmem:[%s3 + $0xa8] sm:$0xff] %v587
  %652 = vst [vmem:[%s3 + $0xb0] sm:$0xff] %v588
  %653 = vst [vmem:[%s3 + $0xb8] sm:$0xff] %v589
  %654 = vst [vmem:[%s3 + $0xc0] sm:$0xff] %v590
  %655 = vst [vmem:[%s3 + $0xc8] sm:$0xff] %v591
  %656 = vst [vmem:[%s3 + $0xd0] sm:$0xff] %v592
  %657 = vst [vmem:[%s3 + $0xd8] sm:$0xff] %v593
  %658 = vst [vmem:[%s3 + $0xe0] sm:$0xff] %v594
  %659 = vst [vmem:[%s3 + $0xe8] sm:$0xff] %v595
  %660 = vst [vmem:[%s3 + $0xf0] sm:$0xff] %v596
  %661 = vst [vmem:[%s3 + $0xf8] sm:$0xff] %v597
  %662 = vst [vmem:[%s3 + $0x100] sm:$0xff] %v598
  %663 = vst [vmem:[%s3 + $0x108] sm:$0xff] %v599
  %664 = vst [vmem:[%s3 + $0x110] sm:$0xff] %v600
  %665 = vst [vmem:[%s3 + $0x118] sm:$0xff] %v601
  %666 = vst [vmem:[%s3 + $0x120] sm:$0xff] %v602
  %667 = vst [vmem:[%s3 + $0x128] sm:$0xff] %v603
  %668 = vst [vmem:[%s3 + $0x130] sm:$0xff] %v604
  %669 = vst [vmem:[%s3 + $0x138] sm:$0xff] %v605
  %670 = vst [vmem:[%s3 + $0x140] sm:$0xff] %v606
  %671 = vst [vmem:[%s3 + $0x148] sm:$0xff] %v607
  %672 = vst [vmem:[%s3 + $0x150] sm:$0xff] %v608
  %673 = vst [vmem:[%s3 + $0x158] sm:$0xff] %v609
  %674 = vst [vmem:[%s3 + $0x160] sm:$0xff] %v610
  %675 = vst [vmem:[%s3 + $0x168] sm:$0xff] %v611
  %676 = vst [vmem:[%s3 + $0x170] sm:$0xff] %v612
  %677 = vst [vmem:[%s3 + $0x178] sm:$0xff] %v613
  %678 = vst [vmem:[%s3 + $0x180] sm:$0xff] %v614
  %679 = vst [vmem:[%s3 + $0x188] sm:$0xff] %v615
  %680 = vst [vmem:[%s3 + $0x190] sm:$0xff] %v616
  %681 = vst [vmem:[%s3 + $0x198] sm:$0xff] %v617
  %682 = vst [vmem:[%s3 + $0x1a0] sm:$0xff] %v618
  %683 = vst [vmem:[%s3 + $0x1a8] sm:$0xff] %v619
  %684 = vst [vmem:[%s3 + $0x1b0] sm:$0xff] %v620
  %685 = vst [vmem:[%s3 + $0x1b8] sm:$0xff] %v621
  %686 = vst [vmem:[%s3 + $0x1c0] sm:$0xff] %v622
  %687 = vst [vmem:[%s3 + $0x1c8] sm:$0xff] %v623
  %688 = vst [vmem:[%s3 + $0x1d0] sm:$0xff] %v624
  %689 = vst [vmem:[%s3 + $0x1d8] sm:$0xff] %v625
  %690 = vst [vmem:[%s3 + $0x1e0] sm:$0xff] %v626
  %691 = vst [vmem:[%s3 + $0x1e8] sm:$0xff] %v627
  %692 = vst [vmem:[%s3 + $0x1f0] sm:$0xff] %v628
  %693 = vst [vmem:[%s3 + $0x1f8] sm:$0xff] %v629
  // Predicated region
  $region14: #{resnet_forward.5} parent=0 // pred_check
    _
  $region15: #{resnet_forward.5} parent=0 // pred_check_branch
    %695 = sbr.rel (0) target = $region17
  $region16: #{resnet_forward.5} parent=0 // pred_region
    _
  $region17: #{resnet_forward.5} parent=0 // pred_fallthru
    _
  // Predicated region
  $region18: #{resnet_forward.5} parent=0 // pred_check
    _
  $region19: #{resnet_forward.5} parent=0 // pred_check_branch
    %697 = sbr.rel (0) target = $region21
  $region20: #{resnet_forward.5} parent=0 // pred_region
    _
  $region21: #{resnet_forward.5} parent=0 // pred_fallthru
    _

// kernel: resnet_forward.6
$region0: #{resnet_forward.6}
  #allocation0 [shape = 'u32[]', space=smem, size = 0x4, offset = 0x4, fixed_abs, tag = 'smem constant byte address 0x4 - core index']
  #allocation1 [shape = 'u32[144,128]{1,0:T(1,128)}', space=vmem, size = 0x12000, scoped, tag = 'internal scratch']
  %s0 = inlined_call_operand.vmem [shape: f32[9,1024], index: 0, kind: input, shape index: {}]
  %s1 = inlined_call_operand.vmem [shape: f32[1,1024], index: 1, kind: output, shape index: {}]
  %s2 = sld [smem:[#allocation0]]
  $region14: #{resnet_forward.6} parent=0
    _
  %s4 = ssub.s32 1, %s2
  %s5 = scalar_select 0, %s4, %s2
  // Predicated region
  $region2: #{resnet_forward.6} parent=0 // pred_check
    _
  $region3: #{resnet_forward.6} parent=0 // pred_check_branch
    %7 = sbr.rel (0) target = $region5
  $region4: #{resnet_forward.6} parent=0 // pred_region
    _
  $region5: #{resnet_forward.6} parent=0 // pred_fallthru
    _
  %v8 = vld [vmem:[%s0] ss:$8 sm:$0xf]
  %v9 = vld [vmem:[%s0] ss:$8 sm:$0xf0]
  %v10 = vor.u32 %v8, %v9
  %s11 = scalar_lea.vmem %s0, 1
  %v12 = vld [vmem:[%s11] ss:$8 sm:$0xf]
  %v13 = vld [vmem:[%s11] ss:$8 sm:$0xf0]
  %v14 = vor.u32 %v12, %v13
  %v15 = vmax.f32 %v10, %v14
  %s16 = scalar_lea.vmem %s0, 2
  %v17 = vld [vmem:[%s16] ss:$8 sm:$0xf]
  %v18 = vld [vmem:[%s16] ss:$8 sm:$0xf0]
  %v19 = vor.u32 %v17, %v18
  %v20 = vmax.f32 %v15, %v19
  %s21 = scalar_lea.vmem %s0, 3
  %v22 = vld [vmem:[%s21] ss:$8 sm:$0xf]
  %v23 = vld [vmem:[%s21] ss:$8 sm:$0xf0]
  %v24 = vor.u32 %v22, %v23
  %v25 = vmax.f32 %v20, %v24
  %s26 = scalar_lea.vmem %s0, 4
  %v27 = vld [vmem:[%s26] ss:$8 sm:$0xf]
  %v28 = vld [vmem:[%s26] ss:$8 sm:$0xf0]
  %v29 = vor.u32 %v27, %v28
  %v30 = vmax.f32 %v25, %v29
  %s31 = scalar_lea.vmem %s0, 5
  %v32 = vld [vmem:[%s31] ss:$8 sm:$0xf]
  %v33 = vld [vmem:[%s31] ss:$8 sm:$0xf0]
  %v34 = vor.u32 %v32, %v33
  %v35 = vmax.f32 %v30, %v34
  %s36 = scalar_lea.vmem %s0, 6
  %v37 = vld [vmem:[%s36] ss:$8 sm:$0xf]
  %v38 = vld [vmem:[%s36] ss:$8 sm:$0xf0]
  %v39 = vor.u32 %v37, %v38
  %v40 = vmax.f32 %v35, %v39
  %s41 = scalar_lea.vmem %s0, 7
  %v42 = vld [vmem:[%s41] ss:$8 sm:$0xf]
  %v43 = vld [vmem:[%s41] ss:$8 sm:$0xf0]
  %v44 = vor.u32 %v42, %v43
  %v45 = vmax.f32 %v40, %v44
  %s46 = scalar_lea.vmem %s0, 64
  %v47 = vld [vmem:[%s46] ss:$8 sm:$0xf]
  %v48 = vld [vmem:[%s46] ss:$8 sm:$0xf0]
  %v49 = vor.u32 %v47, %v48
  %v50 = vmax.f32 %v45, %v49
  %51 = vst [vmem:[%s1] sm:$0xff] %v50
  // Predicated region
  $region6: #{resnet_forward.6} parent=0 // pred_check
    _
  $region7: #{resnet_forward.6} parent=0 // pred_check_branch
    %53 = sbr.rel (0) target = $region9
  $region8: #{resnet_forward.6} parent=0 // pred_region
    _
  $region9: #{resnet_forward.6} parent=0 // pred_fallthru
    _
  // Predicated region
  $region10: #{resnet_forward.6} parent=0 // pred_check
    _
  $region11: #{resnet_forward.6} parent=0 // pred_check_branch
    %55 = sbr.rel (0) target = $region13
  $region12: #{resnet_forward.6} parent=0 // pred_region
    _
  $region13: #{resnet_forward.6} parent=0 // pred_fallthru
    _

// kernel: resnet_forward.7
$region0: #{resnet_forward.7}
  #allocation0 [shape = 'u32[]', space=smem, size = 0x4, offset = 0x4, fixed_abs, tag = 'smem constant byte address 0x4 - core index']
  #allocation1 [shape = 'u32[144,128]{1,0:T(1,128)}', space=vmem, size = 0x12000, scoped, tag = 'internal scratch']
  %s0 = inlined_call_operand.vmem [shape: f32[32,128], index: 0, kind: input, shape index: {}]
  %s1 = inlined_call_operand.vmem [shape: f32[128,16], index: 1, kind: input, shape index: {}]
  %s2 = inlined_call_operand.vmem [shape: f32[1,16], index: 2, kind: input, shape index: {}]
  %s3 = inlined_call_operand.vmem [shape: f32[1,16], index: 3, kind: input, shape index: {}]
  %s4 = inlined_call_operand.vmem [shape: f32[1,16], index: 4, kind: input, shape index: {}]
  %s5 = inlined_call_operand.vmem [shape: f32[9,32,32], index: 5, kind: input, shape index: {}]
  %s6 = inlined_call_operand.vmem [shape: f32[9,16,128], index: 6, kind: input, shape index: {}]
  %s7 = inlined_call_operand.vmem [shape: f32[1,128], index: 7, kind: input, shape index: {}]
  %s8 = inlined_call_operand.vmem [shape: f32[32,8], index: 8, kind: input, shape index: {}]
  %s9 = inlined_call_operand.vmem [shape: f32[8,128], index: 9, kind: input, shape index: {}]
  %s10 = inlined_call_operand.vmem [shape: f32[1,128], index: 10, kind: input, shape index: {}]
  %s11 = inlined_call_operand.vmem [shape: f32[32,128], index: 11, kind: output, shape index: {}]
  %s12 = sld [smem:[#allocation0]]
  $region54: #{resnet_forward.7} parent=0
    _
  %s14 = ssub.s32 1, %s12
  %s15 = scalar_select 0, %s14, %s12
  // Predicated region
  $region2: #{resnet_forward.7} parent=0 // pred_check
    _
  $region3: #{resnet_forward.7} parent=0 // pred_check_branch
    %17 = sbr.rel (0) target = $region5
  $region4: #{resnet_forward.7} parent=0 // pred_region
    _
  $region5: #{resnet_forward.7} parent=0 // pred_fallthru
    _
  // Predicated region
  $region6: #{resnet_forward.7} parent=0 // pred_check
    _
  $region7: #{resnet_forward.7} parent=0 // pred_check_branch
    %19 = sbr.rel (0) target = $region9
  $region8: #{resnet_forward.7} parent=0 // pred_region
    _
  $region9: #{resnet_forward.7} parent=0 // pred_fallthru
    _
  // Predicated region
  $region10: #{resnet_forward.7} parent=0 // pred_check
    _
  $region11: #{resnet_forward.7} parent=0 // pred_check_branch
    %21 = sbr.rel (0) target = $region13
  $region12: #{resnet_forward.7} parent=0 // pred_region
    _
  $region13: #{resnet_forward.7} parent=0 // pred_fallthru
    _
  // Predicated region
  $region14: #{resnet_forward.7} parent=0 // pred_check
    _
  $region15: #{resnet_forward.7} parent=0 // pred_check_branch
    %23 = sbr.rel (0) target = $region17
  $region16: #{resnet_forward.7} parent=0 // pred_region
    _
  $region17: #{resnet_forward.7} parent=0 // pred_fallthru
    _
  // Predicated region
  $region18: #{resnet_forward.7} parent=0 // pred_check
    _
  $region19: #{resnet_forward.7} parent=0 // pred_check_branch
    %25 = sbr.rel (0) target = $region21
  $region20: #{resnet_forward.7} parent=0 // pred_region
    _
  $region21: #{resnet_forward.7} parent=0 // pred_fallthru
    _
  // Predicated region
  $region22: #{resnet_forward.7} parent=0 // pred_check
    _
  $region23: #{resnet_forward.7} parent=0 // pred_check_branch
    %27 = sbr.rel (0) target = $region25
  $region24: #{resnet_forward.7} parent=0 // pred_region
    _
  $region25: #{resnet_forward.7} parent=0 // pred_fallthru
    _
  // Predicated region
  $region26: #{resnet_forward.7} parent=0 // pred_check
    _
  $region27: #{resnet_forward.7} parent=0 // pred_check_branch
    %29 = sbr.rel (0) target = $region29
  $region28: #{resnet_forward.7} parent=0 // pred_region
    _
  $region29: #{resnet_forward.7} parent=0 // pred_fallthru
    _
  // Predicated region
  $region30: #{resnet_forward.7} parent=0 // pred_check
    _
  $region31: #{resnet_forward.7} parent=0 // pred_check_branch
    %31 = sbr.rel (0) target = $region33
  $region32: #{resnet_forward.7} parent=0 // pred_region
    _
  $region33: #{resnet_forward.7} parent=0 // pred_fallthru
    _
  // Predicated region
  $region34: #{resnet_forward.7} parent=0 // pred_check
    _
  $region35: #{resnet_forward.7} parent=0 // pred_check_branch
    %33 = sbr.rel (0) target = $region37
  $region36: #{resnet_forward.7} parent=0 // pred_region
    _
  $region37: #{resnet_forward.7} parent=0 // pred_fallthru
    _
  // Predicated region
  $region38: #{resnet_forward.7} parent=0 // pred_check
    _
  $region39: #{resnet_forward.7} parent=0 // pred_check_branch
    %35 = sbr.rel (0) target = $region41
  $region40: #{resnet_forward.7} parent=0 // pred_region
    _
  $region41: #{resnet_forward.7} parent=0 // pred_fallthru
    _
  // Predicated region
  $region42: #{resnet_forward.7} parent=0 // pred_check
    _
  $region43: #{resnet_forward.7} parent=0 // pred_check_branch
    %37 = sbr.rel (0) target = $region45
  $region44: #{resnet_forward.7} parent=0 // pred_region
    _
  $region45: #{resnet_forward.7} parent=0 // pred_fallthru
    _
  %v38 = vld [vmem:[%s0] sm:$0xff]
  %v39 = vld [vmem:[%s0 + $0x8] sm:$0xff]
  %v40 = vld [vmem:[%s0 + $0x10] sm:$0xff]
  %v41 = vld [vmem:[%s0 + $0x18] sm:$0xff]
  %v42 = vld [vmem:[%s1] sm:$0xff]
  %v43 = vld [vmem:[%s1 + $0x8] sm:$0xff]
  %v44 = vld [vmem:[%s1 + $0x10] sm:$0xff]
  %v45 = vld [vmem:[%s1 + $0x18] sm:$0xff]
  %v46 = vld [vmem:[%s1 + $0x20] sm:$0xff]
  %v47 = vld [vmem:[%s1 + $0x28] sm:$0xff]
  %v48 = vld [vmem:[%s1 + $0x30] sm:$0xff]
  %v49 = vld [vmem:[%s1 + $0x38] sm:$0xff]
  %v50 = vld [vmem:[%s1 + $0x40] sm:$0xff]
  %v51 = vld [vmem:[%s1 + $0x48] sm:$0xff]
  %v52 = vld [vmem:[%s1 + $0x50] sm:$0xff]
  %v53 = vld [vmem:[%s1 + $0x58] sm:$0xff]
  %v54 = vld [vmem:[%s1 + $0x60] sm:$0xff]
  %v55 = vld [vmem:[%s1 + $0x68] sm:$0xff]
  %v56 = vld [vmem:[%s1 + $0x70] sm:$0xff]
  %v57 = vld [vmem:[%s1 + $0x78] sm:$0xff]
  %v58 = vld [vmem:[%s2] sm:$0x1]
  %v60 = vlaneseq
  %v61 = vshrl.u32 %v60, 7
  %v62 = vsub.s32 0, %v61
  %v63 = vrot.slane %v58, %v62
  %65 = vmatprep.subr.mxu0 0.0
  %66 = vmatpush1.msra.mxu0 %v42
  %67 = vmatprep.subr.mxu0 0.0
  %68 = vmatpush1.msra.mxu0 %v43
  %69 = vmatprep.subr.mxu0 0.0
  %70 = vmatpush1.msra.mxu0 %v44
  %71 = vmatprep.subr.mxu0 0.0
  %72 = vmatpush1.msra.mxu0 %v45
  %73 = vmatprep.subr.mxu0 0.0
  %74 = vmatpush1.msra.mxu0 %v46
  %75 = vmatprep.subr.mxu0 0.0
  %76 = vmatpush1.msra.mxu0 %v47
  %77 = vmatprep.subr.mxu0 0.0
  %78 = vmatpush1.msra.mxu0 %v48
  %79 = vmatprep.subr.mxu0 0.0
  %80 = vmatpush1.msra.mxu0 %v49
  %81 = vmatprep.subr.mxu0 0.0
  %82 = vmatpush1.msra.mxu0 %v50
  %83 = vmatprep.subr.mxu0 0.0
  %84 = vmatpush1.msra.mxu0 %v51
  %85 = vmatprep.subr.mxu0 0.0
  %86 = vmatpush1.msra.mxu0 %v52
  %87 = vmatprep.subr.mxu0 0.0
  %88 = vmatpush1.msra.mxu0 %v53
  %89 = vmatprep.subr.mxu0 0.0
  %90 = vmatpush1.msra.mxu0 %v54
  %91 = vmatprep.subr.mxu0 0.0
  %92 = vmatpush1.msra.mxu0 %v55
  %93 = vmatprep.subr.mxu0 0.0
  %94 = vmatpush1.msra.mxu0 %v56
  %95 = vmatprep.subr.mxu0 0.0
  %96 = vmatpush1.msra.mxu0 %v57
  %97 = vmatprep.subr.mxu0 0.0
  %98 = vmatpush1.msra.mxu0 0.0
  %99 = vmatprep.subr.mxu0 0.0
  %100 = vmatpush1.msra.mxu0 0.0
  %101 = vmatprep.subr.mxu0 0.0
  %102 = vmatpush1.msra.mxu0 0.0
  %103 = vmatprep.subr.mxu0 0.0
  %104 = vmatpush1.msra.mxu0 0.0
  %105 = vmatprep.subr.mxu0 0.0
  %106 = vmatpush1.msra.mxu0 0.0
  %107 = vmatprep.subr.mxu0 0.0
  %108 = vmatpush1.msra.mxu0 0.0
  %109 = vmatprep.subr.mxu0 0.0
  %110 = vmatpush1.msra.mxu0 0.0
  %111 = vmatprep.subr.mxu0 0.0
  %112 = vmatpush1.msra.mxu0 0.0
  %113 = vmatprep.subr.mxu0 0.0
  %114 = vmatpush1.msra.mxu0 0.0
  %115 = vmatprep.subr.mxu0 0.0
  %116 = vmatpush1.msra.mxu0 0.0
  %117 = vmatprep.subr.mxu0 0.0
  %118 = vmatpush1.msra.mxu0 0.0
  %119 = vmatprep.subr.mxu0 0.0
  %120 = vmatpush1.msra.mxu0 0.0
  %121 = vmatprep.subr.mxu0 0.0
  %122 = vmatpush1.msra.mxu0 0.0
  %123 = vmatprep.subr.mxu0 0.0
  %124 = vmatpush1.msra.mxu0 0.0
  %125 = vmatprep.subr.mxu0 0.0
  %126 = vmatpush1.msra.mxu0 0.0
  %127 = vmatprep.subr.mxu0 0.0
  %128 = vmatpush1.msra.mxu0 0.0
  %129 = vmatprep.mubr.f32.mxu0 0.0
  %130 = vmatmul.mubr.f32.gmra.mrb[0].mxu0 %v38
  %v131 = vpop.f32.mrb[0].mxu0
  %v132 = vadd.f32 %v63, %v131
  %v133 = vpop.f32.mrb[0].mxu0
  %134 = vmatprep.mubr.f32.mxu0 0.0
  %135 = vmatmul.mubr.f32.gmra.mrb[0].mxu0 %v39
  %v136 = vpop.f32.mrb[0].mxu0
  %v137 = vadd.f32 %v63, %v136
  %v138 = vpop.f32.mrb[0].mxu0
  %139 = vmatprep.mubr.f32.mxu0 0.0
  %140 = vmatmul.mubr.f32.gmra.mrb[0].mxu0 %v40
  %v141 = vpop.f32.mrb[0].mxu0
  %v142 = vadd.f32 %v63, %v141
  %v143 = vpop.f32.mrb[0].mxu0
  %144 = vmatprep.mubr.f32.mxu0 0.0
  %145 = vmatmul.mubr.f32.gmra.mrb[0].mxu0 %v41
  %v146 = vpop.f32.mrb[0].mxu0
  %v147 = vadd.f32 %v63, %v146
  %v148 = vpop.f32.mrb[0].mxu0
  %149 = vdwg.mxu0
  %v150 = vmax.f32 %v132, 0.0
  %v151 = vmax.f32 %v137, 0.0
  %v152 = vmax.f32 %v142, 0.0
  %v153 = vmax.f32 %v147, 0.0
  %v154 = vld [vmem:[%s3] sm:$0x1]
  %v156 = vlaneseq
  %v157 = vshrl.u32 %v156, 7
  %v158 = vsub.s32 0, %v157
  %v159 = vrot.slane %v154, %v158
  %v161 = vmul.f32 %v150, %v159
  %v162 = vmul.f32 %v151, %v159
  %v163 = vmul.f32 %v152, %v159
  %v164 = vmul.f32 %v153, %v159
  %v165 = vld [vmem:[%s4] sm:$0x1]
  %v167 = vlaneseq
  %v168 = vshrl.u32 %v167, 7
  %v169 = vsub.s32 0, %v168
  %v170 = vrot.slane %v165, %v169
  %v172 = vadd.f32 %v161, %v170
  %v173 = vadd.f32 %v162, %v170
  %v174 = vadd.f32 %v163, %v170
  %v175 = vadd.f32 %v164, %v170
  %v176 = vld [vmem:[%s5] sm:$0xff]
  %v177 = vld [vmem:[%s5 + $0x8] sm:$0xff]
  %v178 = vld [vmem:[%s5 + $0x10] sm:$0xff]
  %v179 = vld [vmem:[%s5 + $0x18] sm:$0xff]
  %vm180 = vcmask 261120
  %v182 = vsel %vm180, %v176, 0
  %v185 = vsel %vm180, %v177, 0
  %v188 = vsel %vm180, %v178, 0
  %v191 = vsel %vm180, %v179, 0
  %193 = vmatprep.subr.mxu0 0.0
  %194 = vmatpush1.msra.mxu0 %v172
  %195 = vmatprep.subr.mxu0 0.0
  %196 = vmatpush1.msra.mxu0 %v173
  %197 = vmatprep.subr.mxu0 0.0
  %198 = vmatpush1.msra.mxu0 %v174
  %199 = vmatprep.subr.mxu0 0.0
  %200 = vmatpush1.msra.mxu0 %v175
  %201 = vmatprep.subr.mxu0 0.0
  %202 = vmatpush1.msra.mxu0 0.0
  %203 = vmatprep.subr.mxu0 0.0
  %204 = vmatpush1.msra.mxu0 0.0
  %205 = vmatprep.subr.mxu0 0.0
  %206 = vmatpush1.msra.mxu0 0.0
  %207 = vmatprep.subr.mxu0 0.0
  %208 = vmatpush1.msra.mxu0 0.0
  %209 = vmatprep.subr.mxu0 0.0
  %210 = vmatpush1.msra.mxu0 0.0
  %211 = vmatprep.subr.mxu0 0.0
  %212 = vmatpush1.msra.mxu0 0.0
  %213 = vmatprep.subr.mxu0 0.0
  %214 = vmatpush1.msra.mxu0 0.0
  %215 = vmatprep.subr.mxu0 0.0
  %216 = vmatpush1.msra.mxu0 0.0
  %217 = vmatprep.subr.mxu0 0.0
  %218 = vmatpush1.msra.mxu0 0.0
  %219 = vmatprep.subr.mxu0 0.0
  %220 = vmatpush1.msra.mxu0 0.0
  %221 = vmatprep.subr.mxu0 0.0
  %222 = vmatpush1.msra.mxu0 0.0
  %223 = vmatprep.subr.mxu0 0.0
  %224 = vmatpush1.msra.mxu0 0.0
  %225 = vmatprep.subr.mxu0 0.0
  %226 = vmatpush1.msra.mxu0 0.0
  %227 = vmatprep.subr.mxu0 0.0
  %228 = vmatpush1.msra.mxu0 0.0
  %229 = vmatprep.subr.mxu0 0.0
  %230 = vmatpush1.msra.mxu0 0.0
  %231 = vmatprep.subr.mxu0 0.0
  %232 = vmatpush1.msra.mxu0 0.0
  %233 = vmatprep.subr.mxu0 0.0
  %234 = vmatpush1.msra.mxu0 0.0
  %235 = vmatprep.subr.mxu0 0.0
  %236 = vmatpush1.msra.mxu0 0.0
  %237 = vmatprep.subr.mxu0 0.0
  %238 = vmatpush1.msra.mxu0 0.0
  %239 = vmatprep.subr.mxu0 0.0
  %240 = vmatpush1.msra.mxu0 0.0
  %241 = vmatprep.subr.mxu0 0.0
  %242 = vmatpush1.msra.mxu0 0.0
  %243 = vmatprep.subr.mxu0 0.0
  %244 = vmatpush1.msra.mxu0 0.0
  %245 = vmatprep.subr.mxu0 0.0
  %246 = vmatpush1.msra.mxu0 0.0
  %247 = vmatprep.subr.mxu0 0.0
  %248 = vmatpush1.msra.mxu0 0.0
  %249 = vmatprep.subr.mxu0 0.0
  %250 = vmatpush1.msra.mxu0 0.0
  %251 = vmatprep.subr.mxu0 0.0
  %252 = vmatpush1.msra.mxu0 0.0
  %253 = vmatprep.subr.mxu0 0.0
  %254 = vmatpush1.msra.mxu0 0.0
  %255 = vmatprep.subr.mxu0 0.0
  %256 = vmatpush1.msra.mxu0 0.0
  %257 = vmatprep.mubr.f32.mxu0 0.0
  %258 = vmatmul.mubr.f32.gmra.mrb[0].mxu0 %v182
  %v259 = vpop.f32.mrb[0].mxu0
  %v260 = vadd.f32 0.0, %v259
  %v261 = vpop.f32.mrb[0].mxu0
  %262 = vmatprep.mubr.f32.mxu0 0.0
  %263 = vmatmul.mubr.f32.gmra.mrb[0].mxu0 %v185
  %v264 = vpop.f32.mrb[0].mxu0
  %v265 = vadd.f32 0.0, %v264
  %v266 = vpop.f32.mrb[0].mxu0
  %267 = vmatprep.mubr.f32.mxu0 0.0
  %268 = vmatmul.mubr.f32.gmra.mrb[0].mxu0 %v188
  %v269 = vpop.f32.mrb[0].mxu0
  %v270 = vadd.f32 0.0, %v269
  %v271 = vpop.f32.mrb[0].mxu0
  %272 = vmatprep.mubr.f32.mxu0 0.0
  %273 = vmatmul.mubr.f32.gmra.mrb[0].mxu0 %v191
  %v274 = vpop.f32.mrb[0].mxu0
  %v275 = vadd.f32 0.0, %v274
  %v276 = vpop.f32.mrb[0].mxu0
  %277 = vdwg.mxu0
  %v278 = vld [vmem:[%s6] sm:$0xff]
  %v279 = vld [vmem:[%s6 + $0x8] sm:$0xff]
  %s280 = scalar_lea.vmem %s5, 32
  %v281 = vld [vmem:[%s280] sm:$0xff]
  %v282 = vld [vmem:[%s280 + $0x8] sm:$0xff]
  %v283 = vld [vmem:[%s280 + $0x10] sm:$0xff]
  %v284 = vld [vmem:[%s280 + $0x18] sm:$0xff]
  %v286 = vsel %vm180, %v281, 0
  %v289 = vsel %vm180, %v282, 0
  %v292 = vsel %vm180, %v283, 0
  %v295 = vsel %vm180, %v284, 0
  %297 = vmatprep.subr.mxu0 0.0
  %298 = vmatpush1.msra.mxu0 %v172
  %299 = vmatprep.subr.mxu0 0.0
  %300 = vmatpush1.msra.mxu0 %v173
  %301 = vmatprep.subr.mxu0 0.0
  %302 = vmatpush1.msra.mxu0 %v174
  %303 = vmatprep.subr.mxu0 0.0
  %304 = vmatpush1.msra.mxu0 %v175
  %305 = vmatprep.subr.mxu0 0.0
  %306 = vmatpush1.msra.mxu0 0.0
  %307 = vmatprep.subr.mxu0 0.0
  %308 = vmatpush1.msra.mxu0 0.0
  %309 = vmatprep.subr.mxu0 0.0
  %310 = vmatpush1.msra.mxu0 0.0
  %311 = vmatprep.subr.mxu0 0.0
  %312 = vmatpush1.msra.mxu0 0.0
  %313 = vmatprep.subr.mxu0 0.0
  %314 = vmatpush1.msra.mxu0 0.0
  %315 = vmatprep.subr.mxu0 0.0
  %316 = vmatpush1.msra.mxu0 0.0
  %317 = vmatprep.subr.mxu0 0.0
  %318 = vmatpush1.msra.mxu0 0.0
  %319 = vmatprep.subr.mxu0 0.0
  %320 = vmatpush1.msra.mxu0 0.0
  %321 = vmatprep.subr.mxu0 0.0
  %322 = vmatpush1.msra.mxu0 0.0
  %323 = vmatprep.subr.mxu0 0.0
  %324 = vmatpush1.msra.mxu0 0.0
  %325 = vmatprep.subr.mxu0 0.0
  %326 = vmatpush1.msra.mxu0 0.0
  %327 = vmatprep.subr.mxu0 0.0
  %328 = vmatpush1.msra.mxu0 0.0
  %329 = vmatprep.subr.mxu0 0.0
  %330 = vmatpush1.msra.mxu0 0.0
  %331 = vmatprep.subr.mxu0 0.0
  %332 = vmatpush1.msra.mxu0 0.0
  %333 = vmatprep.subr.mxu0 0.0
  %334 = vmatpush1.msra.mxu0 0.0
  %335 = vmatprep.subr.mxu0 0.0
  %336 = vmatpush1.msra.mxu0 0.0
  %337 = vmatprep.subr.mxu0 0.0
  %338 = vmatpush1.msra.mxu0 0.0
  %339 = vmatprep.subr.mxu0 0.0
  %340 = vmatpush1.msra.mxu0 0.0
  %341 = vmatprep.subr.mxu0 0.0
  %342 = vmatpush1.msra.mxu0 0.0
  %343 = vmatprep.subr.mxu0 0.0
  %344 = vmatpush1.msra.mxu0 0.0
  %345 = vmatprep.subr.mxu0 0.0
  %346 = vmatpush1.msra.mxu0 0.0
  %347 = vmatprep.subr.mxu0 0.0
  %348 = vmatpush1.msra.mxu0 0.0
  %349 = vmatprep.subr.mxu0 0.0
  %350 = vmatpush1.msra.mxu0 0.0
  %351 = vmatprep.subr.mxu0 0.0
  %352 = vmatpush1.msra.mxu0 0.0
  %353 = vmatprep.subr.mxu0 0.0
  %354 = vmatpush1.msra.mxu0 0.0
  %355 = vmatprep.subr.mxu0 0.0
  %356 = vmatpush1.msra.mxu0 0.0
  %357 = vmatprep.subr.mxu0 0.0
  %358 = vmatpush1.msra.mxu0 0.0
  %359 = vmatprep.subr.mxu0 0.0
  %360 = vmatpush1.msra.mxu0 0.0
  %361 = vmatprep.mubr.f32.mxu0 0.0
  %362 = vmatmul.mubr.f32.gmra.mrb[0].mxu0 %v286
  %v363 = vpop.f32.mrb[0].mxu0
  %v364 = vadd.f32 0.0, %v363
  %v365 = vpop.f32.mrb[0].mxu0
  %366 = vmatprep.mubr.f32.mxu0 0.0
  %367 = vmatmul.mubr.f32.gmra.mrb[0].mxu0 %v289
  %v368 = vpop.f32.mrb[0].mxu0
  %v369 = vadd.f32 0.0, %v368
  %v370 = vpop.f32.mrb[0].mxu0
  %371 = vmatprep.mubr.f32.mxu0 0.0
  %372 = vmatmul.mubr.f32.gmra.mrb[0].mxu0 %v292
  %v373 = vpop.f32.mrb[0].mxu0
  %v374 = vadd.f32 0.0, %v373
  %v375 = vpop.f32.mrb[0].mxu0
  %376 = vmatprep.mubr.f32.mxu0 0.0
  %377 = vmatmul.mubr.f32.gmra.mrb[0].mxu0 %v295
  %v378 = vpop.f32.mrb[0].mxu0
  %v379 = vadd.f32 0.0, %v378
  %v380 = vpop.f32.mrb[0].mxu0
  %381 = vdwg.mxu0
  %s382 = scalar_lea.vmem %s6, 16
  %v383 = vld [vmem:[%s382] sm:$0xff]
  %v384 = vld [vmem:[%s382 + $0x8] sm:$0xff]
  %vm385 = vcmask 130048
  %v387 = vsel %vm385, %v364, 0
  %v390 = vsel %vm385, %v369, 0
  %v393 = vsel %vm385, %v374, 0
  %v396 = vsel %vm385, %v379, 0
  %398 = vmatprep.subr.mxu0 0.0
  %399 = vmatpush1.msra.mxu0 %v383
  %400 = vmatprep.subr.mxu0 0.0
  %401 = vmatpush1.msra.mxu0 %v384
  %402 = vmatprep.subr.mxu0 0.0
  %403 = vmatpush1.msra.mxu0 0.0
  %404 = vmatprep.subr.mxu0 0.0
  %405 = vmatpush1.msra.mxu0 0.0
  %406 = vmatprep.subr.mxu0 0.0
  %407 = vmatpush1.msra.mxu0 0.0
  %408 = vmatprep.subr.mxu0 0.0
  %409 = vmatpush1.msra.mxu0 0.0
  %410 = vmatprep.subr.mxu0 0.0
  %411 = vmatpush1.msra.mxu0 0.0
  %412 = vmatprep.subr.mxu0 0.0
  %413 = vmatpush1.msra.mxu0 0.0
  %414 = vmatprep.subr.mxu0 0.0
  %415 = vmatpush1.msra.mxu0 0.0
  %416 = vmatprep.subr.mxu0 0.0
  %417 = vmatpush1.msra.mxu0 0.0
  %418 = vmatprep.subr.mxu0 0.0
  %419 = vmatpush1.msra.mxu0 0.0
  %420 = vmatprep.subr.mxu0 0.0
  %421 = vmatpush1.msra.mxu0 0.0
  %422 = vmatprep.subr.mxu0 0.0
  %423 = vmatpush1.msra.mxu0 0.0
  %424 = vmatprep.subr.mxu0 0.0
  %425 = vmatpush1.msra.mxu0 0.0
  %426 = vmatprep.subr.mxu0 0.0
  %427 = vmatpush1.msra.mxu0 0.0
  %428 = vmatprep.subr.mxu0 0.0
  %429 = vmatpush1.msra.mxu0 0.0
  %430 = vmatprep.subr.mxu0 0.0
  %431 = vmatpush1.msra.mxu0 0.0
  %432 = vmatprep.subr.mxu0 0.0
  %433 = vmatpush1.msra.mxu0 0.0
  %434 = vmatprep.subr.mxu0 0.0
  %435 = vmatpush1.msra.mxu0 0.0
  %436 = vmatprep.subr.mxu0 0.0
  %437 = vmatpush1.msra.mxu0 0.0
  %438 = vmatprep.subr.mxu0 0.0
  %439 = vmatpush1.msra.mxu0 0.0
  %440 = vmatprep.subr.mxu0 0.0
  %441 = vmatpush1.msra.mxu0 0.0
  %442 = vmatprep.subr.mxu0 0.0
  %443 = vmatpush1.msra.mxu0 0.0
  %444 = vmatprep.subr.mxu0 0.0
  %445 = vmatpush1.msra.mxu0 0.0
  %446 = vmatprep.subr.mxu0 0.0
  %447 = vmatpush1.msra.mxu0 0.0
  %448 = vmatprep.subr.mxu0 0.0
  %449 = vmatpush1.msra.mxu0 0.0
  %450 = vmatprep.subr.mxu0 0.0
  %451 = vmatpush1.msra.mxu0 0.0
  %452 = vmatprep.subr.mxu0 0.0
  %453 = vmatpush1.msra.mxu0 0.0
  %454 = vmatprep.subr.mxu0 0.0
  %455 = vmatpush1.msra.mxu0 0.0
  %456 = vmatprep.subr.mxu0 0.0
  %457 = vmatpush1.msra.mxu0 0.0
  %458 = vmatprep.subr.mxu0 0.0
  %459 = vmatpush1.msra.mxu0 0.0
  %460 = vmatprep.subr.mxu0 0.0
  %461 = vmatpush1.msra.mxu0 0.0
  %462 = vmatprep.mubr.f32.mxu0 0.0
  %463 = vmatmul.mubr.f32.gmra.mrb[0].mxu0 %v387
  %v464 = vpop.f32.mrb[0].mxu0
  %v465 = vadd.f32 0.0, %v464
  %v466 = vpop.f32.mrb[0].mxu0
  %467 = vmatprep.mubr.f32.mxu0 0.0
  %468 = vmatmul.mubr.f32.gmra.mrb[0].mxu0 %v390
  %v469 = vpop.f32.mrb[0].mxu0
  %v470 = vadd.f32 0.0, %v469
  %v471 = vpop.f32.mrb[0].mxu0
  %472 = vmatprep.mubr.f32.mxu0 0.0
  %473 = vmatmul.mubr.f32.gmra.mrb[0].mxu0 %v393
  %v474 = vpop.f32.mrb[0].mxu0
  %v475 = vadd.f32 0.0, %v474
  %v476 = vpop.f32.mrb[0].mxu0
  %477 = vmatprep.mubr.f32.mxu0 0.0
  %478 = vmatmul.mubr.f32.gmra.mrb[0].mxu0 %v396
  %v479 = vpop.f32.mrb[0].mxu0
  %v480 = vadd.f32 0.0, %v479
  %v481 = vpop.f32.mrb[0].mxu0
  %482 = vdwg.mxu0
  %v484 = vsel %vm385, %v260, 0
  %v487 = vsel %vm385, %v265, 0
  %v490 = vsel %vm385, %v270, 0
  %v493 = vsel %vm385, %v275, 0
  %495 = vmatprep.subr.mxu0 0.0
  %496 = vmatpush1.msra.mxu0 %v278
  %497 = vmatprep.subr.mxu0 0.0
  %498 = vmatpush1.msra.mxu0 %v279
  %499 = vmatprep.subr.mxu0 0.0
  %500 = vmatpush1.msra.mxu0 0.0
  %501 = vmatprep.subr.mxu0 0.0
  %502 = vmatpush1.msra.mxu0 0.0
  %503 = vmatprep.subr.mxu0 0.0
  %504 = vmatpush1.msra.mxu0 0.0
  %505 = vmatprep.subr.mxu0 0.0
  %506 = vmatpush1.msra.mxu0 0.0
  %507 = vmatprep.subr.mxu0 0.0
  %508 = vmatpush1.msra.mxu0 0.0
  %509 = vmatprep.subr.mxu0 0.0
  %510 = vmatpush1.msra.mxu0 0.0
  %511 = vmatprep.subr.mxu0 0.0
  %512 = vmatpush1.msra.mxu0 0.0
  %513 = vmatprep.subr.mxu0 0.0
  %514 = vmatpush1.msra.mxu0 0.0
  %515 = vmatprep.subr.mxu0 0.0
  %516 = vmatpush1.msra.mxu0 0.0
  %517 = vmatprep.subr.mxu0 0.0
  %518 = vmatpush1.msra.mxu0 0.0
  %519 = vmatprep.subr.mxu0 0.0
  %520 = vmatpush1.msra.mxu0 0.0
  %521 = vmatprep.subr.mxu0 0.0
  %522 = vmatpush1.msra.mxu0 0.0
  %523 = vmatprep.subr.mxu0 0.0
  %524 = vmatpush1.msra.mxu0 0.0
  %525 = vmatprep.subr.mxu0 0.0
  %526 = vmatpush1.msra.mxu0 0.0
  %527 = vmatprep.subr.mxu0 0.0
  %528 = vmatpush1.msra.mxu0 0.0
  %529 = vmatprep.subr.mxu0 0.0
  %530 = vmatpush1.msra.mxu0 0.0
  %531 = vmatprep.subr.mxu0 0.0
  %532 = vmatpush1.msra.mxu0 0.0
  %533 = vmatprep.subr.mxu0 0.0
  %534 = vmatpush1.msra.mxu0 0.0
  %535 = vmatprep.subr.mxu0 0.0
  %536 = vmatpush1.msra.mxu0 0.0
  %537 = vmatprep.subr.mxu0 0.0
  %538 = vmatpush1.msra.mxu0 0.0
  %539 = vmatprep.subr.mxu0 0.0
  %540 = vmatpush1.msra.mxu0 0.0
  %541 = vmatprep.subr.mxu0 0.0
  %542 = vmatpush1.msra.mxu0 0.0
  %543 = vmatprep.subr.mxu0 0.0
  %544 = vmatpush1.msra.mxu0 0.0
  %545 = vmatprep.subr.mxu0 0.0
  %546 = vmatpush1.msra.mxu0 0.0
  %547 = vmatprep.subr.mxu0 0.0
  %548 = vmatpush1.msra.mxu0 0.0
  %549 = vmatprep.subr.mxu0 0.0
  %550 = vmatpush1.msra.mxu0 0.0
  %551 = vmatprep.subr.mxu0 0.0
  %552 = vmatpush1.msra.mxu0 0.0
  %553 = vmatprep.subr.mxu0 0.0
  %554 = vmatpush1.msra.mxu0 0.0
  %555 = vmatprep.subr.mxu0 0.0
  %556 = vmatpush1.msra.mxu0 0.0
  %557 = vmatprep.subr.mxu0 0.0
  %558 = vmatpush1.msra.mxu0 0.0
  %559 = vmatprep.mubr.f32.mxu0 0.0
  %560 = vmatmul.mubr.f32.gmra.mrb[0].mxu0 %v484
  %v561 = vpop.f32.mrb[0].mxu0
  %v562 = vadd.f32 %v465, %v561
  %v563 = vpop.f32.mrb[0].mxu0
  %564 = vmatprep.mubr.f32.mxu0 0.0
  %565 = vmatmul.mubr.f32.gmra.mrb[0].mxu0 %v487
  %v566 = vpop.f32.mrb[0].mxu0
  %v567 = vadd.f32 %v470, %v566
  %v568 = vpop.f32.mrb[0].mxu0
  %569 = vmatprep.mubr.f32.mxu0 0.0
  %570 = vmatmul.mubr.f32.gmra.mrb[0].mxu0 %v490
  %v571 = vpop.f32.mrb[0].mxu0
  %v572 = vadd.f32 %v475, %v571
  %v573 = vpop.f32.mrb[0].mxu0
  %574 = vmatprep.mubr.f32.mxu0 0.0
  %575 = vmatmul.mubr.f32.gmra.mrb[0].mxu0 %v493
  %v576 = vpop.f32.mrb[0].mxu0
  %v577 = vadd.f32 %v480, %v576
  %v578 = vpop.f32.mrb[0].mxu0
  %579 = vdwg.mxu0
  %s580 = scalar_lea.vmem %s5, 64
  %v581 = vld [vmem:[%s580] sm:$0xff]
  %v582 = vld [vmem:[%s580 + $0x8] sm:$0xff]
  %v583 = vld [vmem:[%s580 + $0x10] sm:$0xff]
  %v584 = vld [vmem:[%s580 + $0x18] sm:$0xff]
  %v586 = vsel %vm180, %v581, 0
  %v589 = vsel %vm180, %v582, 0
  %v592 = vsel %vm180, %v583, 0
  %v595 = vsel %vm180, %v584, 0
  %597 = vmatprep.subr.mxu0 0.0
  %598 = vmatpush1.msra.mxu0 %v172
  %599 = vmatprep.subr.mxu0 0.0
  %600 = vmatpush1.msra.mxu0 %v173
  %601 = vmatprep.subr.mxu0 0.0
  %602 = vmatpush1.msra.mxu0 %v174
  %603 = vmatprep.subr.mxu0 0.0
  %604 = vmatpush1.msra.mxu0 %v175
  %605 = vmatprep.subr.mxu0 0.0
  %606 = vmatpush1.msra.mxu0 0.0
  %607 = vmatprep.subr.mxu0 0.0
  %608 = vmatpush1.msra.mxu0 0.0
  %609 = vmatprep.subr.mxu0 0.0
  %610 = vmatpush1.msra.mxu0 0.0
  %611 = vmatprep.subr.mxu0 0.0
  %612 = vmatpush1.msra.mxu0 0.0
  %613 = vmatprep.subr.mxu0 0.0
  %614 = vmatpush1.msra.mxu0 0.0
  %615 = vmatprep.subr.mxu0 0.0
  %616 = vmatpush1.msra.mxu0 0.0
  %617 = vmatprep.subr.mxu0 0.0
  %618 = vmatpush1.msra.mxu0 0.0
  %619 = vmatprep.subr.mxu0 0.0
  %620 = vmatpush1.msra.mxu0 0.0
  %621 = vmatprep.subr.mxu0 0.0
  %622 = vmatpush1.msra.mxu0 0.0
  %623 = vmatprep.subr.mxu0 0.0
  %624 = vmatpush1.msra.mxu0 0.0
  %625 = vmatprep.subr.mxu0 0.0
  %626 = vmatpush1.msra.mxu0 0.0
  %627 = vmatprep.subr.mxu0 0.0
  %628 = vmatpush1.msra.mxu0 0.0
  %629 = vmatprep.subr.mxu0 0.0
  %630 = vmatpush1.msra.mxu0 0.0
  %631 = vmatprep.subr.mxu0 0.0
  %632 = vmatpush1.msra.mxu0 0.0
  %633 = vmatprep.subr.mxu0 0.0
  %634 = vmatpush1.msra.mxu0 0.0
  %635 = vmatprep.subr.mxu0 0.0
  %636 = vmatpush1.msra.mxu0 0.0
  %637 = vmatprep.subr.mxu0 0.0
  %638 = vmatpush1.msra.mxu0 0.0
  %639 = vmatprep.subr.mxu0 0.0
  %640 = vmatpush1.msra.mxu0 0.0
  %641 = vmatprep.subr.mxu0 0.0
  %642 = vmatpush1.msra.mxu0 0.0
  %643 = vmatprep.subr.mxu0 0.0
  %644 = vmatpush1.msra.mxu0 0.0
  %645 = vmatprep.subr.mxu0 0.0
  %646 = vmatpush1.msra.mxu0 0.0
  %647 = vmatprep.subr.mxu0 0.0
  %648 = vmatpush1.msra.mxu0 0.0
  %649 = vmatprep.subr.mxu0 0.0
  %650 = vmatpush1.msra.mxu0 0.0
  %651 = vmatprep.subr.mxu0 0.0
  %652 = vmatpush1.msra.mxu0 0.0
  %653 = vmatprep.subr.mxu0 0.0
  %654 = vmatpush1.msra.mxu0 0.0
  %655 = vmatprep.subr.mxu0 0.0
  %656 = vmatpush1.msra.mxu0 0.0
  %657 = vmatprep.subr.mxu0 0.0
  %658 = vmatpush1.msra.mxu0 0.0
  %659 = vmatprep.subr.mxu0 0.0
  %660 = vmatpush1.msra.mxu0 0.0
  %661 = vmatprep.mubr.f32.mxu0 0.0
  %662 = vmatmul.mubr.f32.gmra.mrb[0].mxu0 %v586
  %v663 = vpop.f32.mrb[0].mxu0
  %v664 = vadd.f32 0.0, %v663
  %v665 = vpop.f32.mrb[0].mxu0
  %666 = vmatprep.mubr.f32.mxu0 0.0
  %667 = vmatmul.mubr.f32.gmra.mrb[0].mxu0 %v589
  %v668 = vpop.f32.mrb[0].mxu0
  %v669 = vadd.f32 0.0, %v668
  %v670 = vpop.f32.mrb[0].mxu0
  %671 = vmatprep.mubr.f32.mxu0 0.0
  %672 = vmatmul.mubr.f32.gmra.mrb[0].mxu0 %v592
  %v673 = vpop.f32.mrb[0].mxu0
  %v674 = vadd.f32 0.0, %v673
  %v675 = vpop.f32.mrb[0].mxu0
  %676 = vmatprep.mubr.f32.mxu0 0.0
  %677 = vmatmul.mubr.f32.gmra.mrb[0].mxu0 %v595
  %v678 = vpop.f32.mrb[0].mxu0
  %v679 = vadd.f32 0.0, %v678
  %v680 = vpop.f32.mrb[0].mxu0
  %681 = vdwg.mxu0
  %s682 = scalar_lea.vmem %s6, 32
  %v683 = vld [vmem:[%s682] sm:$0xff]
  %v684 = vld [vmem:[%s682 + $0x8] sm:$0xff]
  %v686 = vsel %vm385, %v664, 0
  %v689 = vsel %vm385, %v669, 0
  %v692 = vsel %vm385, %v674, 0
  %v695 = vsel %vm385, %v679, 0
  %697 = vmatprep.subr.mxu0 0.0
  %698 = vmatpush1.msra.mxu0 %v683
  %699 = vmatprep.subr.mxu0 0.0
  %700 = vmatpush1.msra.mxu0 %v684
  %701 = vmatprep.subr.mxu0 0.0
  %702 = vmatpush1.msra.mxu0 0.0
  %703 = vmatprep.subr.mxu0 0.0
  %704 = vmatpush1.msra.mxu0 0.0
  %705 = vmatprep.subr.mxu0 0.0
  %706 = vmatpush1.msra.mxu0 0.0
  %707 = vmatprep.subr.mxu0 0.0
  %708 = vmatpush1.msra.mxu0 0.0
  %709 = vmatprep.subr.mxu0 0.0
  %710 = vmatpush1.msra.mxu0 0.0
  %711 = vmatprep.subr.mxu0 0.0
  %712 = vmatpush1.msra.mxu0 0.0
  %713 = vmatprep.subr.mxu0 0.0
  %714 = vmatpush1.msra.mxu0 0.0
  %715 = vmatprep.subr.mxu0 0.0
  %716 = vmatpush1.msra.mxu0 0.0
  %717 = vmatprep.subr.mxu0 0.0
  %718 = vmatpush1.msra.mxu0 0.0
  %719 = vmatprep.subr.mxu0 0.0
  %720 = vmatpush1.msra.mxu0 0.0
  %721 = vmatprep.subr.mxu0 0.0
  %722 = vmatpush1.msra.mxu0 0.0
  %723 = vmatprep.subr.mxu0 0.0
  %724 = vmatpush1.msra.mxu0 0.0
  %725 = vmatprep.subr.mxu0 0.0
  %726 = vmatpush1.msra.mxu0 0.0
  %727 = vmatprep.subr.mxu0 0.0
  %728 = vmatpush1.msra.mxu0 0.0
  %729 = vmatprep.subr.mxu0 0.0
  %730 = vmatpush1.msra.mxu0 0.0
  %731 = vmatprep.subr.mxu0 0.0
  %732 = vmatpush1.msra.mxu0 0.0
  %733 = vmatprep.subr.mxu0 0.0
  %734 = vmatpush1.msra.mxu0 0.0
  %735 = vmatprep.subr.mxu0 0.0
  %736 = vmatpush1.msra.mxu0 0.0
  %737 = vmatprep.subr.mxu0 0.0
  %738 = vmatpush1.msra.mxu0 0.0
  %739 = vmatprep.subr.mxu0 0.0
  %740 = vmatpush1.msra.mxu0 0.0
  %741 = vmatprep.subr.mxu0 0.0
  %742 = vmatpush1.msra.mxu0 0.0
  %743 = vmatprep.subr.mxu0 0.0
  %744 = vmatpush1.msra.mxu0 0.0
  %745 = vmatprep.subr.mxu0 0.0
  %746 = vmatpush1.msra.mxu0 0.0
  %747 = vmatprep.subr.mxu0 0.0
  %748 = vmatpush1.msra.mxu0 0.0
  %749 = vmatprep.subr.mxu0 0.0
  %750 = vmatpush1.msra.mxu0 0.0
  %751 = vmatprep.subr.mxu0 0.0
  %752 = vmatpush1.msra.mxu0 0.0
  %753 = vmatprep.subr.mxu0 0.0
  %754 = vmatpush1.msra.mxu0 0.0
  %755 = vmatprep.subr.mxu0 0.0
  %756 = vmatpush1.msra.mxu0 0.0
  %757 = vmatprep.subr.mxu0 0.0
  %758 = vmatpush1.msra.mxu0 0.0
  %759 = vmatprep.subr.mxu0 0.0
  %760 = vmatpush1.msra.mxu0 0.0
  %761 = vmatprep.mubr.f32.mxu0 0.0
  %762 = vmatmul.mubr.f32.gmra.mrb[0].mxu0 %v686
  %v763 = vpop.f32.mrb[0].mxu0
  %v764 = vadd.f32 0.0, %v763
  %v765 = vpop.f32.mrb[0].mxu0
  %766 = vmatprep.mubr.f32.mxu0 0.0
  %767 = vmatmul.mubr.f32.gmra.mrb[0].mxu0 %v689
  %v768 = vpop.f32.mrb[0].mxu0
  %v769 = vadd.f32 0.0, %v768
  %v770 = vpop.f32.mrb[0].mxu0
  %771 = vmatprep.mubr.f32.mxu0 0.0
  %772 = vmatmul.mubr.f32.gmra.mrb[0].mxu0 %v692
  %v773 = vpop.f32.mrb[0].mxu0
  %v774 = vadd.f32 0.0, %v773
  %v775 = vpop.f32.mrb[0].mxu0
  %776 = vmatprep.mubr.f32.mxu0 0.0
  %777 = vmatmul.mubr.f32.gmra.mrb[0].mxu0 %v695
  %v778 = vpop.f32.mrb[0].mxu0
  %v779 = vadd.f32 0.0, %v778
  %v780 = vpop.f32.mrb[0].mxu0
  %781 = vdwg.mxu0
  %v782 = vadd.f32 %v562, %v764
  %v783 = vadd.f32 %v567, %v769
  %v784 = vadd.f32 %v572, %v774
  %v785 = vadd.f32 %v577, %v779
  %s786 = scalar_lea.vmem %s5, 96
  %v787 = vld [vmem:[%s786] sm:$0xff]
  %v788 = vld [vmem:[%s786 + $0x8] sm:$0xff]
  %v789 = vld [vmem:[%s786 + $0x10] sm:$0xff]
  %v790 = vld [vmem:[%s786 + $0x18] sm:$0xff]
  %v792 = vsel %vm180, %v787, 0
  %v795 = vsel %vm180, %v788, 0
  %v798 = vsel %vm180, %v789, 0
  %v801 = vsel %vm180, %v790, 0
  %803 = vmatprep.subr.mxu0 0.0
  %804 = vmatpush1.msra.mxu0 %v172
  %805 = vmatprep.subr.mxu0 0.0
  %806 = vmatpush1.msra.mxu0 %v173
  %807 = vmatprep.subr.mxu0 0.0
  %808 = vmatpush1.msra.mxu0 %v174
  %809 = vmatprep.subr.mxu0 0.0
  %810 = vmatpush1.msra.mxu0 %v175
  %811 = vmatprep.subr.mxu0 0.0
  %812 = vmatpush1.msra.mxu0 0.0
  %813 = vmatprep.subr.mxu0 0.0
  %814 = vmatpush1.msra.mxu0 0.0
  %815 = vmatprep.subr.mxu0 0.0
  %816 = vmatpush1.msra.mxu0 0.0
  %817 = vmatprep.subr.mxu0 0.0
  %818 = vmatpush1.msra.mxu0 0.0
  %819 = vmatprep.subr.mxu0 0.0
  %820 = vmatpush1.msra.mxu0 0.0
  %821 = vmatprep.subr.mxu0 0.0
  %822 = vmatpush1.msra.mxu0 0.0
  %823 = vmatprep.subr.mxu0 0.0
  %824 = vmatpush1.msra.mxu0 0.0
  %825 = vmatprep.subr.mxu0 0.0
  %826 = vmatpush1.msra.mxu0 0.0
  %827 = vmatprep.subr.mxu0 0.0
  %828 = vmatpush1.msra.mxu0 0.0
  %829 = vmatprep.subr.mxu0 0.0
  %830 = vmatpush1.msra.mxu0 0.0
  %831 = vmatprep.subr.mxu0 0.0
  %832 = vmatpush1.msra.mxu0 0.0
  %833 = vmatprep.subr.mxu0 0.0
  %834 = vmatpush1.msra.mxu0 0.0
  %835 = vmatprep.subr.mxu0 0.0
  %836 = vmatpush1.msra.mxu0 0.0
  %837 = vmatprep.subr.mxu0 0.0
  %838 = vmatpush1.msra.mxu0 0.0
  %839 = vmatprep.subr.mxu0 0.0
  %840 = vmatpush1.msra.mxu0 0.0
  %841 = vmatprep.subr.mxu0 0.0
  %842 = vmatpush1.msra.mxu0 0.0
  %843 = vmatprep.subr.mxu0 0.0
  %844 = vmatpush1.msra.mxu0 0.0
  %845 = vmatprep.subr.mxu0 0.0
  %846 = vmatpush1.msra.mxu0 0.0
  %847 = vmatprep.subr.mxu0 0.0
  %848 = vmatpush1.msra.mxu0 0.0
  %849 = vmatprep.subr.mxu0 0.0
  %850 = vmatpush1.msra.mxu0 0.0
  %851 = vmatprep.subr.mxu0 0.0
  %852 = vmatpush1.msra.mxu0 0.0
  %853 = vmatprep.subr.mxu0 0.0
  %854 = vmatpush1.msra.mxu0 0.0
  %855 = vmatprep.subr.mxu0 0.0
  %856 = vmatpush1.msra.mxu0 0.0
  %857 = vmatprep.subr.mxu0 0.0
  %858 = vmatpush1.msra.mxu0 0.0
  %859 = vmatprep.subr.mxu0 0.0
  %860 = vmatpush1.msra.mxu0 0.0
  %861 = vmatprep.subr.mxu0 0.0
  %862 = vmatpush1.msra.mxu0 0.0
  %863 = vmatprep.subr.mxu0 0.0
  %864 = vmatpush1.msra.mxu0 0.0
  %865 = vmatprep.subr.mxu0 0.0
  %866 = vmatpush1.msra.mxu0 0.0
  %867 = vmatprep.mubr.f32.mxu0 0.0
  %868 = vmatmul.mubr.f32.gmra.mrb[0].mxu0 %v792
  %v869 = vpop.f32.mrb[0].mxu0
  %v870 = vadd.f32 0.0, %v869
  %v871 = vpop.f32.mrb[0].mxu0
  %872 = vmatprep.mubr.f32.mxu0 0.0
  %873 = vmatmul.mubr.f32.gmra.mrb[0].mxu0 %v795
  %v874 = vpop.f32.mrb[0].mxu0
  %v875 = vadd.f32 0.0, %v874
  %v876 = vpop.f32.mrb[0].mxu0
  %877 = vmatprep.mubr.f32.mxu0 0.0
  %878 = vmatmul.mubr.f32.gmra.mrb[0].mxu0 %v798
  %v879 = vpop.f32.mrb[0].mxu0
  %v880 = vadd.f32 0.0, %v879
  %v881 = vpop.f32.mrb[0].mxu0
  %882 = vmatprep.mubr.f32.mxu0 0.0
  %883 = vmatmul.mubr.f32.gmra.mrb[0].mxu0 %v801
  %v884 = vpop.f32.mrb[0].mxu0
  %v885 = vadd.f32 0.0, %v884
  %v886 = vpop.f32.mrb[0].mxu0
  %887 = vdwg.mxu0
  %s888 = scalar_lea.vmem %s6, 48
  %v889 = vld [vmem:[%s888] sm:$0xff]
  %v890 = vld [vmem:[%s888 + $0x8] sm:$0xff]
  %v892 = vsel %vm385, %v870, 0
  %v895 = vsel %vm385, %v875, 0
  %v898 = vsel %vm385, %v880, 0
  %v901 = vsel %vm385, %v885, 0
  %903 = vmatprep.subr.mxu0 0.0
  %904 = vmatpush1.msra.mxu0 %v889
  %905 = vmatprep.subr.mxu0 0.0
  %906 = vmatpush1.msra.mxu0 %v890
  %907 = vmatprep.subr.mxu0 0.0
  %908 = vmatpush1.msra.mxu0 0.0
  %909 = vmatprep.subr.mxu0 0.0
  %910 = vmatpush1.msra.mxu0 0.0
  %911 = vmatprep.subr.mxu0 0.0
  %912 = vmatpush1.msra.mxu0 0.0
  %913 = vmatprep.subr.mxu0 0.0
  %914 = vmatpush1.msra.mxu0 0.0
  %915 = vmatprep.subr.mxu0 0.0
  %916 = vmatpush1.msra.mxu0 0.0
  %917 = vmatprep.subr.mxu0 0.0
  %918 = vmatpush1.msra.mxu0 0.0
  %919 = vmatprep.subr.mxu0 0.0
  %920 = vmatpush1.msra.mxu0 0.0
  %921 = vmatprep.subr.mxu0 0.0
  %922 = vmatpush1.msra.mxu0 0.0
  %923 = vmatprep.subr.mxu0 0.0
  %924 = vmatpush1.msra.mxu0 0.0
  %925 = vmatprep.subr.mxu0 0.0
  %926 = vmatpush1.msra.mxu0 0.0
  %927 = vmatprep.subr.mxu0 0.0
  %928 = vmatpush1.msra.mxu0 0.0
  %929 = vmatprep.subr.mxu0 0.0
  %930 = vmatpush1.msra.mxu0 0.0
  %931 = vmatprep.subr.mxu0 0.0
  %932 = vmatpush1.msra.mxu0 0.0
  %933 = vmatprep.subr.mxu0 0.0
  %934 = vmatpush1.msra.mxu0 0.0
  %935 = vmatprep.subr.mxu0 0.0
  %936 = vmatpush1.msra.mxu0 0.0
  %937 = vmatprep.subr.mxu0 0.0
  %938 = vmatpush1.msra.mxu0 0.0
  %939 = vmatprep.subr.mxu0 0.0
  %940 = vmatpush1.msra.mxu0 0.0
  %941 = vmatprep.subr.mxu0 0.0
  %942 = vmatpush1.msra.mxu0 0.0
  %943 = vmatprep.subr.mxu0 0.0
  %944 = vmatpush1.msra.mxu0 0.0
  %945 = vmatprep.subr.mxu0 0.0
  %946 = vmatpush1.msra.mxu0 0.0
  %947 = vmatprep.subr.mxu0 0.0
  %948 = vmatpush1.msra.mxu0 0.0
  %949 = vmatprep.subr.mxu0 0.0
  %950 = vmatpush1.msra.mxu0 0.0
  %951 = vmatprep.subr.mxu0 0.0
  %952 = vmatpush1.msra.mxu0 0.0
  %953 = vmatprep.subr.mxu0 0.0
  %954 = vmatpush1.msra.mxu0 0.0
  %955 = vmatprep.subr.mxu0 0.0
  %956 = vmatpush1.msra.mxu0 0.0
  %957 = vmatprep.subr.mxu0 0.0
  %958 = vmatpush1.msra.mxu0 0.0
  %959 = vmatprep.subr.mxu0 0.0
  %960 = vmatpush1.msra.mxu0 0.0
  %961 = vmatprep.subr.mxu0 0.0
  %962 = vmatpush1.msra.mxu0 0.0
  %963 = vmatprep.subr.mxu0 0.0
  %964 = vmatpush1.msra.mxu0 0.0
  %965 = vmatprep.subr.mxu0 0.0
  %966 = vmatpush1.msra.mxu0 0.0
  %967 = vmatprep.mubr.f32.mxu0 0.0
  %968 = vmatmul.mubr.f32.gmra.mrb[0].mxu0 %v892
  %v969 = vpop.f32.mrb[0].mxu0
  %v970 = vadd.f32 0.0, %v969
  %v971 = vpop.f32.mrb[0].mxu0
  %972 = vmatprep.mubr.f32.mxu0 0.0
  %973 = vmatmul.mubr.f32.gmra.mrb[0].mxu0 %v895
  %v974 = vpop.f32.mrb[0].mxu0
  %v975 = vadd.f32 0.0, %v974
  %v976 = vpop.f32.mrb[0].mxu0
  %977 = vmatprep.mubr.f32.mxu0 0.0
  %978 = vmatmul.mubr.f32.gmra.mrb[0].mxu0 %v898
  %v979 = vpop.f32.mrb[0].mxu0
  %v980 = vadd.f32 0.0, %v979
  %v981 = vpop.f32.mrb[0].mxu0
  %982 = vmatprep.mubr.f32.mxu0 0.0
  %983 = vmatmul.mubr.f32.gmra.mrb[0].mxu0 %v901
  %v984 = vpop.f32.mrb[0].mxu0
  %v985 = vadd.f32 0.0, %v984
  %v986 = vpop.f32.mrb[0].mxu0
  %987 = vdwg.mxu0
  %v988 = vadd.f32 %v782, %v970
  %v989 = vadd.f32 %v783, %v975
  %v990 = vadd.f32 %v784, %v980
  %v991 = vadd.f32 %v785, %v985
  %s992 = scalar_lea.vmem %s5, 128
  %v993 = vld [vmem:[%s992] sm:$0xff]
  %v994 = vld [vmem:[%s992 + $0x8] sm:$0xff]
  %v995 = vld [vmem:[%s992 + $0x10] sm:$0xff]
  %v996 = vld [vmem:[%s992 + $0x18] sm:$0xff]
  %v998 = vsel %vm180, %v993, 0
  %v1001 = vsel %vm180, %v994, 0
  %v1004 = vsel %vm180, %v995, 0
  %v1007 = vsel %vm180, %v996, 0
  %1009 = vmatprep.subr.mxu0 0.0
  %1010 = vmatpush1.msra.mxu0 %v172
  %1011 = vmatprep.subr.mxu0 0.0
  %1012 = vmatpush1.msra.mxu0 %v173
  %1013 = vmatprep.subr.mxu0 0.0
  %1014 = vmatpush1.msra.mxu0 %v174
  %1015 = vmatprep.subr.mxu0 0.0
  %1016 = vmatpush1.msra.mxu0 %v175
  %1017 = vmatprep.subr.mxu0 0.0
  %1018 = vmatpush1.msra.mxu0 0.0
  %1019 = vmatprep.subr.mxu0 0.0
  %1020 = vmatpush1.msra.mxu0 0.0
  %1021 = vmatprep.subr.mxu0 0.0
  %1022 = vmatpush1.msra.mxu0 0.0
  %1023 = vmatprep.subr.mxu0 0.0
  %1024 = vmatpush1.msra.mxu0 0.0
  %1025 = vmatprep.subr.mxu0 0.0
  %1026 = vmatpush1.msra.mxu0 0.0
  %1027 = vmatprep.subr.mxu0 0.0
  %1028 = vmatpush1.msra.mxu0 0.0
  %1029 = vmatprep.subr.mxu0 0.0
  %1030 = vmatpush1.msra.mxu0 0.0
  %1031 = vmatprep.subr.mxu0 0.0
  %1032 = vmatpush1.msra.mxu0 0.0
  %1033 = vmatprep.subr.mxu0 0.0
  %1034 = vmatpush1.msra.mxu0 0.0
  %1035 = vmatprep.subr.mxu0 0.0
  %1036 = vmatpush1.msra.mxu0 0.0
  %1037 = vmatprep.subr.mxu0 0.0
  %1038 = vmatpush1.msra.mxu0 0.0
  %1039 = vmatprep.subr.mxu0 0.0
  %1040 = vmatpush1.msra.mxu0 0.0
  %1041 = vmatprep.subr.mxu0 0.0
  %1042 = vmatpush1.msra.mxu0 0.0
  %1043 = vmatprep.subr.mxu0 0.0
  %1044 = vmatpush1.msra.mxu0 0.0
  %1045 = vmatprep.subr.mxu0 0.0
  %1046 = vmatpush1.msra.mxu0 0.0
  %1047 = vmatprep.subr.mxu0 0.0
  %1048 = vmatpush1.msra.mxu0 0.0
  %1049 = vmatprep.subr.mxu0 0.0
  %1050 = vmatpush1.msra.mxu0 0.0
  %1051 = vmatprep.subr.mxu0 0.0
  %1052 = vmatpush1.msra.mxu0 0.0
  %1053 = vmatprep.subr.mxu0 0.0
  %1054 = vmatpush1.msra.mxu0 0.0
  %1055 = vmatprep.subr.mxu0 0.0
  %1056 = vmatpush1.msra.mxu0 0.0
  %1057 = vmatprep.subr.mxu0 0.0
  %1058 = vmatpush1.msra.mxu0 0.0
  %1059 = vmatprep.subr.mxu0 0.0
  %1060 = vmatpush1.msra.mxu0 0.0
  %1061 = vmatprep.subr.mxu0 0.0
  %1062 = vmatpush1.msra.mxu0 0.0
  %1063 = vmatprep.subr.mxu0 0.0
  %1064 = vmatpush1.msra.mxu0 0.0
  %1065 = vmatprep.subr.mxu0 0.0
  %1066 = vmatpush1.msra.mxu0 0.0
  %1067 = vmatprep.subr.mxu0 0.0
  %1068 = vmatpush1.msra.mxu0 0.0
  %1069 = vmatprep.subr.mxu0 0.0
  %1070 = vmatpush1.msra.mxu0 0.0
  %1071 = vmatprep.subr.mxu0 0.0
  %1072 = vmatpush1.msra.mxu0 0.0
  %1073 = vmatprep.mubr.f32.mxu0 0.0
  %1074 = vmatmul.mubr.f32.gmra.mrb[0].mxu0 %v998
  %v1075 = vpop.f32.mrb[0].mxu0
  %v1076 = vadd.f32 0.0, %v1075
  %v1077 = vpop.f32.mrb[0].mxu0
  %1078 = vmatprep.mubr.f32.mxu0 0.0
  %1079 = vmatmul.mubr.f32.gmra.mrb[0].mxu0 %v1001
  %v1080 = vpop.f32.mrb[0].mxu0
  %v1081 = vadd.f32 0.0, %v1080
  %v1082 = vpop.f32.mrb[0].mxu0
  %1083 = vmatprep.mubr.f32.mxu0 0.0
  %1084 = vmatmul.mubr.f32.gmra.mrb[0].mxu0 %v1004
  %v1085 = vpop.f32.mrb[0].mxu0
  %v1086 = vadd.f32 0.0, %v1085
  %v1087 = vpop.f32.mrb[0].mxu0
  %1088 = vmatprep.mubr.f32.mxu0 0.0
  %1089 = vmatmul.mubr.f32.gmra.mrb[0].mxu0 %v1007
  %v1090 = vpop.f32.mrb[0].mxu0
  %v1091 = vadd.f32 0.0, %v1090
  %v1092 = vpop.f32.mrb[0].mxu0
  %1093 = vdwg.mxu0
  %s1094 = scalar_lea.vmem %s6, 64
  %v1095 = vld [vmem:[%s1094] sm:$0xff]
  %v1096 = vld [vmem:[%s1094 + $0x8] sm:$0xff]
  %v1098 = vsel %vm385, %v1076, 0
  %v1101 = vsel %vm385, %v1081, 0
  %v1104 = vsel %vm385, %v1086, 0
  %v1107 = vsel %vm385, %v1091, 0
  %1109 = vmatprep.subr.mxu0 0.0
  %1110 = vmatpush1.msra.mxu0 %v1095
  %1111 = vmatprep.subr.mxu0 0.0
  %1112 = vmatpush1.msra.mxu0 %v1096
  %1113 = vmatprep.subr.mxu0 0.0
  %1114 = vmatpush1.msra.mxu0 0.0
  %1115 = vmatprep.subr.mxu0 0.0
  %1116 = vmatpush1.msra.mxu0 0.0
  %1117 = vmatprep.subr.mxu0 0.0
  %1118 = vmatpush1.msra.mxu0 0.0
  %1119 = vmatprep.subr.mxu0 0.0
  %1120 = vmatpush1.msra.mxu0 0.0
  %1121 = vmatprep.subr.mxu0 0.0
  %1122 = vmatpush1.msra.mxu0 0.0
  %1123 = vmatprep.subr.mxu0 0.0
  %1124 = vmatpush1.msra.mxu0 0.0
  %1125 = vmatprep.subr.mxu0 0.0
  %1126 = vmatpush1.msra.mxu0 0.0
  %1127 = vmatprep.subr.mxu0 0.0
  %1128 = vmatpush1.msra.mxu0 0.0
  %1129 = vmatprep.subr.mxu0 0.0
  %1130 = vmatpush1.msra.mxu0 0.0
  %1131 = vmatprep.subr.mxu0 0.0
  %1132 = vmatpush1.msra.mxu0 0.0
  %1133 = vmatprep.subr.mxu0 0.0
  %1134 = vmatpush1.msra.mxu0 0.0
  %1135 = vmatprep.subr.mxu0 0.0
  %1136 = vmatpush1.msra.mxu0 0.0
  %1137 = vmatprep.subr.mxu0 0.0
  %1138 = vmatpush1.msra.mxu0 0.0
  %1139 = vmatprep.subr.mxu0 0.0
  %1140 = vmatpush1.msra.mxu0 0.0
  %1141 = vmatprep.subr.mxu0 0.0
  %1142 = vmatpush1.msra.mxu0 0.0
  %1143 = vmatprep.subr.mxu0 0.0
  %1144 = vmatpush1.msra.mxu0 0.0
  %1145 = vmatprep.subr.mxu0 0.0
  %1146 = vmatpush1.msra.mxu0 0.0
  %1147 = vmatprep.subr.mxu0 0.0
  %1148 = vmatpush1.msra.mxu0 0.0
  %1149 = vmatprep.subr.mxu0 0.0
  %1150 = vmatpush1.msra.mxu0 0.0
  %1151 = vmatprep.subr.mxu0 0.0
  %1152 = vmatpush1.msra.mxu0 0.0
  %1153 = vmatprep.subr.mxu0 0.0
  %1154 = vmatpush1.msra.mxu0 0.0
  %1155 = vmatprep.subr.mxu0 0.0
  %1156 = vmatpush1.msra.mxu0 0.0
  %1157 = vmatprep.subr.mxu0 0.0
  %1158 = vmatpush1.msra.mxu0 0.0
  %1159 = vmatprep.subr.mxu0 0.0
  %1160 = vmatpush1.msra.mxu0 0.0
  %1161 = vmatprep.subr.mxu0 0.0
  %1162 = vmatpush1.msra.mxu0 0.0
  %1163 = vmatprep.subr.mxu0 0.0
  %1164 = vmatpush1.msra.mxu0 0.0
  %1165 = vmatprep.subr.mxu0 0.0
  %1166 = vmatpush1.msra.mxu0 0.0
  %1167 = vmatprep.subr.mxu0 0.0
  %1168 = vmatpush1.msra.mxu0 0.0
  %1169 = vmatprep.subr.mxu0 0.0
  %1170 = vmatpush1.msra.mxu0 0.0
  %1171 = vmatprep.subr.mxu0 0.0
  %1172 = vmatpush1.msra.mxu0 0.0
  %1173 = vmatprep.mubr.f32.mxu0 0.0
  %1174 = vmatmul.mubr.f32.gmra.mrb[0].mxu0 %v1098
  %v1175 = vpop.f32.mrb[0].mxu0
  %v1176 = vadd.f32 0.0, %v1175
  %v1177 = vpop.f32.mrb[0].mxu0
  %1178 = vmatprep.mubr.f32.mxu0 0.0
  %1179 = vmatmul.mubr.f32.gmra.mrb[0].mxu0 %v1101
  %v1180 = vpop.f32.mrb[0].mxu0
  %v1181 = vadd.f32 0.0, %v1180
  %v1182 = vpop.f32.mrb[0].mxu0
  %1183 = vmatprep.mubr.f32.mxu0 0.0
  %1184 = vmatmul.mubr.f32.gmra.mrb[0].mxu0 %v1104
  %v1185 = vpop.f32.mrb[0].mxu0
  %v1186 = vadd.f32 0.0, %v1185
  %v1187 = vpop.f32.mrb[0].mxu0
  %1188 = vmatprep.mubr.f32.mxu0 0.0
  %1189 = vmatmul.mubr.f32.gmra.mrb[0].mxu0 %v1107
  %v1190 = vpop.f32.mrb[0].mxu0
  %v1191 = vadd.f32 0.0, %v1190
  %v1192 = vpop.f32.mrb[0].mxu0
  %1193 = vdwg.mxu0
  %v1194 = vadd.f32 %v988, %v1176
  %v1195 = vadd.f32 %v989, %v1181
  %v1196 = vadd.f32 %v990, %v1186
  %v1197 = vadd.f32 %v991, %v1191
  %s1198 = scalar_lea.vmem %s5, 160
  %v1199 = vld [vmem:[%s1198] sm:$0xff]
  %v1200 = vld [vmem:[%s1198 + $0x8] sm:$0xff]
  %v1201 = vld [vmem:[%s1198 + $0x10] sm:$0xff]
  %v1202 = vld [vmem:[%s1198 + $0x18] sm:$0xff]
  %v1204 = vsel %vm180, %v1199, 0
  %v1207 = vsel %vm180, %v1200, 0
  %v1210 = vsel %vm180, %v1201, 0
  %v1213 = vsel %vm180, %v1202, 0
  %1215 = vmatprep.subr.mxu0 0.0
  %1216 = vmatpush1.msra.mxu0 %v172
  %1217 = vmatprep.subr.mxu0 0.0
  %1218 = vmatpush1.msra.mxu0 %v173
  %1219 = vmatprep.subr.mxu0 0.0
  %1220 = vmatpush1.msra.mxu0 %v174
  %1221 = vmatprep.subr.mxu0 0.0
  %1222 = vmatpush1.msra.mxu0 %v175
  %1223 = vmatprep.subr.mxu0 0.0
  %1224 = vmatpush1.msra.mxu0 0.0
  %1225 = vmatprep.subr.mxu0 0.0
  %1226 = vmatpush1.msra.mxu0 0.0
  %1227 = vmatprep.subr.mxu0 0.0
  %1228 = vmatpush1.msra.mxu0 0.0
  %1229 = vmatprep.subr.mxu0 0.0
  %1230 = vmatpush1.msra.mxu0 0.0
  %1231 = vmatprep.subr.mxu0 0.0
  %1232 = vmatpush1.msra.mxu0 0.0
  %1233 = vmatprep.subr.mxu0 0.0
  %1234 = vmatpush1.msra.mxu0 0.0
  %1235 = vmatprep.subr.mxu0 0.0
  %1236 = vmatpush1.msra.mxu0 0.0
  %1237 = vmatprep.subr.mxu0 0.0
  %1238 = vmatpush1.msra.mxu0 0.0
  %1239 = vmatprep.subr.mxu0 0.0
  %1240 = vmatpush1.msra.mxu0 0.0
  %1241 = vmatprep.subr.mxu0 0.0
  %1242 = vmatpush1.msra.mxu0 0.0
  %1243 = vmatprep.subr.mxu0 0.0
  %1244 = vmatpush1.msra.mxu0 0.0
  %1245 = vmatprep.subr.mxu0 0.0
  %1246 = vmatpush1.msra.mxu0 0.0
  %1247 = vmatprep.subr.mxu0 0.0
  %1248 = vmatpush1.msra.mxu0 0.0
  %1249 = vmatprep.subr.mxu0 0.0
  %1250 = vmatpush1.msra.mxu0 0.0
  %1251 = vmatprep.subr.mxu0 0.0
  %1252 = vmatpush1.msra.mxu0 0.0
  %1253 = vmatprep.subr.mxu0 0.0
  %1254 = vmatpush1.msra.mxu0 0.0
  %1255 = vmatprep.subr.mxu0 0.0
  %1256 = vmatpush1.msra.mxu0 0.0
  %1257 = vmatprep.subr.mxu0 0.0
  %1258 = vmatpush1.msra.mxu0 0.0
  %1259 = vmatprep.subr.mxu0 0.0
  %1260 = vmatpush1.msra.mxu0 0.0
  %1261 = vmatprep.subr.mxu0 0.0
  %1262 = vmatpush1.msra.mxu0 0.0
  %1263 = vmatprep.subr.mxu0 0.0
  %1264 = vmatpush1.msra.mxu0 0.0
  %1265 = vmatprep.subr.mxu0 0.0
  %1266 = vmatpush1.msra.mxu0 0.0
  %1267 = vmatprep.subr.mxu0 0.0
  %1268 = vmatpush1.msra.mxu0 0.0
  %1269 = vmatprep.subr.mxu0 0.0
  %1270 = vmatpush1.msra.mxu0 0.0
  %1271 = vmatprep.subr.mxu0 0.0
  %1272 = vmatpush1.msra.mxu0 0.0
  %1273 = vmatprep.subr.mxu0 0.0
  %1274 = vmatpush1.msra.mxu0 0.0
  %1275 = vmatprep.subr.mxu0 0.0
  %1276 = vmatpush1.msra.mxu0 0.0
  %1277 = vmatprep.subr.mxu0 0.0
  %1278 = vmatpush1.msra.mxu0 0.0
  %1279 = vmatprep.mubr.f32.mxu0 0.0
  %1280 = vmatmul.mubr.f32.gmra.mrb[0].mxu0 %v1204
  %v1281 = vpop.f32.mrb[0].mxu0
  %v1282 = vadd.f32 0.0, %v1281
  %v1283 = vpop.f32.mrb[0].mxu0
  %1284 = vmatprep.mubr.f32.mxu0 0.0
  %1285 = vmatmul.mubr.f32.gmra.mrb[0].mxu0 %v1207
  %v1286 = vpop.f32.mrb[0].mxu0
  %v1287 = vadd.f32 0.0, %v1286
  %v1288 = vpop.f32.mrb[0].mxu0
  %1289 = vmatprep.mubr.f32.mxu0 0.0
  %1290 = vmatmul.mubr.f32.gmra.mrb[0].mxu0 %v1210
  %v1291 = vpop.f32.mrb[0].mxu0
  %v1292 = vadd.f32 0.0, %v1291
  %v1293 = vpop.f32.mrb[0].mxu0
  %1294 = vmatprep.mubr.f32.mxu0 0.0
  %1295 = vmatmul.mubr.f32.gmra.mrb[0].mxu0 %v1213
  %v1296 = vpop.f32.mrb[0].mxu0
  %v1297 = vadd.f32 0.0, %v1296
  %v1298 = vpop.f32.mrb[0].mxu0
  %1299 = vdwg.mxu0
  %s1300 = scalar_lea.vmem %s6, 80
  %v1301 = vld [vmem:[%s1300] sm:$0xff]
  %v1302 = vld [vmem:[%s1300 + $0x8] sm:$0xff]
  %v1304 = vsel %vm385, %v1282, 0
  %v1307 = vsel %vm385, %v1287, 0
  %v1310 = vsel %vm385, %v1292, 0
  %v1313 = vsel %vm385, %v1297, 0
  %1315 = vmatprep.subr.mxu0 0.0
  %1316 = vmatpush1.msra.mxu0 %v1301
  %1317 = vmatprep.subr.mxu0 0.0
  %1318 = vmatpush1.msra.mxu0 %v1302
  %1319 = vmatprep.subr.mxu0 0.0
  %1320 = vmatpush1.msra.mxu0 0.0
  %1321 = vmatprep.subr.mxu0 0.0
  %1322 = vmatpush1.msra.mxu0 0.0
  %1323 = vmatprep.subr.mxu0 0.0
  %1324 = vmatpush1.msra.mxu0 0.0
  %1325 = vmatprep.subr.mxu0 0.0
  %1326 = vmatpush1.msra.mxu0 0.0
  %1327 = vmatprep.subr.mxu0 0.0
  %1328 = vmatpush1.msra.mxu0 0.0
  %1329 = vmatprep.subr.mxu0 0.0
  %1330 = vmatpush1.msra.mxu0 0.0
  %1331 = vmatprep.subr.mxu0 0.0
  %1332 = vmatpush1.msra.mxu0 0.0
  %1333 = vmatprep.subr.mxu0 0.0
  %1334 = vmatpush1.msra.mxu0 0.0
  %1335 = vmatprep.subr.mxu0 0.0
  %1336 = vmatpush1.msra.mxu0 0.0
  %1337 = vmatprep.subr.mxu0 0.0
  %1338 = vmatpush1.msra.mxu0 0.0
  %1339 = vmatprep.subr.mxu0 0.0
  %1340 = vmatpush1.msra.mxu0 0.0
  %1341 = vmatprep.subr.mxu0 0.0
  %1342 = vmatpush1.msra.mxu0 0.0
  %1343 = vmatprep.subr.mxu0 0.0
  %1344 = vmatpush1.msra.mxu0 0.0
  %1345 = vmatprep.subr.mxu0 0.0
  %1346 = vmatpush1.msra.mxu0 0.0
  %1347 = vmatprep.subr.mxu0 0.0
  %1348 = vmatpush1.msra.mxu0 0.0
  %1349 = vmatprep.subr.mxu0 0.0
  %1350 = vmatpush1.msra.mxu0 0.0
  %1351 = vmatprep.subr.mxu0 0.0
  %1352 = vmatpush1.msra.mxu0 0.0
  %1353 = vmatprep.subr.mxu0 0.0
  %1354 = vmatpush1.msra.mxu0 0.0
  %1355 = vmatprep.subr.mxu0 0.0
  %1356 = vmatpush1.msra.mxu0 0.0
  %1357 = vmatprep.subr.mxu0 0.0
  %1358 = vmatpush1.msra.mxu0 0.0
  %1359 = vmatprep.subr.mxu0 0.0
  %1360 = vmatpush1.msra.mxu0 0.0
  %1361 = vmatprep.subr.mxu0 0.0
  %1362 = vmatpush1.msra.mxu0 0.0
  %1363 = vmatprep.subr.mxu0 0.0
  %1364 = vmatpush1.msra.mxu0 0.0
  %1365 = vmatprep.subr.mxu0 0.0
  %1366 = vmatpush1.msra.mxu0 0.0
  %1367 = vmatprep.subr.mxu0 0.0
  %1368 = vmatpush1.msra.mxu0 0.0
  %1369 = vmatprep.subr.mxu0 0.0
  %1370 = vmatpush1.msra.mxu0 0.0
  %1371 = vmatprep.subr.mxu0 0.0
  %1372 = vmatpush1.msra.mxu0 0.0
  %1373 = vmatprep.subr.mxu0 0.0
  %1374 = vmatpush1.msra.mxu0 0.0
  %1375 = vmatprep.subr.mxu0 0.0
  %1376 = vmatpush1.msra.mxu0 0.0
  %1377 = vmatprep.subr.mxu0 0.0
  %1378 = vmatpush1.msra.mxu0 0.0
  %1379 = vmatprep.mubr.f32.mxu0 0.0
  %1380 = vmatmul.mubr.f32.gmra.mrb[0].mxu0 %v1304
  %v1381 = vpop.f32.mrb[0].mxu0
  %v1382 = vadd.f32 0.0, %v1381
  %v1383 = vpop.f32.mrb[0].mxu0
  %1384 = vmatprep.mubr.f32.mxu0 0.0
  %1385 = vmatmul.mubr.f32.gmra.mrb[0].mxu0 %v1307
  %v1386 = vpop.f32.mrb[0].mxu0
  %v1387 = vadd.f32 0.0, %v1386
  %v1388 = vpop.f32.mrb[0].mxu0
  %1389 = vmatprep.mubr.f32.mxu0 0.0
  %1390 = vmatmul.mubr.f32.gmra.mrb[0].mxu0 %v1310
  %v1391 = vpop.f32.mrb[0].mxu0
  %v1392 = vadd.f32 0.0, %v1391
  %v1393 = vpop.f32.mrb[0].mxu0
  %1394 = vmatprep.mubr.f32.mxu0 0.0
  %1395 = vmatmul.mubr.f32.gmra.mrb[0].mxu0 %v1313
  %v1396 = vpop.f32.mrb[0].mxu0
  %v1397 = vadd.f32 0.0, %v1396
  %v1398 = vpop.f32.mrb[0].mxu0
  %1399 = vdwg.mxu0
  %v1400 = vadd.f32 %v1194, %v1382
  %v1401 = vadd.f32 %v1195, %v1387
  %v1402 = vadd.f32 %v1196, %v1392
  %v1403 = vadd.f32 %v1197, %v1397
  %s1404 = scalar_lea.vmem %s5, 192
  %v1405 = vld [vmem:[%s1404] sm:$0xff]
  %v1406 = vld [vmem:[%s1404 + $0x8] sm:$0xff]
  %v1407 = vld [vmem:[%s1404 + $0x10] sm:$0xff]
  %v1408 = vld [vmem:[%s1404 + $0x18] sm:$0xff]
  %v1410 = vsel %vm180, %v1405, 0
  %v1413 = vsel %vm180, %v1406, 0
  %v1416 = vsel %vm180, %v1407, 0
  %v1419 = vsel %vm180, %v1408, 0
  %1421 = vmatprep.subr.mxu0 0.0
  %1422 = vmatpush1.msra.mxu0 %v172
  %1423 = vmatprep.subr.mxu0 0.0
  %1424 = vmatpush1.msra.mxu0 %v173
  %1425 = vmatprep.subr.mxu0 0.0
  %1426 = vmatpush1.msra.mxu0 %v174
  %1427 = vmatprep.subr.mxu0 0.0
  %1428 = vmatpush1.msra.mxu0 %v175
  %1429 = vmatprep.subr.mxu0 0.0
  %1430 = vmatpush1.msra.mxu0 0.0
  %1431 = vmatprep.subr.mxu0 0.0
  %1432 = vmatpush1.msra.mxu0 0.0
  %1433 = vmatprep.subr.mxu0 0.0
  %1434 = vmatpush1.msra.mxu0 0.0
  %1435 = vmatprep.subr.mxu0 0.0
  %1436 = vmatpush1.msra.mxu0 0.0
  %1437 = vmatprep.subr.mxu0 0.0
  %1438 = vmatpush1.msra.mxu0 0.0
  %1439 = vmatprep.subr.mxu0 0.0
  %1440 = vmatpush1.msra.mxu0 0.0
  %1441 = vmatprep.subr.mxu0 0.0
  %1442 = vmatpush1.msra.mxu0 0.0
  %1443 = vmatprep.subr.mxu0 0.0
  %1444 = vmatpush1.msra.mxu0 0.0
  %1445 = vmatprep.subr.mxu0 0.0
  %1446 = vmatpush1.msra.mxu0 0.0
  %1447 = vmatprep.subr.mxu0 0.0
  %1448 = vmatpush1.msra.mxu0 0.0
  %1449 = vmatprep.subr.mxu0 0.0
  %1450 = vmatpush1.msra.mxu0 0.0
  %1451 = vmatprep.subr.mxu0 0.0
  %1452 = vmatpush1.msra.mxu0 0.0
  %1453 = vmatprep.subr.mxu0 0.0
  %1454 = vmatpush1.msra.mxu0 0.0
  %1455 = vmatprep.subr.mxu0 0.0
  %1456 = vmatpush1.msra.mxu0 0.0
  %1457 = vmatprep.subr.mxu0 0.0
  %1458 = vmatpush1.msra.mxu0 0.0
  %1459 = vmatprep.subr.mxu0 0.0
  %1460 = vmatpush1.msra.mxu0 0.0
  %1461 = vmatprep.subr.mxu0 0.0
  %1462 = vmatpush1.msra.mxu0 0.0
  %1463 = vmatprep.subr.mxu0 0.0
  %1464 = vmatpush1.msra.mxu0 0.0
  %1465 = vmatprep.subr.mxu0 0.0
  %1466 = vmatpush1.msra.mxu0 0.0
  %1467 = vmatprep.subr.mxu0 0.0
  %1468 = vmatpush1.msra.mxu0 0.0
  %1469 = vmatprep.subr.mxu0 0.0
  %1470 = vmatpush1.msra.mxu0 0.0
  %1471 = vmatprep.subr.mxu0 0.0
  %1472 = vmatpush1.msra.mxu0 0.0
  %1473 = vmatprep.subr.mxu0 0.0
  %1474 = vmatpush1.msra.mxu0 0.0
  %1475 = vmatprep.subr.mxu0 0.0
  %1476 = vmatpush1.msra.mxu0 0.0
  %1477 = vmatprep.subr.mxu0 0.0
  %1478 = vmatpush1.msra.mxu0 0.0
  %1479 = vmatprep.subr.mxu0 0.0
  %1480 = vmatpush1.msra.mxu0 0.0
  %1481 = vmatprep.subr.mxu0 0.0
  %1482 = vmatpush1.msra.mxu0 0.0
  %1483 = vmatprep.subr.mxu0 0.0
  %1484 = vmatpush1.msra.mxu0 0.0
  %1485 = vmatprep.mubr.f32.mxu0 0.0
  %1486 = vmatmul.mubr.f32.gmra.mrb[0].mxu0 %v1410
  %v1487 = vpop.f32.mrb[0].mxu0
  %v1488 = vadd.f32 0.0, %v1487
  %v1489 = vpop.f32.mrb[0].mxu0
  %1490 = vmatprep.mubr.f32.mxu0 0.0
  %1491 = vmatmul.mubr.f32.gmra.mrb[0].mxu0 %v1413
  %v1492 = vpop.f32.mrb[0].mxu0
  %v1493 = vadd.f32 0.0, %v1492
  %v1494 = vpop.f32.mrb[0].mxu0
  %1495 = vmatprep.mubr.f32.mxu0 0.0
  %1496 = vmatmul.mubr.f32.gmra.mrb[0].mxu0 %v1416
  %v1497 = vpop.f32.mrb[0].mxu0
  %v1498 = vadd.f32 0.0, %v1497
  %v1499 = vpop.f32.mrb[0].mxu0
  %1500 = vmatprep.mubr.f32.mxu0 0.0
  %1501 = vmatmul.mubr.f32.gmra.mrb[0].mxu0 %v1419
  %v1502 = vpop.f32.mrb[0].mxu0
  %v1503 = vadd.f32 0.0, %v1502
  %v1504 = vpop.f32.mrb[0].mxu0
  %1505 = vdwg.mxu0
  %s1506 = scalar_lea.vmem %s6, 96
  %v1507 = vld [vmem:[%s1506] sm:$0xff]
  %v1508 = vld [vmem:[%s1506 + $0x8] sm:$0xff]
  %v1510 = vsel %vm385, %v1488, 0
  %v1513 = vsel %vm385, %v1493, 0
  %v1516 = vsel %vm385, %v1498, 0
  %v1519 = vsel %vm385, %v1503, 0
  %1521 = vmatprep.subr.mxu0 0.0
  %1522 = vmatpush1.msra.mxu0 %v1507
  %1523 = vmatprep.subr.mxu0 0.0
  %1524 = vmatpush1.msra.mxu0 %v1508
  %1525 = vmatprep.subr.mxu0 0.0
  %1526 = vmatpush1.msra.mxu0 0.0
  %1527 = vmatprep.subr.mxu0 0.0
  %1528 = vmatpush1.msra.mxu0 0.0
  %1529 = vmatprep.subr.mxu0 0.0
  %1530 = vmatpush1.msra.mxu0 0.0
  %1531 = vmatprep.subr.mxu0 0.0
  %1532 = vmatpush1.msra.mxu0 0.0
  %1533 = vmatprep.subr.mxu0 0.0
  %1534 = vmatpush1.msra.mxu0 0.0
  %1535 = vmatprep.subr.mxu0 0.0
  %1536 = vmatpush1.msra.mxu0 0.0
  %1537 = vmatprep.subr.mxu0 0.0
  %1538 = vmatpush1.msra.mxu0 0.0
  %1539 = vmatprep.subr.mxu0 0.0
  %1540 = vmatpush1.msra.mxu0 0.0
  %1541 = vmatprep.subr.mxu0 0.0
  %1542 = vmatpush1.msra.mxu0 0.0
  %1543 = vmatprep.subr.mxu0 0.0
  %1544 = vmatpush1.msra.mxu0 0.0
  %1545 = vmatprep.subr.mxu0 0.0
  %1546 = vmatpush1.msra.mxu0 0.0
  %1547 = vmatprep.subr.mxu0 0.0
  %1548 = vmatpush1.msra.mxu0 0.0
  %1549 = vmatprep.subr.mxu0 0.0
  %1550 = vmatpush1.msra.mxu0 0.0
  %1551 = vmatprep.subr.mxu0 0.0
  %1552 = vmatpush1.msra.mxu0 0.0
  %1553 = vmatprep.subr.mxu0 0.0
  %1554 = vmatpush1.msra.mxu0 0.0
  %1555 = vmatprep.subr.mxu0 0.0
  %1556 = vmatpush1.msra.mxu0 0.0
  %1557 = vmatprep.subr.mxu0 0.0
  %1558 = vmatpush1.msra.mxu0 0.0
  %1559 = vmatprep.subr.mxu0 0.0
  %1560 = vmatpush1.msra.mxu0 0.0
  %1561 = vmatprep.subr.mxu0 0.0
  %1562 = vmatpush1.msra.mxu0 0.0
  %1563 = vmatprep.subr.mxu0 0.0
  %1564 = vmatpush1.msra.mxu0 0.0
  %1565 = vmatprep.subr.mxu0 0.0
  %1566 = vmatpush1.msra.mxu0 0.0
  %1567 = vmatprep.subr.mxu0 0.0
  %1568 = vmatpush1.msra.mxu0 0.0
  %1569 = vmatprep.subr.mxu0 0.0
  %1570 = vmatpush1.msra.mxu0 0.0
  %1571 = vmatprep.subr.mxu0 0.0
  %1572 = vmatpush1.msra.mxu0 0.0
  %1573 = vmatprep.subr.mxu0 0.0
  %1574 = vmatpush1.msra.mxu0 0.0
  %1575 = vmatprep.subr.mxu0 0.0
  %1576 = vmatpush1.msra.mxu0 0.0
  %1577 = vmatprep.subr.mxu0 0.0
  %1578 = vmatpush1.msra.mxu0 0.0
  %1579 = vmatprep.subr.mxu0 0.0
  %1580 = vmatpush1.msra.mxu0 0.0
  %1581 = vmatprep.subr.mxu0 0.0
  %1582 = vmatpush1.msra.mxu0 0.0
  %1583 = vmatprep.subr.mxu0 0.0
  %1584 = vmatpush1.msra.mxu0 0.0
  %1585 = vmatprep.mubr.f32.mxu0 0.0
  %1586 = vmatmul.mubr.f32.gmra.mrb[0].mxu0 %v1510
  %v1587 = vpop.f32.mrb[0].mxu0
  %v1588 = vadd.f32 0.0, %v1587
  %v1589 = vpop.f32.mrb[0].mxu0
  %1590 = vmatprep.mubr.f32.mxu0 0.0
  %1591 = vmatmul.mubr.f32.gmra.mrb[0].mxu0 %v1513
  %v1592 = vpop.f32.mrb[0].mxu0
  %v1593 = vadd.f32 0.0, %v1592
  %v1594 = vpop.f32.mrb[0].mxu0
  %1595 = vmatprep.mubr.f32.mxu0 0.0
  %1596 = vmatmul.mubr.f32.gmra.mrb[0].mxu0 %v1516
  %v1597 = vpop.f32.mrb[0].mxu0
  %v1598 = vadd.f32 0.0, %v1597
  %v1599 = vpop.f32.mrb[0].mxu0
  %1600 = vmatprep.mubr.f32.mxu0 0.0
  %1601 = vmatmul.mubr.f32.gmra.mrb[0].mxu0 %v1519
  %v1602 = vpop.f32.mrb[0].mxu0
  %v1603 = vadd.f32 0.0, %v1602
  %v1604 = vpop.f32.mrb[0].mxu0
  %1605 = vdwg.mxu0
  %v1606 = vadd.f32 %v1400, %v1588
  %v1607 = vadd.f32 %v1401, %v1593
  %v1608 = vadd.f32 %v1402, %v1598
  %v1609 = vadd.f32 %v1403, %v1603
  %s1610 = scalar_lea.vmem %s5, 224
  %v1611 = vld [vmem:[%s1610] sm:$0xff]
  %v1612 = vld [vmem:[%s1610 + $0x8] sm:$0xff]
  %v1613 = vld [vmem:[%s1610 + $0x10] sm:$0xff]
  %v1614 = vld [vmem:[%s1610 + $0x18] sm:$0xff]
  %v1616 = vsel %vm180, %v1611, 0
  %v1619 = vsel %vm180, %v1612, 0
  %v1622 = vsel %vm180, %v1613, 0
  %v1625 = vsel %vm180, %v1614, 0
  %1627 = vmatprep.subr.mxu0 0.0
  %1628 = vmatpush1.msra.mxu0 %v172
  %1629 = vmatprep.subr.mxu0 0.0
  %1630 = vmatpush1.msra.mxu0 %v173
  %1631 = vmatprep.subr.mxu0 0.0
  %1632 = vmatpush1.msra.mxu0 %v174
  %1633 = vmatprep.subr.mxu0 0.0
  %1634 = vmatpush1.msra.mxu0 %v175
  %1635 = vmatprep.subr.mxu0 0.0
  %1636 = vmatpush1.msra.mxu0 0.0
  %1637 = vmatprep.subr.mxu0 0.0
  %1638 = vmatpush1.msra.mxu0 0.0
  %1639 = vmatprep.subr.mxu0 0.0
  %1640 = vmatpush1.msra.mxu0 0.0
  %1641 = vmatprep.subr.mxu0 0.0
  %1642 = vmatpush1.msra.mxu0 0.0
  %1643 = vmatprep.subr.mxu0 0.0
  %1644 = vmatpush1.msra.mxu0 0.0
  %1645 = vmatprep.subr.mxu0 0.0
  %1646 = vmatpush1.msra.mxu0 0.0
  %1647 = vmatprep.subr.mxu0 0.0
  %1648 = vmatpush1.msra.mxu0 0.0
  %1649 = vmatprep.subr.mxu0 0.0
  %1650 = vmatpush1.msra.mxu0 0.0
  %1651 = vmatprep.subr.mxu0 0.0
  %1652 = vmatpush1.msra.mxu0 0.0
  %1653 = vmatprep.subr.mxu0 0.0
  %1654 = vmatpush1.msra.mxu0 0.0
  %1655 = vmatprep.subr.mxu0 0.0
  %1656 = vmatpush1.msra.mxu0 0.0
  %1657 = vmatprep.subr.mxu0 0.0
  %1658 = vmatpush1.msra.mxu0 0.0
  %1659 = vmatprep.subr.mxu0 0.0
  %1660 = vmatpush1.msra.mxu0 0.0
  %1661 = vmatprep.subr.mxu0 0.0
  %1662 = vmatpush1.msra.mxu0 0.0
  %1663 = vmatprep.subr.mxu0 0.0
  %1664 = vmatpush1.msra.mxu0 0.0
  %1665 = vmatprep.subr.mxu0 0.0
  %1666 = vmatpush1.msra.mxu0 0.0
  %1667 = vmatprep.subr.mxu0 0.0
  %1668 = vmatpush1.msra.mxu0 0.0
  %1669 = vmatprep.subr.mxu0 0.0
  %1670 = vmatpush1.msra.mxu0 0.0
  %1671 = vmatprep.subr.mxu0 0.0
  %1672 = vmatpush1.msra.mxu0 0.0
  %1673 = vmatprep.subr.mxu0 0.0
  %1674 = vmatpush1.msra.mxu0 0.0
  %1675 = vmatprep.subr.mxu0 0.0
  %1676 = vmatpush1.msra.mxu0 0.0
  %1677 = vmatprep.subr.mxu0 0.0
  %1678 = vmatpush1.msra.mxu0 0.0
  %1679 = vmatprep.subr.mxu0 0.0
  %1680 = vmatpush1.msra.mxu0 0.0
  %1681 = vmatprep.subr.mxu0 0.0
  %1682 = vmatpush1.msra.mxu0 0.0
  %1683 = vmatprep.subr.mxu0 0.0
  %1684 = vmatpush1.msra.mxu0 0.0
  %1685 = vmatprep.subr.mxu0 0.0
  %1686 = vmatpush1.msra.mxu0 0.0
  %1687 = vmatprep.subr.mxu0 0.0
  %1688 = vmatpush1.msra.mxu0 0.0
  %1689 = vmatprep.subr.mxu0 0.0
  %1690 = vmatpush1.msra.mxu0 0.0
  %1691 = vmatprep.mubr.f32.mxu0 0.0
  %1692 = vmatmul.mubr.f32.gmra.mrb[0].mxu0 %v1616
  %v1693 = vpop.f32.mrb[0].mxu0
  %v1694 = vadd.f32 0.0, %v1693
  %v1695 = vpop.f32.mrb[0].mxu0
  %1696 = vmatprep.mubr.f32.mxu0 0.0
  %1697 = vmatmul.mubr.f32.gmra.mrb[0].mxu0 %v1619
  %v1698 = vpop.f32.mrb[0].mxu0
  %v1699 = vadd.f32 0.0, %v1698
  %v1700 = vpop.f32.mrb[0].mxu0
  %1701 = vmatprep.mubr.f32.mxu0 0.0
  %1702 = vmatmul.mubr.f32.gmra.mrb[0].mxu0 %v1622
  %v1703 = vpop.f32.mrb[0].mxu0
  %v1704 = vadd.f32 0.0, %v1703
  %v1705 = vpop.f32.mrb[0].mxu0
  %1706 = vmatprep.mubr.f32.mxu0 0.0
  %1707 = vmatmul.mubr.f32.gmra.mrb[0].mxu0 %v1625
  %v1708 = vpop.f32.mrb[0].mxu0
  %v1709 = vadd.f32 0.0, %v1708
  %v1710 = vpop.f32.mrb[0].mxu0
  %1711 = vdwg.mxu0
  %s1712 = scalar_lea.vmem %s6, 112
  %v1713 = vld [vmem:[%s1712] sm:$0xff]
  %v1714 = vld [vmem:[%s1712 + $0x8] sm:$0xff]
  %v1716 = vsel %vm385, %v1694, 0
  %v1719 = vsel %vm385, %v1699, 0
  %v1722 = vsel %vm385, %v1704, 0
  %v1725 = vsel %vm385, %v1709, 0
  %1727 = vmatprep.subr.mxu0 0.0
  %1728 = vmatpush1.msra.mxu0 %v1713
  %1729 = vmatprep.subr.mxu0 0.0
  %1730 = vmatpush1.msra.mxu0 %v1714
  %1731 = vmatprep.subr.mxu0 0.0
  %1732 = vmatpush1.msra.mxu0 0.0
  %1733 = vmatprep.subr.mxu0 0.0
  %1734 = vmatpush1.msra.mxu0 0.0
  %1735 = vmatprep.subr.mxu0 0.0
  %1736 = vmatpush1.msra.mxu0 0.0
  %1737 = vmatprep.subr.mxu0 0.0
  %1738 = vmatpush1.msra.mxu0 0.0
  %1739 = vmatprep.subr.mxu0 0.0
  %1740 = vmatpush1.msra.mxu0 0.0
  %1741 = vmatprep.subr.mxu0 0.0
  %1742 = vmatpush1.msra.mxu0 0.0
  %1743 = vmatprep.subr.mxu0 0.0
  %1744 = vmatpush1.msra.mxu0 0.0
  %1745 = vmatprep.subr.mxu0 0.0
  %1746 = vmatpush1.msra.mxu0 0.0
  %1747 = vmatprep.subr.mxu0 0.0
  %1748 = vmatpush1.msra.mxu0 0.0
  %1749 = vmatprep.subr.mxu0 0.0
  %1750 = vmatpush1.msra.mxu0 0.0
  %1751 = vmatprep.subr.mxu0 0.0
  %1752 = vmatpush1.msra.mxu0 0.0
  %1753 = vmatprep.subr.mxu0 0.0
  %1754 = vmatpush1.msra.mxu0 0.0
  %1755 = vmatprep.subr.mxu0 0.0
  %1756 = vmatpush1.msra.mxu0 0.0
  %1757 = vmatprep.subr.mxu0 0.0
  %1758 = vmatpush1.msra.mxu0 0.0
  %1759 = vmatprep.subr.mxu0 0.0
  %1760 = vmatpush1.msra.mxu0 0.0
  %1761 = vmatprep.subr.mxu0 0.0
  %1762 = vmatpush1.msra.mxu0 0.0
  %1763 = vmatprep.subr.mxu0 0.0
  %1764 = vmatpush1.msra.mxu0 0.0
  %1765 = vmatprep.subr.mxu0 0.0
  %1766 = vmatpush1.msra.mxu0 0.0
  %1767 = vmatprep.subr.mxu0 0.0
  %1768 = vmatpush1.msra.mxu0 0.0
  %1769 = vmatprep.subr.mxu0 0.0
  %1770 = vmatpush1.msra.mxu0 0.0
  %1771 = vmatprep.subr.mxu0 0.0
  %1772 = vmatpush1.msra.mxu0 0.0
  %1773 = vmatprep.subr.mxu0 0.0
  %1774 = vmatpush1.msra.mxu0 0.0
  %1775 = vmatprep.subr.mxu0 0.0
  %1776 = vmatpush1.msra.mxu0 0.0
  %1777 = vmatprep.subr.mxu0 0.0
  %1778 = vmatpush1.msra.mxu0 0.0
  %1779 = vmatprep.subr.mxu0 0.0
  %1780 = vmatpush1.msra.mxu0 0.0
  %1781 = vmatprep.subr.mxu0 0.0
  %1782 = vmatpush1.msra.mxu0 0.0
  %1783 = vmatprep.subr.mxu0 0.0
  %1784 = vmatpush1.msra.mxu0 0.0
  %1785 = vmatprep.subr.mxu0 0.0
  %1786 = vmatpush1.msra.mxu0 0.0
  %1787 = vmatprep.subr.mxu0 0.0
  %1788 = vmatpush1.msra.mxu0 0.0
  %1789 = vmatprep.subr.mxu0 0.0
  %1790 = vmatpush1.msra.mxu0 0.0
  %1791 = vmatprep.mubr.f32.mxu0 0.0
  %1792 = vmatmul.mubr.f32.gmra.mrb[0].mxu0 %v1716
  %v1793 = vpop.f32.mrb[0].mxu0
  %v1794 = vadd.f32 0.0, %v1793
  %v1795 = vpop.f32.mrb[0].mxu0
  %1796 = vmatprep.mubr.f32.mxu0 0.0
  %1797 = vmatmul.mubr.f32.gmra.mrb[0].mxu0 %v1719
  %v1798 = vpop.f32.mrb[0].mxu0
  %v1799 = vadd.f32 0.0, %v1798
  %v1800 = vpop.f32.mrb[0].mxu0
  %1801 = vmatprep.mubr.f32.mxu0 0.0
  %1802 = vmatmul.mubr.f32.gmra.mrb[0].mxu0 %v1722
  %v1803 = vpop.f32.mrb[0].mxu0
  %v1804 = vadd.f32 0.0, %v1803
  %v1805 = vpop.f32.mrb[0].mxu0
  %1806 = vmatprep.mubr.f32.mxu0 0.0
  %1807 = vmatmul.mubr.f32.gmra.mrb[0].mxu0 %v1725
  %v1808 = vpop.f32.mrb[0].mxu0
  %v1809 = vadd.f32 0.0, %v1808
  %v1810 = vpop.f32.mrb[0].mxu0
  %1811 = vdwg.mxu0
  %v1812 = vadd.f32 %v1606, %v1794
  %v1813 = vadd.f32 %v1607, %v1799
  %v1814 = vadd.f32 %v1608, %v1804
  %v1815 = vadd.f32 %v1609, %v1809
  %s1816 = scalar_lea.vmem %s5, 256
  %v1817 = vld [vmem:[%s1816] sm:$0xff]
  %v1818 = vld [vmem:[%s1816 + $0x8] sm:$0xff]
  %v1819 = vld [vmem:[%s1816 + $0x10] sm:$0xff]
  %v1820 = vld [vmem:[%s1816 + $0x18] sm:$0xff]
  %v1822 = vsel %vm180, %v1817, 0
  %v1825 = vsel %vm180, %v1818, 0
  %v1828 = vsel %vm180, %v1819, 0
  %v1831 = vsel %vm180, %v1820, 0
  %1833 = vmatprep.subr.mxu0 0.0
  %1834 = vmatpush1.msra.mxu0 %v172
  %1835 = vmatprep.subr.mxu0 0.0
  %1836 = vmatpush1.msra.mxu0 %v173
  %1837 = vmatprep.subr.mxu0 0.0
  %1838 = vmatpush1.msra.mxu0 %v174
  %1839 = vmatprep.subr.mxu0 0.0
  %1840 = vmatpush1.msra.mxu0 %v175
  %1841 = vmatprep.subr.mxu0 0.0
  %1842 = vmatpush1.msra.mxu0 0.0
  %1843 = vmatprep.subr.mxu0 0.0
  %1844 = vmatpush1.msra.mxu0 0.0
  %1845 = vmatprep.subr.mxu0 0.0
  %1846 = vmatpush1.msra.mxu0 0.0
  %1847 = vmatprep.subr.mxu0 0.0
  %1848 = vmatpush1.msra.mxu0 0.0
  %1849 = vmatprep.subr.mxu0 0.0
  %1850 = vmatpush1.msra.mxu0 0.0
  %1851 = vmatprep.subr.mxu0 0.0
  %1852 = vmatpush1.msra.mxu0 0.0
  %1853 = vmatprep.subr.mxu0 0.0
  %1854 = vmatpush1.msra.mxu0 0.0
  %1855 = vmatprep.subr.mxu0 0.0
  %1856 = vmatpush1.msra.mxu0 0.0
  %1857 = vmatprep.subr.mxu0 0.0
  %1858 = vmatpush1.msra.mxu0 0.0
  %1859 = vmatprep.subr.mxu0 0.0
  %1860 = vmatpush1.msra.mxu0 0.0
  %1861 = vmatprep.subr.mxu0 0.0
  %1862 = vmatpush1.msra.mxu0 0.0
  %1863 = vmatprep.subr.mxu0 0.0
  %1864 = vmatpush1.msra.mxu0 0.0
  %1865 = vmatprep.subr.mxu0 0.0
  %1866 = vmatpush1.msra.mxu0 0.0
  %1867 = vmatprep.subr.mxu0 0.0
  %1868 = vmatpush1.msra.mxu0 0.0
  %1869 = vmatprep.subr.mxu0 0.0
  %1870 = vmatpush1.msra.mxu0 0.0
  %1871 = vmatprep.subr.mxu0 0.0
  %1872 = vmatpush1.msra.mxu0 0.0
  %1873 = vmatprep.subr.mxu0 0.0
  %1874 = vmatpush1.msra.mxu0 0.0
  %1875 = vmatprep.subr.mxu0 0.0
  %1876 = vmatpush1.msra.mxu0 0.0
  %1877 = vmatprep.subr.mxu0 0.0
  %1878 = vmatpush1.msra.mxu0 0.0
  %1879 = vmatprep.subr.mxu0 0.0
  %1880 = vmatpush1.msra.mxu0 0.0
  %1881 = vmatprep.subr.mxu0 0.0
  %1882 = vmatpush1.msra.mxu0 0.0
  %1883 = vmatprep.subr.mxu0 0.0
  %1884 = vmatpush1.msra.mxu0 0.0
  %1885 = vmatprep.subr.mxu0 0.0
  %1886 = vmatpush1.msra.mxu0 0.0
  %1887 = vmatprep.subr.mxu0 0.0
  %1888 = vmatpush1.msra.mxu0 0.0
  %1889 = vmatprep.subr.mxu0 0.0
  %1890 = vmatpush1.msra.mxu0 0.0
  %1891 = vmatprep.subr.mxu0 0.0
  %1892 = vmatpush1.msra.mxu0 0.0
  %1893 = vmatprep.subr.mxu0 0.0
  %1894 = vmatpush1.msra.mxu0 0.0
  %1895 = vmatprep.subr.mxu0 0.0
  %1896 = vmatpush1.msra.mxu0 0.0
  %1897 = vmatprep.mubr.f32.mxu0 0.0
  %1898 = vmatmul.mubr.f32.gmra.mrb[0].mxu0 %v1822
  %v1899 = vpop.f32.mrb[0].mxu0
  %v1900 = vadd.f32 0.0, %v1899
  %v1901 = vpop.f32.mrb[0].mxu0
  %1902 = vmatprep.mubr.f32.mxu0 0.0
  %1903 = vmatmul.mubr.f32.gmra.mrb[0].mxu0 %v1825
  %v1904 = vpop.f32.mrb[0].mxu0
  %v1905 = vadd.f32 0.0, %v1904
  %v1906 = vpop.f32.mrb[0].mxu0
  %1907 = vmatprep.mubr.f32.mxu0 0.0
  %1908 = vmatmul.mubr.f32.gmra.mrb[0].mxu0 %v1828
  %v1909 = vpop.f32.mrb[0].mxu0
  %v1910 = vadd.f32 0.0, %v1909
  %v1911 = vpop.f32.mrb[0].mxu0
  %1912 = vmatprep.mubr.f32.mxu0 0.0
  %1913 = vmatmul.mubr.f32.gmra.mrb[0].mxu0 %v1831
  %v1914 = vpop.f32.mrb[0].mxu0
  %v1915 = vadd.f32 0.0, %v1914
  %v1916 = vpop.f32.mrb[0].mxu0
  %1917 = vdwg.mxu0
  %s1918 = scalar_lea.vmem %s6, 128
  %v1919 = vld [vmem:[%s1918] sm:$0xff]
  %v1920 = vld [vmem:[%s1918 + $0x8] sm:$0xff]
  %v1922 = vsel %vm385, %v1900, 0
  %v1925 = vsel %vm385, %v1905, 0
  %v1928 = vsel %vm385, %v1910, 0
  %v1931 = vsel %vm385, %v1915, 0
  %1933 = vmatprep.subr.mxu0 0.0
  %1934 = vmatpush1.msra.mxu0 %v1919
  %1935 = vmatprep.subr.mxu0 0.0
  %1936 = vmatpush1.msra.mxu0 %v1920
  %1937 = vmatprep.subr.mxu0 0.0
  %1938 = vmatpush1.msra.mxu0 0.0
  %1939 = vmatprep.subr.mxu0 0.0
  %1940 = vmatpush1.msra.mxu0 0.0
  %1941 = vmatprep.subr.mxu0 0.0
  %1942 = vmatpush1.msra.mxu0 0.0
  %1943 = vmatprep.subr.mxu0 0.0
  %1944 = vmatpush1.msra.mxu0 0.0
  %1945 = vmatprep.subr.mxu0 0.0
  %1946 = vmatpush1.msra.mxu0 0.0
  %1947 = vmatprep.subr.mxu0 0.0
  %1948 = vmatpush1.msra.mxu0 0.0
  %1949 = vmatprep.subr.mxu0 0.0
  %1950 = vmatpush1.msra.mxu0 0.0
  %1951 = vmatprep.subr.mxu0 0.0
  %1952 = vmatpush1.msra.mxu0 0.0
  %1953 = vmatprep.subr.mxu0 0.0
  %1954 = vmatpush1.msra.mxu0 0.0
  %1955 = vmatprep.subr.mxu0 0.0
  %1956 = vmatpush1.msra.mxu0 0.0
  %1957 = vmatprep.subr.mxu0 0.0
  %1958 = vmatpush1.msra.mxu0 0.0
  %1959 = vmatprep.subr.mxu0 0.0
  %1960 = vmatpush1.msra.mxu0 0.0
  %1961 = vmatprep.subr.mxu0 0.0
  %1962 = vmatpush1.msra.mxu0 0.0
  %1963 = vmatprep.subr.mxu0 0.0
  %1964 = vmatpush1.msra.mxu0 0.0
  %1965 = vmatprep.subr.mxu0 0.0
  %1966 = vmatpush1.msra.mxu0 0.0
  %1967 = vmatprep.subr.mxu0 0.0
  %1968 = vmatpush1.msra.mxu0 0.0
  %1969 = vmatprep.subr.mxu0 0.0
  %1970 = vmatpush1.msra.mxu0 0.0
  %1971 = vmatprep.subr.mxu0 0.0
  %1972 = vmatpush1.msra.mxu0 0.0
  %1973 = vmatprep.subr.mxu0 0.0
  %1974 = vmatpush1.msra.mxu0 0.0
  %1975 = vmatprep.subr.mxu0 0.0
  %1976 = vmatpush1.msra.mxu0 0.0
  %1977 = vmatprep.subr.mxu0 0.0
  %1978 = vmatpush1.msra.mxu0 0.0
  %1979 = vmatprep.subr.mxu0 0.0
  %1980 = vmatpush1.msra.mxu0 0.0
  %1981 = vmatprep.subr.mxu0 0.0
  %1982 = vmatpush1.msra.mxu0 0.0
  %1983 = vmatprep.subr.mxu0 0.0
  %1984 = vmatpush1.msra.mxu0 0.0
  %1985 = vmatprep.subr.mxu0 0.0
  %1986 = vmatpush1.msra.mxu0 0.0
  %1987 = vmatprep.subr.mxu0 0.0
  %1988 = vmatpush1.msra.mxu0 0.0
  %1989 = vmatprep.subr.mxu0 0.0
  %1990 = vmatpush1.msra.mxu0 0.0
  %1991 = vmatprep.subr.mxu0 0.0
  %1992 = vmatpush1.msra.mxu0 0.0
  %1993 = vmatprep.subr.mxu0 0.0
  %1994 = vmatpush1.msra.mxu0 0.0
  %1995 = vmatprep.subr.mxu0 0.0
  %1996 = vmatpush1.msra.mxu0 0.0
  %1997 = vmatprep.mubr.f32.mxu0 0.0
  %1998 = vmatmul.mubr.f32.gmra.mrb[0].mxu0 %v1922
  %v1999 = vpop.f32.mrb[0].mxu0
  %v2000 = vadd.f32 0.0, %v1999
  %v2001 = vpop.f32.mrb[0].mxu0
  %2002 = vmatprep.mubr.f32.mxu0 0.0
  %2003 = vmatmul.mubr.f32.gmra.mrb[0].mxu0 %v1925
  %v2004 = vpop.f32.mrb[0].mxu0
  %v2005 = vadd.f32 0.0, %v2004
  %v2006 = vpop.f32.mrb[0].mxu0
  %2007 = vmatprep.mubr.f32.mxu0 0.0
  %2008 = vmatmul.mubr.f32.gmra.mrb[0].mxu0 %v1928
  %v2009 = vpop.f32.mrb[0].mxu0
  %v2010 = vadd.f32 0.0, %v2009
  %v2011 = vpop.f32.mrb[0].mxu0
  %2012 = vmatprep.mubr.f32.mxu0 0.0
  %2013 = vmatmul.mubr.f32.gmra.mrb[0].mxu0 %v1931
  %v2014 = vpop.f32.mrb[0].mxu0
  %v2015 = vadd.f32 0.0, %v2014
  %v2016 = vpop.f32.mrb[0].mxu0
  %2017 = vdwg.mxu0
  %v2018 = vadd.f32 %v1812, %v2000
  %v2019 = vadd.f32 %v1813, %v2005
  %v2020 = vadd.f32 %v1814, %v2010
  %v2021 = vadd.f32 %v1815, %v2015
  %v2022 = vld [vmem:[%s7] sm:$0x1]
  %v2024 = vlaneseq
  %v2025 = vshrl.u32 %v2024, 7
  %v2026 = vsub.s32 0, %v2025
  %v2027 = vrot.slane %v2022, %v2026
  %v2029 = vadd.f32 %v2018, %v2027
  %v2030 = vadd.f32 %v2019, %v2027
  %v2031 = vadd.f32 %v2020, %v2027
  %v2032 = vadd.f32 %v2021, %v2027
  %v2033 = vmax.f32 %v2029, 0.0
  %v2034 = vmax.f32 %v2030, 0.0
  %v2035 = vmax.f32 %v2031, 0.0
  %v2036 = vmax.f32 %v2032, 0.0
  %v2037 = vld [vmem:[%s8] sm:$0xff]
  %v2038 = vld [vmem:[%s8 + $0x8] sm:$0xff]
  %v2039 = vld [vmem:[%s8 + $0x10] sm:$0xff]
  %v2040 = vld [vmem:[%s8 + $0x18] sm:$0xff]
  %v2041 = vld [vmem:[%s9] sm:$0xff]
  %vm2042 = vcmask 64512
  %v2044 = vsel %vm2042, %v2037, 0
  %v2047 = vsel %vm2042, %v2038, 0
  %v2050 = vsel %vm2042, %v2039, 0
  %v2053 = vsel %vm2042, %v2040, 0
  %2055 = vmatprep.subr.mxu0 0.0
  %2056 = vmatpush1.msra.mxu0 %v2041
  %2057 = vmatprep.subr.mxu0 0.0
  %2058 = vmatpush1.msra.mxu0 0.0
  %2059 = vmatprep.subr.mxu0 0.0
  %2060 = vmatpush1.msra.mxu0 0.0
  %2061 = vmatprep.subr.mxu0 0.0
  %2062 = vmatpush1.msra.mxu0 0.0
  %2063 = vmatprep.subr.mxu0 0.0
  %2064 = vmatpush1.msra.mxu0 0.0
  %2065 = vmatprep.subr.mxu0 0.0
  %2066 = vmatpush1.msra.mxu0 0.0
  %2067 = vmatprep.subr.mxu0 0.0
  %2068 = vmatpush1.msra.mxu0 0.0
  %2069 = vmatprep.subr.mxu0 0.0
  %2070 = vmatpush1.msra.mxu0 0.0
  %2071 = vmatprep.subr.mxu0 0.0
  %2072 = vmatpush1.msra.mxu0 0.0
  %2073 = vmatprep.subr.mxu0 0.0
  %2074 = vmatpush1.msra.mxu0 0.0
  %2075 = vmatprep.subr.mxu0 0.0
  %2076 = vmatpush1.msra.mxu0 0.0
  %2077 = vmatprep.subr.mxu0 0.0
  %2078 = vmatpush1.msra.mxu0 0.0
  %2079 = vmatprep.subr.mxu0 0.0
  %2080 = vmatpush1.msra.mxu0 0.0
  %2081 = vmatprep.subr.mxu0 0.0
  %2082 = vmatpush1.msra.mxu0 0.0
  %2083 = vmatprep.subr.mxu0 0.0
  %2084 = vmatpush1.msra.mxu0 0.0
  %2085 = vmatprep.subr.mxu0 0.0
  %2086 = vmatpush1.msra.mxu0 0.0
  %2087 = vmatprep.subr.mxu0 0.0
  %2088 = vmatpush1.msra.mxu0 0.0
  %2089 = vmatprep.subr.mxu0 0.0
  %2090 = vmatpush1.msra.mxu0 0.0
  %2091 = vmatprep.subr.mxu0 0.0
  %2092 = vmatpush1.msra.mxu0 0.0
  %2093 = vmatprep.subr.mxu0 0.0
  %2094 = vmatpush1.msra.mxu0 0.0
  %2095 = vmatprep.subr.mxu0 0.0
  %2096 = vmatpush1.msra.mxu0 0.0
  %2097 = vmatprep.subr.mxu0 0.0
  %2098 = vmatpush1.msra.mxu0 0.0
  %2099 = vmatprep.subr.mxu0 0.0
  %2100 = vmatpush1.msra.mxu0 0.0
  %2101 = vmatprep.subr.mxu0 0.0
  %2102 = vmatpush1.msra.mxu0 0.0
  %2103 = vmatprep.subr.mxu0 0.0
  %2104 = vmatpush1.msra.mxu0 0.0
  %2105 = vmatprep.subr.mxu0 0.0
  %2106 = vmatpush1.msra.mxu0 0.0
  %2107 = vmatprep.subr.mxu0 0.0
  %2108 = vmatpush1.msra.mxu0 0.0
  %2109 = vmatprep.subr.mxu0 0.0
  %2110 = vmatpush1.msra.mxu0 0.0
  %2111 = vmatprep.subr.mxu0 0.0
  %2112 = vmatpush1.msra.mxu0 0.0
  %2113 = vmatprep.subr.mxu0 0.0
  %2114 = vmatpush1.msra.mxu0 0.0
  %2115 = vmatprep.subr.mxu0 0.0
  %2116 = vmatpush1.msra.mxu0 0.0
  %2117 = vmatprep.subr.mxu0 0.0
  %2118 = vmatpush1.msra.mxu0 0.0
  %2119 = vmatprep.mubr.f32.mxu0 0.0
  %2120 = vmatmul.mubr.f32.gmra.mrb[0].mxu0 %v2044
  %v2121 = vpop.f32.mrb[0].mxu0
  %v2122 = vadd.f32 0.0, %v2121
  %v2123 = vpop.f32.mrb[0].mxu0
  %2124 = vmatprep.mubr.f32.mxu0 0.0
  %2125 = vmatmul.mubr.f32.gmra.mrb[0].mxu0 %v2047
  %v2126 = vpop.f32.mrb[0].mxu0
  %v2127 = vadd.f32 0.0, %v2126
  %v2128 = vpop.f32.mrb[0].mxu0
  %2129 = vmatprep.mubr.f32.mxu0 0.0
  %2130 = vmatmul.mubr.f32.gmra.mrb[0].mxu0 %v2050
  %v2131 = vpop.f32.mrb[0].mxu0
  %v2132 = vadd.f32 0.0, %v2131
  %v2133 = vpop.f32.mrb[0].mxu0
  %2134 = vmatprep.mubr.f32.mxu0 0.0
  %2135 = vmatmul.mubr.f32.gmra.mrb[0].mxu0 %v2053
  %v2136 = vpop.f32.mrb[0].mxu0
  %v2137 = vadd.f32 0.0, %v2136
  %v2138 = vpop.f32.mrb[0].mxu0
  %2139 = vdwg.mxu0
  %v2140 = vadd.f32 %v2033, %v2122
  %v2141 = vadd.f32 %v2034, %v2127
  %v2142 = vadd.f32 %v2035, %v2132
  %v2143 = vadd.f32 %v2036, %v2137
  %v2144 = vld [vmem:[%s10] sm:$0x1]
  %v2146 = vlaneseq
  %v2147 = vshrl.u32 %v2146, 7
  %v2148 = vsub.s32 0, %v2147
  %v2149 = vrot.slane %v2144, %v2148
  %v2151 = vadd.f32 %v2140, %v2149
  %v2152 = vadd.f32 %v2141, %v2149
  %v2153 = vadd.f32 %v2142, %v2149
  %v2154 = vadd.f32 %v2143, %v2149
  %2155 = vst [vmem:[%s11] sm:$0xff] %v2151
  %2156 = vst [vmem:[%s11 + $0x8] sm:$0xff] %v2152
  %2157 = vst [vmem:[%s11 + $0x10] sm:$0xff] %v2153
  %2158 = vst [vmem:[%s11 + $0x18] sm:$0xff] %v2154
  // Predicated region
  $region46: #{resnet_forward.7} parent=0 // pred_check
    _
  $region47: #{resnet_forward.7} parent=0 // pred_check_branch
    %2160 = sbr.rel (0) target = $region49
  $region48: #{resnet_forward.7} parent=0 // pred_region
    _
  $region49: #{resnet_forward.7} parent=0 // pred_fallthru
    _
  // Predicated region
  $region50: #{resnet_forward.7} parent=0 // pred_check
    _
  $region51: #{resnet_forward.7} parent=0 // pred_check_branch
    %2162 = sbr.rel (0) target = $region53
  $region52: #{resnet_forward.7} parent=0 // pred_region
    _
  $region53: #{resnet_forward.7} parent=0 // pred_fallthru
    _

// kernel: resnet_forward.8
$region0: #{resnet_forward.8}
  #allocation0 [shape = 'u32[]', space=smem, size = 0x4, offset = 0x4, fixed_abs, tag = 'smem constant byte address 0x4 - core index']
  #allocation1 [shape = 'u32[144,128]{1,0:T(1,128)}', space=vmem, size = 0x12000, scoped, tag = 'internal scratch']
  %s0 = inlined_call_operand.vmem [shape: f32[8,256], index: 0, kind: input, shape index: {}]
  %s1 = inlined_call_operand.vmem [shape: f32[256,32], index: 1, kind: input, shape index: {}]
  %s2 = inlined_call_operand.vmem [shape: f32[1,32], index: 2, kind: input, shape index: {}]
  %s3 = inlined_call_operand.vmem [shape: f32[1,32], index: 3, kind: input, shape index: {}]
  %s4 = inlined_call_operand.vmem [shape: f32[1,32], index: 4, kind: input, shape index: {}]
  %s5 = inlined_call_operand.vmem [shape: f32[9,8,8], index: 5, kind: input, shape index: {}]
  %s6 = inlined_call_operand.vmem [shape: f32[9,32,128], index: 6, kind: input, shape index: {}]
  %s7 = inlined_call_operand.vmem [shape: f32[1,128], index: 7, kind: input, shape index: {}]
  %s8 = inlined_call_operand.vmem [shape: f32[8,16], index: 8, kind: input, shape index: {}]
  %s9 = inlined_call_operand.vmem [shape: f32[16,128], index: 9, kind: input, shape index: {}]
  %s10 = inlined_call_operand.vmem [shape: f32[1,128], index: 10, kind: input, shape index: {}]
  %s11 = inlined_call_operand.vmem [shape: f32[8,128], index: 11, kind: output, shape index: {}]
  %s12 = sld [smem:[#allocation0]]
  $region54: #{resnet_forward.8} parent=0
    _
  %s14 = ssub.s32 1, %s12
  %s15 = scalar_select 0, %s14, %s12
  // Predicated region
  $region2: #{resnet_forward.8} parent=0 // pred_check
    _
  $region3: #{resnet_forward.8} parent=0 // pred_check_branch
    %17 = sbr.rel (0) target = $region5
  $region4: #{resnet_forward.8} parent=0 // pred_region
    _
  $region5: #{resnet_forward.8} parent=0 // pred_fallthru
    _
  // Predicated region
  $region6: #{resnet_forward.8} parent=0 // pred_check
    _
  $region7: #{resnet_forward.8} parent=0 // pred_check_branch
    %19 = sbr.rel (0) target = $region9
  $region8: #{resnet_forward.8} parent=0 // pred_region
    _
  $region9: #{resnet_forward.8} parent=0 // pred_fallthru
    _
  // Predicated region
  $region10: #{resnet_forward.8} parent=0 // pred_check
    _
  $region11: #{resnet_forward.8} parent=0 // pred_check_branch
    %21 = sbr.rel (0) target = $region13
  $region12: #{resnet_forward.8} parent=0 // pred_region
    _
  $region13: #{resnet_forward.8} parent=0 // pred_fallthru
    _
  // Predicated region
  $region14: #{resnet_forward.8} parent=0 // pred_check
    _
  $region15: #{resnet_forward.8} parent=0 // pred_check_branch
    %23 = sbr.rel (0) target = $region17
  $region16: #{resnet_forward.8} parent=0 // pred_region
    _
  $region17: #{resnet_forward.8} parent=0 // pred_fallthru
    _
  // Predicated region
  $region18: #{resnet_forward.8} parent=0 // pred_check
    _
  $region19: #{resnet_forward.8} parent=0 // pred_check_branch
    %25 = sbr.rel (0) target = $region21
  $region20: #{resnet_forward.8} parent=0 // pred_region
    _
  $region21: #{resnet_forward.8} parent=0 // pred_fallthru
    _
  // Predicated region
  $region22: #{resnet_forward.8} parent=0 // pred_check
    _
  $region23: #{resnet_forward.8} parent=0 // pred_check_branch
    %27 = sbr.rel (0) target = $region25
  $region24: #{resnet_forward.8} parent=0 // pred_region
    _
  $region25: #{resnet_forward.8} parent=0 // pred_fallthru
    _
  // Predicated region
  $region26: #{resnet_forward.8} parent=0 // pred_check
    _
  $region27: #{resnet_forward.8} parent=0 // pred_check_branch
    %29 = sbr.rel (0) target = $region29
  $region28: #{resnet_forward.8} parent=0 // pred_region
    _
  $region29: #{resnet_forward.8} parent=0 // pred_fallthru
    _
  // Predicated region
  $region30: #{resnet_forward.8} parent=0 // pred_check
    _
  $region31: #{resnet_forward.8} parent=0 // pred_check_branch
    %31 = sbr.rel (0) target = $region33
  $region32: #{resnet_forward.8} parent=0 // pred_region
    _
  $region33: #{resnet_forward.8} parent=0 // pred_fallthru
    _
  // Predicated region
  $region34: #{resnet_forward.8} parent=0 // pred_check
    _
  $region35: #{resnet_forward.8} parent=0 // pred_check_branch
    %33 = sbr.rel (0) target = $region37
  $region36: #{resnet_forward.8} parent=0 // pred_region
    _
  $region37: #{resnet_forward.8} parent=0 // pred_fallthru
    _
  // Predicated region
  $region38: #{resnet_forward.8} parent=0 // pred_check
    _
  $region39: #{resnet_forward.8} parent=0 // pred_check_branch
    %35 = sbr.rel (0) target = $region41
  $region40: #{resnet_forward.8} parent=0 // pred_region
    _
  $region41: #{resnet_forward.8} parent=0 // pred_fallthru
    _
  // Predicated region
  $region42: #{resnet_forward.8} parent=0 // pred_check
    _
  $region43: #{resnet_forward.8} parent=0 // pred_check_branch
    %37 = sbr.rel (0) target = $region45
  $region44: #{resnet_forward.8} parent=0 // pred_region
    _
  $region45: #{resnet_forward.8} parent=0 // pred_fallthru
    _
  %v38 = vld [vmem:[%s0] sm:$0xff]
  %v39 = vld [vmem:[%s0 + $0x8] sm:$0xff]
  %v40 = vld [vmem:[%s1] sm:$0xff]
  %v41 = vld [vmem:[%s1 + $0x8] sm:$0xff]
  %v42 = vld [vmem:[%s1 + $0x10] sm:$0xff]
  %v43 = vld [vmem:[%s1 + $0x18] sm:$0xff]
  %v44 = vld [vmem:[%s1 + $0x20] sm:$0xff]
  %v45 = vld [vmem:[%s1 + $0x28] sm:$0xff]
  %v46 = vld [vmem:[%s1 + $0x30] sm:$0xff]
  %v47 = vld [vmem:[%s1 + $0x38] sm:$0xff]
  %v48 = vld [vmem:[%s1 + $0x40] sm:$0xff]
  %v49 = vld [vmem:[%s1 + $0x48] sm:$0xff]
  %v50 = vld [vmem:[%s1 + $0x50] sm:$0xff]
  %v51 = vld [vmem:[%s1 + $0x58] sm:$0xff]
  %v52 = vld [vmem:[%s1 + $0x60] sm:$0xff]
  %v53 = vld [vmem:[%s1 + $0x68] sm:$0xff]
  %v54 = vld [vmem:[%s1 + $0x70] sm:$0xff]
  %v55 = vld [vmem:[%s1 + $0x78] sm:$0xff]
  %v56 = vld [vmem:[%s1 + $0x80] sm:$0xff]
  %v57 = vld [vmem:[%s1 + $0x88] sm:$0xff]
  %v58 = vld [vmem:[%s1 + $0x90] sm:$0xff]
  %v59 = vld [vmem:[%s1 + $0x98] sm:$0xff]
  %v60 = vld [vmem:[%s1 + $0xa0] sm:$0xff]
  %v61 = vld [vmem:[%s1 + $0xa8] sm:$0xff]
  %v62 = vld [vmem:[%s1 + $0xb0] sm:$0xff]
  %v63 = vld [vmem:[%s1 + $0xb8] sm:$0xff]
  %v64 = vld [vmem:[%s1 + $0xc0] sm:$0xff]
  %v65 = vld [vmem:[%s1 + $0xc8] sm:$0xff]
  %v66 = vld [vmem:[%s1 + $0xd0] sm:$0xff]
  %v67 = vld [vmem:[%s1 + $0xd8] sm:$0xff]
  %v68 = vld [vmem:[%s1 + $0xe0] sm:$0xff]
  %v69 = vld [vmem:[%s1 + $0xe8] sm:$0xff]
  %v70 = vld [vmem:[%s1 + $0xf0] sm:$0xff]
  %v71 = vld [vmem:[%s1 + $0xf8] sm:$0xff]
  %v72 = vld [vmem:[%s2] sm:$0x1]
  %v74 = vlaneseq
  %v75 = vshrl.u32 %v74, 7
  %v76 = vsub.s32 0, %v75
  %v77 = vrot.slane %v72, %v76
  %79 = vmatprep.subr.mxu0 0.0
  %80 = vmatpush1.msra.mxu0 %v40
  %81 = vmatprep.subr.mxu0 0.0
  %82 = vmatpush1.msra.mxu0 %v41
  %83 = vmatprep.subr.mxu0 0.0
  %84 = vmatpush1.msra.mxu0 %v42
  %85 = vmatprep.subr.mxu0 0.0
  %86 = vmatpush1.msra.mxu0 %v43
  %87 = vmatprep.subr.mxu0 0.0
  %88 = vmatpush1.msra.mxu0 %v44
  %89 = vmatprep.subr.mxu0 0.0
  %90 = vmatpush1.msra.mxu0 %v45
  %91 = vmatprep.subr.mxu0 0.0
  %92 = vmatpush1.msra.mxu0 %v46
  %93 = vmatprep.subr.mxu0 0.0
  %94 = vmatpush1.msra.mxu0 %v47
  %95 = vmatprep.subr.mxu0 0.0
  %96 = vmatpush1.msra.mxu0 %v48
  %97 = vmatprep.subr.mxu0 0.0
  %98 = vmatpush1.msra.mxu0 %v49
  %99 = vmatprep.subr.mxu0 0.0
  %100 = vmatpush1.msra.mxu0 %v50
  %101 = vmatprep.subr.mxu0 0.0
  %102 = vmatpush1.msra.mxu0 %v51
  %103 = vmatprep.subr.mxu0 0.0
  %104 = vmatpush1.msra.mxu0 %v52
  %105 = vmatprep.subr.mxu0 0.0
  %106 = vmatpush1.msra.mxu0 %v53
  %107 = vmatprep.subr.mxu0 0.0
  %108 = vmatpush1.msra.mxu0 %v54
  %109 = vmatprep.subr.mxu0 0.0
  %110 = vmatpush1.msra.mxu0 %v55
  %111 = vmatprep.subr.mxu0 0.0
  %112 = vmatpush1.msra.mxu0 %v56
  %113 = vmatprep.subr.mxu0 0.0
  %114 = vmatpush1.msra.mxu0 %v57
  %115 = vmatprep.subr.mxu0 0.0
  %116 = vmatpush1.msra.mxu0 %v58
  %117 = vmatprep.subr.mxu0 0.0
  %118 = vmatpush1.msra.mxu0 %v59
  %119 = vmatprep.subr.mxu0 0.0
  %120 = vmatpush1.msra.mxu0 %v60
  %121 = vmatprep.subr.mxu0 0.0
  %122 = vmatpush1.msra.mxu0 %v61
  %123 = vmatprep.subr.mxu0 0.0
  %124 = vmatpush1.msra.mxu0 %v62
  %125 = vmatprep.subr.mxu0 0.0
  %126 = vmatpush1.msra.mxu0 %v63
  %127 = vmatprep.subr.mxu0 0.0
  %128 = vmatpush1.msra.mxu0 %v64
  %129 = vmatprep.subr.mxu0 0.0
  %130 = vmatpush1.msra.mxu0 %v65
  %131 = vmatprep.subr.mxu0 0.0
  %132 = vmatpush1.msra.mxu0 %v66
  %133 = vmatprep.subr.mxu0 0.0
  %134 = vmatpush1.msra.mxu0 %v67
  %135 = vmatprep.subr.mxu0 0.0
  %136 = vmatpush1.msra.mxu0 %v68
  %137 = vmatprep.subr.mxu0 0.0
  %138 = vmatpush1.msra.mxu0 %v69
  %139 = vmatprep.subr.mxu0 0.0
  %140 = vmatpush1.msra.mxu0 %v70
  %141 = vmatprep.subr.mxu0 0.0
  %142 = vmatpush1.msra.mxu0 %v71
  %143 = vmatprep.mubr.f32.mxu0 %v39
  %144 = vmatmul.mubr.f32.gmra.mrb[0].mxu0 %v38
  %v145 = vpop.f32.mrb[0].mxu0
  %v146 = vadd.f32 %v77, %v145
  %v147 = vpop.f32.mrb[0].mxu0
  %148 = vdwg.mxu0
  %v149 = vmax.f32 %v146, 0.0
  %v150 = vld [vmem:[%s3] sm:$0x1]
  %v152 = vlaneseq
  %v153 = vshrl.u32 %v152, 7
  %v154 = vsub.s32 0, %v153
  %v155 = vrot.slane %v150, %v154
  %v157 = vmul.f32 %v149, %v155
  %v158 = vld [vmem:[%s4] sm:$0x1]
  %v160 = vlaneseq
  %v161 = vshrl.u32 %v160, 7
  %v162 = vsub.s32 0, %v161
  %v163 = vrot.slane %v158, %v162
  %v165 = vadd.f32 %v157, %v163
  %v166 = vld [vmem:[%s5] sm:$0xff]
  %vm167 = vcmask 64512
  %v169 = vsel %vm167, %v166, 0
  %171 = vmatprep.subr.mxu0 0.0
  %172 = vmatpush1.msra.mxu0 %v165
  %173 = vmatprep.subr.mxu0 0.0
  %174 = vmatpush1.msra.mxu0 0.0
  %175 = vmatprep.subr.mxu0 0.0
  %176 = vmatpush1.msra.mxu0 0.0
  %177 = vmatprep.subr.mxu0 0.0
  %178 = vmatpush1.msra.mxu0 0.0
  %179 = vmatprep.subr.mxu0 0.0
  %180 = vmatpush1.msra.mxu0 0.0
  %181 = vmatprep.subr.mxu0 0.0
  %182 = vmatpush1.msra.mxu0 0.0
  %183 = vmatprep.subr.mxu0 0.0
  %184 = vmatpush1.msra.mxu0 0.0
  %185 = vmatprep.subr.mxu0 0.0
  %186 = vmatpush1.msra.mxu0 0.0
  %187 = vmatprep.subr.mxu0 0.0
  %188 = vmatpush1.msra.mxu0 0.0
  %189 = vmatprep.subr.mxu0 0.0
  %190 = vmatpush1.msra.mxu0 0.0
  %191 = vmatprep.subr.mxu0 0.0
  %192 = vmatpush1.msra.mxu0 0.0
  %193 = vmatprep.subr.mxu0 0.0
  %194 = vmatpush1.msra.mxu0 0.0
  %195 = vmatprep.subr.mxu0 0.0
  %196 = vmatpush1.msra.mxu0 0.0
  %197 = vmatprep.subr.mxu0 0.0
  %198 = vmatpush1.msra.mxu0 0.0
  %199 = vmatprep.subr.mxu0 0.0
  %200 = vmatpush1.msra.mxu0 0.0
  %201 = vmatprep.subr.mxu0 0.0
  %202 = vmatpush1.msra.mxu0 0.0
  %203 = vmatprep.subr.mxu0 0.0
  %204 = vmatpush1.msra.mxu0 0.0
  %205 = vmatprep.subr.mxu0 0.0
  %206 = vmatpush1.msra.mxu0 0.0
  %207 = vmatprep.subr.mxu0 0.0
  %208 = vmatpush1.msra.mxu0 0.0
  %209 = vmatprep.subr.mxu0 0.0
  %210 = vmatpush1.msra.mxu0 0.0
  %211 = vmatprep.subr.mxu0 0.0
  %212 = vmatpush1.msra.mxu0 0.0
  %213 = vmatprep.subr.mxu0 0.0
  %214 = vmatpush1.msra.mxu0 0.0
  %215 = vmatprep.subr.mxu0 0.0
  %216 = vmatpush1.msra.mxu0 0.0
  %217 = vmatprep.subr.mxu0 0.0
  %218 = vmatpush1.msra.mxu0 0.0
  %219 = vmatprep.subr.mxu0 0.0
  %220 = vmatpush1.msra.mxu0 0.0
  %221 = vmatprep.subr.mxu0 0.0
  %222 = vmatpush1.msra.mxu0 0.0
  %223 = vmatprep.subr.mxu0 0.0
  %224 = vmatpush1.msra.mxu0 0.0
  %225 = vmatprep.subr.mxu0 0.0
  %226 = vmatpush1.msra.mxu0 0.0
  %227 = vmatprep.subr.mxu0 0.0
  %228 = vmatpush1.msra.mxu0 0.0
  %229 = vmatprep.subr.mxu0 0.0
  %230 = vmatpush1.msra.mxu0 0.0
  %231 = vmatprep.subr.mxu0 0.0
  %232 = vmatpush1.msra.mxu0 0.0
  %233 = vmatprep.subr.mxu0 0.0
  %234 = vmatpush1.msra.mxu0 0.0
  %235 = vmatprep.mubr.f32.mxu0 0.0
  %236 = vmatmul.mubr.f32.gmra.mrb[0].mxu0 %v169
  %v237 = vpop.f32.mrb[0].mxu0
  %v238 = vadd.f32 0.0, %v237
  %v239 = vpop.f32.mrb[0].mxu0
  %240 = vdwg.mxu0
  %v241 = vld [vmem:[%s6] sm:$0xff]
  %v242 = vld [vmem:[%s6 + $0x8] sm:$0xff]
  %v243 = vld [vmem:[%s6 + $0x10] sm:$0xff]
  %v244 = vld [vmem:[%s6 + $0x18] sm:$0xff]
  %s245 = scalar_lea.vmem %s5, 8
  %v246 = vld [vmem:[%s245] sm:$0xff]
  %v248 = vsel %vm167, %v246, 0
  %250 = vmatprep.subr.mxu0 0.0
  %251 = vmatpush1.msra.mxu0 %v165
  %252 = vmatprep.subr.mxu0 0.0
  %253 = vmatpush1.msra.mxu0 0.0
  %254 = vmatprep.subr.mxu0 0.0
  %255 = vmatpush1.msra.mxu0 0.0
  %256 = vmatprep.subr.mxu0 0.0
  %257 = vmatpush1.msra.mxu0 0.0
  %258 = vmatprep.subr.mxu0 0.0
  %259 = vmatpush1.msra.mxu0 0.0
  %260 = vmatprep.subr.mxu0 0.0
  %261 = vmatpush1.msra.mxu0 0.0
  %262 = vmatprep.subr.mxu0 0.0
  %263 = vmatpush1.msra.mxu0 0.0
  %264 = vmatprep.subr.mxu0 0.0
  %265 = vmatpush1.msra.mxu0 0.0
  %266 = vmatprep.subr.mxu0 0.0
  %267 = vmatpush1.msra.mxu0 0.0
  %268 = vmatprep.subr.mxu0 0.0
  %269 = vmatpush1.msra.mxu0 0.0
  %270 = vmatprep.subr.mxu0 0.0
  %271 = vmatpush1.msra.mxu0 0.0
  %272 = vmatprep.subr.mxu0 0.0
  %273 = vmatpush1.msra.mxu0 0.0
  %274 = vmatprep.subr.mxu0 0.0
  %275 = vmatpush1.msra.mxu0 0.0
  %276 = vmatprep.subr.mxu0 0.0
  %277 = vmatpush1.msra.mxu0 0.0
  %278 = vmatprep.subr.mxu0 0.0
  %279 = vmatpush1.msra.mxu0 0.0
  %280 = vmatprep.subr.mxu0 0.0
  %281 = vmatpush1.msra.mxu0 0.0
  %282 = vmatprep.subr.mxu0 0.0
  %283 = vmatpush1.msra.mxu0 0.0
  %284 = vmatprep.subr.mxu0 0.0
  %285 = vmatpush1.msra.mxu0 0.0
  %286 = vmatprep.subr.mxu0 0.0
  %287 = vmatpush1.msra.mxu0 0.0
  %288 = vmatprep.subr.mxu0 0.0
  %289 = vmatpush1.msra.mxu0 0.0
  %290 = vmatprep.subr.mxu0 0.0
  %291 = vmatpush1.msra.mxu0 0.0
  %292 = vmatprep.subr.mxu0 0.0
  %293 = vmatpush1.msra.mxu0 0.0
  %294 = vmatprep.subr.mxu0 0.0
  %295 = vmatpush1.msra.mxu0 0.0
  %296 = vmatprep.subr.mxu0 0.0
  %297 = vmatpush1.msra.mxu0 0.0
  %298 = vmatprep.subr.mxu0 0.0
  %299 = vmatpush1.msra.mxu0 0.0
  %300 = vmatprep.subr.mxu0 0.0
  %301 = vmatpush1.msra.mxu0 0.0
  %302 = vmatprep.subr.mxu0 0.0
  %303 = vmatpush1.msra.mxu0 0.0
  %304 = vmatprep.subr.mxu0 0.0
  %305 = vmatpush1.msra.mxu0 0.0
  %306 = vmatprep.subr.mxu0 0.0
  %307 = vmatpush1.msra.mxu0 0.0
  %308 = vmatprep.subr.mxu0 0.0
  %309 = vmatpush1.msra.mxu0 0.0
  %310 = vmatprep.subr.mxu0 0.0
  %311 = vmatpush1.msra.mxu0 0.0
  %312 = vmatprep.subr.mxu0 0.0
  %313 = vmatpush1.msra.mxu0 0.0
  %314 = vmatprep.mubr.f32.mxu0 0.0
  %315 = vmatmul.mubr.f32.gmra.mrb[0].mxu0 %v248
  %v316 = vpop.f32.mrb[0].mxu0
  %v317 = vadd.f32 0.0, %v316
  %v318 = vpop.f32.mrb[0].mxu0
  %319 = vdwg.mxu0
  %s320 = scalar_lea.vmem %s6, 32
  %v321 = vld [vmem:[%s320] sm:$0xff]
  %v322 = vld [vmem:[%s320 + $0x8] sm:$0xff]
  %v323 = vld [vmem:[%s320 + $0x10] sm:$0xff]
  %v324 = vld [vmem:[%s320 + $0x18] sm:$0xff]
  %vm325 = vcmask 261120
  %v327 = vsel %vm325, %v317, 0
  %329 = vmatprep.subr.mxu0 0.0
  %330 = vmatpush1.msra.mxu0 %v321
  %331 = vmatprep.subr.mxu0 0.0
  %332 = vmatpush1.msra.mxu0 %v322
  %333 = vmatprep.subr.mxu0 0.0
  %334 = vmatpush1.msra.mxu0 %v323
  %335 = vmatprep.subr.mxu0 0.0
  %336 = vmatpush1.msra.mxu0 %v324
  %337 = vmatprep.subr.mxu0 0.0
  %338 = vmatpush1.msra.mxu0 0.0
  %339 = vmatprep.subr.mxu0 0.0
  %340 = vmatpush1.msra.mxu0 0.0
  %341 = vmatprep.subr.mxu0 0.0
  %342 = vmatpush1.msra.mxu0 0.0
  %343 = vmatprep.subr.mxu0 0.0
  %344 = vmatpush1.msra.mxu0 0.0
  %345 = vmatprep.subr.mxu0 0.0
  %346 = vmatpush1.msra.mxu0 0.0
  %347 = vmatprep.subr.mxu0 0.0
  %348 = vmatpush1.msra.mxu0 0.0
  %349 = vmatprep.subr.mxu0 0.0
  %350 = vmatpush1.msra.mxu0 0.0
  %351 = vmatprep.subr.mxu0 0.0
  %352 = vmatpush1.msra.mxu0 0.0
  %353 = vmatprep.subr.mxu0 0.0
  %354 = vmatpush1.msra.mxu0 0.0
  %355 = vmatprep.subr.mxu0 0.0
  %356 = vmatpush1.msra.mxu0 0.0
  %357 = vmatprep.subr.mxu0 0.0
  %358 = vmatpush1.msra.mxu0 0.0
  %359 = vmatprep.subr.mxu0 0.0
  %360 = vmatpush1.msra.mxu0 0.0
  %361 = vmatprep.subr.mxu0 0.0
  %362 = vmatpush1.msra.mxu0 0.0
  %363 = vmatprep.subr.mxu0 0.0
  %364 = vmatpush1.msra.mxu0 0.0
  %365 = vmatprep.subr.mxu0 0.0
  %366 = vmatpush1.msra.mxu0 0.0
  %367 = vmatprep.subr.mxu0 0.0
  %368 = vmatpush1.msra.mxu0 0.0
  %369 = vmatprep.subr.mxu0 0.0
  %370 = vmatpush1.msra.mxu0 0.0
  %371 = vmatprep.subr.mxu0 0.0
  %372 = vmatpush1.msra.mxu0 0.0
  %373 = vmatprep.subr.mxu0 0.0
  %374 = vmatpush1.msra.mxu0 0.0
  %375 = vmatprep.subr.mxu0 0.0
  %376 = vmatpush1.msra.mxu0 0.0
  %377 = vmatprep.subr.mxu0 0.0
  %378 = vmatpush1.msra.mxu0 0.0
  %379 = vmatprep.subr.mxu0 0.0
  %380 = vmatpush1.msra.mxu0 0.0
  %381 = vmatprep.subr.mxu0 0.0
  %382 = vmatpush1.msra.mxu0 0.0
  %383 = vmatprep.subr.mxu0 0.0
  %384 = vmatpush1.msra.mxu0 0.0
  %385 = vmatprep.subr.mxu0 0.0
  %386 = vmatpush1.msra.mxu0 0.0
  %387 = vmatprep.subr.mxu0 0.0
  %388 = vmatpush1.msra.mxu0 0.0
  %389 = vmatprep.subr.mxu0 0.0
  %390 = vmatpush1.msra.mxu0 0.0
  %391 = vmatprep.subr.mxu0 0.0
  %392 = vmatpush1.msra.mxu0 0.0
  %393 = vmatprep.mubr.f32.mxu0 0.0
  %394 = vmatmul.mubr.f32.gmra.mrb[0].mxu0 %v327
  %v395 = vpop.f32.mrb[0].mxu0
  %v396 = vadd.f32 0.0, %v395
  %v397 = vpop.f32.mrb[0].mxu0
  %398 = vdwg.mxu0
  %v400 = vsel %vm325, %v238, 0
  %402 = vmatprep.subr.mxu0 0.0
  %403 = vmatpush1.msra.mxu0 %v241
  %404 = vmatprep.subr.mxu0 0.0
  %405 = vmatpush1.msra.mxu0 %v242
  %406 = vmatprep.subr.mxu0 0.0
  %407 = vmatpush1.msra.mxu0 %v243
  %408 = vmatprep.subr.mxu0 0.0
  %409 = vmatpush1.msra.mxu0 %v244
  %410 = vmatprep.subr.mxu0 0.0
  %411 = vmatpush1.msra.mxu0 0.0
  %412 = vmatprep.subr.mxu0 0.0
  %413 = vmatpush1.msra.mxu0 0.0
  %414 = vmatprep.subr.mxu0 0.0
  %415 = vmatpush1.msra.mxu0 0.0
  %416 = vmatprep.subr.mxu0 0.0
  %417 = vmatpush1.msra.mxu0 0.0
  %418 = vmatprep.subr.mxu0 0.0
  %419 = vmatpush1.msra.mxu0 0.0
  %420 = vmatprep.subr.mxu0 0.0
  %421 = vmatpush1.msra.mxu0 0.0
  %422 = vmatprep.subr.mxu0 0.0
  %423 = vmatpush1.msra.mxu0 0.0
  %424 = vmatprep.subr.mxu0 0.0
  %425 = vmatpush1.msra.mxu0 0.0
  %426 = vmatprep.subr.mxu0 0.0
  %427 = vmatpush1.msra.mxu0 0.0
  %428 = vmatprep.subr.mxu0 0.0
  %429 = vmatpush1.msra.mxu0 0.0
  %430 = vmatprep.subr.mxu0 0.0
  %431 = vmatpush1.msra.mxu0 0.0
  %432 = vmatprep.subr.mxu0 0.0
  %433 = vmatpush1.msra.mxu0 0.0
  %434 = vmatprep.subr.mxu0 0.0
  %435 = vmatpush1.msra.mxu0 0.0
  %436 = vmatprep.subr.mxu0 0.0
  %437 = vmatpush1.msra.mxu0 0.0
  %438 = vmatprep.subr.mxu0 0.0
  %439 = vmatpush1.msra.mxu0 0.0
  %440 = vmatprep.subr.mxu0 0.0
  %441 = vmatpush1.msra.mxu0 0.0
  %442 = vmatprep.subr.mxu0 0.0
  %443 = vmatpush1.msra.mxu0 0.0
  %444 = vmatprep.subr.mxu0 0.0
  %445 = vmatpush1.msra.mxu0 0.0
  %446 = vmatprep.subr.mxu0 0.0
  %447 = vmatpush1.msra.mxu0 0.0
  %448 = vmatprep.subr.mxu0 0.0
  %449 = vmatpush1.msra.mxu0 0.0
  %450 = vmatprep.subr.mxu0 0.0
  %451 = vmatpush1.msra.mxu0 0.0
  %452 = vmatprep.subr.mxu0 0.0
  %453 = vmatpush1.msra.mxu0 0.0
  %454 = vmatprep.subr.mxu0 0.0
  %455 = vmatpush1.msra.mxu0 0.0
  %456 = vmatprep.subr.mxu0 0.0
  %457 = vmatpush1.msra.mxu0 0.0
  %458 = vmatprep.subr.mxu0 0.0
  %459 = vmatpush1.msra.mxu0 0.0
  %460 = vmatprep.subr.mxu0 0.0
  %461 = vmatpush1.msra.mxu0 0.0
  %462 = vmatprep.subr.mxu0 0.0
  %463 = vmatpush1.msra.mxu0 0.0
  %464 = vmatprep.subr.mxu0 0.0
  %465 = vmatpush1.msra.mxu0 0.0
  %466 = vmatprep.mubr.f32.mxu0 0.0
  %467 = vmatmul.mubr.f32.gmra.mrb[0].mxu0 %v400
  %v468 = vpop.f32.mrb[0].mxu0
  %v469 = vadd.f32 %v396, %v468
  %v470 = vpop.f32.mrb[0].mxu0
  %471 = vdwg.mxu0
  %s472 = scalar_lea.vmem %s5, 16
  %v473 = vld [vmem:[%s472] sm:$0xff]
  %v475 = vsel %vm167, %v473, 0
  %477 = vmatprep.subr.mxu0 0.0
  %478 = vmatpush1.msra.mxu0 %v165
  %479 = vmatprep.subr.mxu0 0.0
  %480 = vmatpush1.msra.mxu0 0.0
  %481 = vmatprep.subr.mxu0 0.0
  %482 = vmatpush1.msra.mxu0 0.0
  %483 = vmatprep.subr.mxu0 0.0
  %484 = vmatpush1.msra.mxu0 0.0
  %485 = vmatprep.subr.mxu0 0.0
  %486 = vmatpush1.msra.mxu0 0.0
  %487 = vmatprep.subr.mxu0 0.0
  %488 = vmatpush1.msra.mxu0 0.0
  %489 = vmatprep.subr.mxu0 0.0
  %490 = vmatpush1.msra.mxu0 0.0
  %491 = vmatprep.subr.mxu0 0.0
  %492 = vmatpush1.msra.mxu0 0.0
  %493 = vmatprep.subr.mxu0 0.0
  %494 = vmatpush1.msra.mxu0 0.0
  %495 = vmatprep.subr.mxu0 0.0
  %496 = vmatpush1.msra.mxu0 0.0
  %497 = vmatprep.subr.mxu0 0.0
  %498 = vmatpush1.msra.mxu0 0.0
  %499 = vmatprep.subr.mxu0 0.0
  %500 = vmatpush1.msra.mxu0 0.0
  %501 = vmatprep.subr.mxu0 0.0
  %502 = vmatpush1.msra.mxu0 0.0
  %503 = vmatprep.subr.mxu0 0.0
  %504 = vmatpush1.msra.mxu0 0.0
  %505 = vmatprep.subr.mxu0 0.0
  %506 = vmatpush1.msra.mxu0 0.0
  %507 = vmatprep.subr.mxu0 0.0
  %508 = vmatpush1.msra.mxu0 0.0
  %509 = vmatprep.subr.mxu0 0.0
  %510 = vmatpush1.msra.mxu0 0.0
  %511 = vmatprep.subr.mxu0 0.0
  %512 = vmatpush1.msra.mxu0 0.0
  %513 = vmatprep.subr.mxu0 0.0
  %514 = vmatpush1.msra.mxu0 0.0
  %515 = vmatprep.subr.mxu0 0.0
  %516 = vmatpush1.msra.mxu0 0.0
  %517 = vmatprep.subr.mxu0 0.0
  %518 = vmatpush1.msra.mxu0 0.0
  %519 = vmatprep.subr.mxu0 0.0
  %520 = vmatpush1.msra.mxu0 0.0
  %521 = vmatprep.subr.mxu0 0.0
  %522 = vmatpush1.msra.mxu0 0.0
  %523 = vmatprep.subr.mxu0 0.0
  %524 = vmatpush1.msra.mxu0 0.0
  %525 = vmatprep.subr.mxu0 0.0
  %526 = vmatpush1.msra.mxu0 0.0
  %527 = vmatprep.subr.mxu0 0.0
  %528 = vmatpush1.msra.mxu0 0.0
  %529 = vmatprep.subr.mxu0 0.0
  %530 = vmatpush1.msra.mxu0 0.0
  %531 = vmatprep.subr.mxu0 0.0
  %532 = vmatpush1.msra.mxu0 0.0
  %533 = vmatprep.subr.mxu0 0.0
  %534 = vmatpush1.msra.mxu0 0.0
  %535 = vmatprep.subr.mxu0 0.0
  %536 = vmatpush1.msra.mxu0 0.0
  %537 = vmatprep.subr.mxu0 0.0
  %538 = vmatpush1.msra.mxu0 0.0
  %539 = vmatprep.subr.mxu0 0.0
  %540 = vmatpush1.msra.mxu0 0.0
  %541 = vmatprep.mubr.f32.mxu0 0.0
  %542 = vmatmul.mubr.f32.gmra.mrb[0].mxu0 %v475
  %v543 = vpop.f32.mrb[0].mxu0
  %v544 = vadd.f32 0.0, %v543
  %v545 = vpop.f32.mrb[0].mxu0
  %546 = vdwg.mxu0
  %s547 = scalar_lea.vmem %s6, 64
  %v548 = vld [vmem:[%s547] sm:$0xff]
  %v549 = vld [vmem:[%s547 + $0x8] sm:$0xff]
  %v550 = vld [vmem:[%s547 + $0x10] sm:$0xff]
  %v551 = vld [vmem:[%s547 + $0x18] sm:$0xff]
  %v553 = vsel %vm325, %v544, 0
  %555 = vmatprep.subr.mxu0 0.0
  %556 = vmatpush1.msra.mxu0 %v548
  %557 = vmatprep.subr.mxu0 0.0
  %558 = vmatpush1.msra.mxu0 %v549
  %559 = vmatprep.subr.mxu0 0.0
  %560 = vmatpush1.msra.mxu0 %v550
  %561 = vmatprep.subr.mxu0 0.0
  %562 = vmatpush1.msra.mxu0 %v551
  %563 = vmatprep.subr.mxu0 0.0
  %564 = vmatpush1.msra.mxu0 0.0
  %565 = vmatprep.subr.mxu0 0.0
  %566 = vmatpush1.msra.mxu0 0.0
  %567 = vmatprep.subr.mxu0 0.0
  %568 = vmatpush1.msra.mxu0 0.0
  %569 = vmatprep.subr.mxu0 0.0
  %570 = vmatpush1.msra.mxu0 0.0
  %571 = vmatprep.subr.mxu0 0.0
  %572 = vmatpush1.msra.mxu0 0.0
  %573 = vmatprep.subr.mxu0 0.0
  %574 = vmatpush1.msra.mxu0 0.0
  %575 = vmatprep.subr.mxu0 0.0
  %576 = vmatpush1.msra.mxu0 0.0
  %577 = vmatprep.subr.mxu0 0.0
  %578 = vmatpush1.msra.mxu0 0.0
  %579 = vmatprep.subr.mxu0 0.0
  %580 = vmatpush1.msra.mxu0 0.0
  %581 = vmatprep.subr.mxu0 0.0
  %582 = vmatpush1.msra.mxu0 0.0
  %583 = vmatprep.subr.mxu0 0.0
  %584 = vmatpush1.msra.mxu0 0.0
  %585 = vmatprep.subr.mxu0 0.0
  %586 = vmatpush1.msra.mxu0 0.0
  %587 = vmatprep.subr.mxu0 0.0
  %588 = vmatpush1.msra.mxu0 0.0
  %589 = vmatprep.subr.mxu0 0.0
  %590 = vmatpush1.msra.mxu0 0.0
  %591 = vmatprep.subr.mxu0 0.0
  %592 = vmatpush1.msra.mxu0 0.0
  %593 = vmatprep.subr.mxu0 0.0
  %594 = vmatpush1.msra.mxu0 0.0
  %595 = vmatprep.subr.mxu0 0.0
  %596 = vmatpush1.msra.mxu0 0.0
  %597 = vmatprep.subr.mxu0 0.0
  %598 = vmatpush1.msra.mxu0 0.0
  %599 = vmatprep.subr.mxu0 0.0
  %600 = vmatpush1.msra.mxu0 0.0
  %601 = vmatprep.subr.mxu0 0.0
  %602 = vmatpush1.msra.mxu0 0.0
  %603 = vmatprep.subr.mxu0 0.0
  %604 = vmatpush1.msra.mxu0 0.0
  %605 = vmatprep.subr.mxu0 0.0
  %606 = vmatpush1.msra.mxu0 0.0
  %607 = vmatprep.subr.mxu0 0.0
  %608 = vmatpush1.msra.mxu0 0.0
  %609 = vmatprep.subr.mxu0 0.0
  %610 = vmatpush1.msra.mxu0 0.0
  %611 = vmatprep.subr.mxu0 0.0
  %612 = vmatpush1.msra.mxu0 0.0
  %613 = vmatprep.subr.mxu0 0.0
  %614 = vmatpush1.msra.mxu0 0.0
  %615 = vmatprep.subr.mxu0 0.0
  %616 = vmatpush1.msra.mxu0 0.0
  %617 = vmatprep.subr.mxu0 0.0
  %618 = vmatpush1.msra.mxu0 0.0
  %619 = vmatprep.mubr.f32.mxu0 0.0
  %620 = vmatmul.mubr.f32.gmra.mrb[0].mxu0 %v553
  %v621 = vpop.f32.mrb[0].mxu0
  %v622 = vadd.f32 0.0, %v621
  %v623 = vpop.f32.mrb[0].mxu0
  %624 = vdwg.mxu0
  %v625 = vadd.f32 %v469, %v622
  %s626 = scalar_lea.vmem %s5, 24
  %v627 = vld [vmem:[%s626] sm:$0xff]
  %v629 = vsel %vm167, %v627, 0
  %631 = vmatprep.subr.mxu0 0.0
  %632 = vmatpush1.msra.mxu0 %v165
  %633 = vmatprep.subr.mxu0 0.0
  %634 = vmatpush1.msra.mxu0 0.0
  %635 = vmatprep.subr.mxu0 0.0
  %636 = vmatpush1.msra.mxu0 0.0
  %637 = vmatprep.subr.mxu0 0.0
  %638 = vmatpush1.msra.mxu0 0.0
  %639 = vmatprep.subr.mxu0 0.0
  %640 = vmatpush1.msra.mxu0 0.0
  %641 = vmatprep.subr.mxu0 0.0
  %642 = vmatpush1.msra.mxu0 0.0
  %643 = vmatprep.subr.mxu0 0.0
  %644 = vmatpush1.msra.mxu0 0.0
  %645 = vmatprep.subr.mxu0 0.0
  %646 = vmatpush1.msra.mxu0 0.0
  %647 = vmatprep.subr.mxu0 0.0
  %648 = vmatpush1.msra.mxu0 0.0
  %649 = vmatprep.subr.mxu0 0.0
  %650 = vmatpush1.msra.mxu0 0.0
  %651 = vmatprep.subr.mxu0 0.0
  %652 = vmatpush1.msra.mxu0 0.0
  %653 = vmatprep.subr.mxu0 0.0
  %654 = vmatpush1.msra.mxu0 0.0
  %655 = vmatprep.subr.mxu0 0.0
  %656 = vmatpush1.msra.mxu0 0.0
  %657 = vmatprep.subr.mxu0 0.0
  %658 = vmatpush1.msra.mxu0 0.0
  %659 = vmatprep.subr.mxu0 0.0
  %660 = vmatpush1.msra.mxu0 0.0
  %661 = vmatprep.subr.mxu0 0.0
  %662 = vmatpush1.msra.mxu0 0.0
  %663 = vmatprep.subr.mxu0 0.0
  %664 = vmatpush1.msra.mxu0 0.0
  %665 = vmatprep.subr.mxu0 0.0
  %666 = vmatpush1.msra.mxu0 0.0
  %667 = vmatprep.subr.mxu0 0.0
  %668 = vmatpush1.msra.mxu0 0.0
  %669 = vmatprep.subr.mxu0 0.0
  %670 = vmatpush1.msra.mxu0 0.0
  %671 = vmatprep.subr.mxu0 0.0
  %672 = vmatpush1.msra.mxu0 0.0
  %673 = vmatprep.subr.mxu0 0.0
  %674 = vmatpush1.msra.mxu0 0.0
  %675 = vmatprep.subr.mxu0 0.0
  %676 = vmatpush1.msra.mxu0 0.0
  %677 = vmatprep.subr.mxu0 0.0
  %678 = vmatpush1.msra.mxu0 0.0
  %679 = vmatprep.subr.mxu0 0.0
  %680 = vmatpush1.msra.mxu0 0.0
  %681 = vmatprep.subr.mxu0 0.0
  %682 = vmatpush1.msra.mxu0 0.0
  %683 = vmatprep.subr.mxu0 0.0
  %684 = vmatpush1.msra.mxu0 0.0
  %685 = vmatprep.subr.mxu0 0.0
  %686 = vmatpush1.msra.mxu0 0.0
  %687 = vmatprep.subr.mxu0 0.0
  %688 = vmatpush1.msra.mxu0 0.0
  %689 = vmatprep.subr.mxu0 0.0
  %690 = vmatpush1.msra.mxu0 0.0
  %691 = vmatprep.subr.mxu0 0.0
  %692 = vmatpush1.msra.mxu0 0.0
  %693 = vmatprep.subr.mxu0 0.0
  %694 = vmatpush1.msra.mxu0 0.0
  %695 = vmatprep.mubr.f32.mxu0 0.0
  %696 = vmatmul.mubr.f32.gmra.mrb[0].mxu0 %v629
  %v697 = vpop.f32.mrb[0].mxu0
  %v698 = vadd.f32 0.0, %v697
  %v699 = vpop.f32.mrb[0].mxu0
  %700 = vdwg.mxu0
  %s701 = scalar_lea.vmem %s6, 96
  %v702 = vld [vmem:[%s701] sm:$0xff]
  %v703 = vld [vmem:[%s701 + $0x8] sm:$0xff]
  %v704 = vld [vmem:[%s701 + $0x10] sm:$0xff]
  %v705 = vld [vmem:[%s701 + $0x18] sm:$0xff]
  %v707 = vsel %vm325, %v698, 0
  %709 = vmatprep.subr.mxu0 0.0
  %710 = vmatpush1.msra.mxu0 %v702
  %711 = vmatprep.subr.mxu0 0.0
  %712 = vmatpush1.msra.mxu0 %v703
  %713 = vmatprep.subr.mxu0 0.0
  %714 = vmatpush1.msra.mxu0 %v704
  %715 = vmatprep.subr.mxu0 0.0
  %716 = vmatpush1.msra.mxu0 %v705
  %717 = vmatprep.subr.mxu0 0.0
  %718 = vmatpush1.msra.mxu0 0.0
  %719 = vmatprep.subr.mxu0 0.0
  %720 = vmatpush1.msra.mxu0 0.0
  %721 = vmatprep.subr.mxu0 0.0
  %722 = vmatpush1.msra.mxu0 0.0
  %723 = vmatprep.subr.mxu0 0.0
  %724 = vmatpush1.msra.mxu0 0.0
  %725 = vmatprep.subr.mxu0 0.0
  %726 = vmatpush1.msra.mxu0 0.0
  %727 = vmatprep.subr.mxu0 0.0
  %728 = vmatpush1.msra.mxu0 0.0
  %729 = vmatprep.subr.mxu0 0.0
  %730 = vmatpush1.msra.mxu0 0.0
  %731 = vmatprep.subr.mxu0 0.0
  %732 = vmatpush1.msra.mxu0 0.0
  %733 = vmatprep.subr.mxu0 0.0
  %734 = vmatpush1.msra.mxu0 0.0
  %735 = vmatprep.subr.mxu0 0.0
  %736 = vmatpush1.msra.mxu0 0.0
  %737 = vmatprep.subr.mxu0 0.0
  %738 = vmatpush1.msra.mxu0 0.0
  %739 = vmatprep.subr.mxu0 0.0
  %740 = vmatpush1.msra.mxu0 0.0
  %741 = vmatprep.subr.mxu0 0.0
  %742 = vmatpush1.msra.mxu0 0.0
  %743 = vmatprep.subr.mxu0 0.0
  %744 = vmatpush1.msra.mxu0 0.0
  %745 = vmatprep.subr.mxu0 0.0
  %746 = vmatpush1.msra.mxu0 0.0
  %747 = vmatprep.subr.mxu0 0.0
  %748 = vmatpush1.msra.mxu0 0.0
  %749 = vmatprep.subr.mxu0 0.0
  %750 = vmatpush1.msra.mxu0 0.0
  %751 = vmatprep.subr.mxu0 0.0
  %752 = vmatpush1.msra.mxu0 0.0
  %753 = vmatprep.subr.mxu0 0.0
  %754 = vmatpush1.msra.mxu0 0.0
  %755 = vmatprep.subr.mxu0 0.0
  %756 = vmatpush1.msra.mxu0 0.0
  %757 = vmatprep.subr.mxu0 0.0
  %758 = vmatpush1.msra.mxu0 0.0
  %759 = vmatprep.subr.mxu0 0.0
  %760 = vmatpush1.msra.mxu0 0.0
  %761 = vmatprep.subr.mxu0 0.0
  %762 = vmatpush1.msra.mxu0 0.0
  %763 = vmatprep.subr.mxu0 0.0
  %764 = vmatpush1.msra.mxu0 0.0
  %765 = vmatprep.subr.mxu0 0.0
  %766 = vmatpush1.msra.mxu0 0.0
  %767 = vmatprep.subr.mxu0 0.0
  %768 = vmatpush1.msra.mxu0 0.0
  %769 = vmatprep.subr.mxu0 0.0
  %770 = vmatpush1.msra.mxu0 0.0
  %771 = vmatprep.subr.mxu0 0.0
  %772 = vmatpush1.msra.mxu0 0.0
  %773 = vmatprep.mubr.f32.mxu0 0.0
  %774 = vmatmul.mubr.f32.gmra.mrb[0].mxu0 %v707
  %v775 = vpop.f32.mrb[0].mxu0
  %v776 = vadd.f32 0.0, %v775
  %v777 = vpop.f32.mrb[0].mxu0
  %778 = vdwg.mxu0
  %v779 = vadd.f32 %v625, %v776
  %s780 = scalar_lea.vmem %s5, 32
  %v781 = vld [vmem:[%s780] sm:$0xff]
  %v783 = vsel %vm167, %v781, 0
  %785 = vmatprep.subr.mxu0 0.0
  %786 = vmatpush1.msra.mxu0 %v165
  %787 = vmatprep.subr.mxu0 0.0
  %788 = vmatpush1.msra.mxu0 0.0
  %789 = vmatprep.subr.mxu0 0.0
  %790 = vmatpush1.msra.mxu0 0.0
  %791 = vmatprep.subr.mxu0 0.0
  %792 = vmatpush1.msra.mxu0 0.0
  %793 = vmatprep.subr.mxu0 0.0
  %794 = vmatpush1.msra.mxu0 0.0
  %795 = vmatprep.subr.mxu0 0.0
  %796 = vmatpush1.msra.mxu0 0.0
  %797 = vmatprep.subr.mxu0 0.0
  %798 = vmatpush1.msra.mxu0 0.0
  %799 = vmatprep.subr.mxu0 0.0
  %800 = vmatpush1.msra.mxu0 0.0
  %801 = vmatprep.subr.mxu0 0.0
  %802 = vmatpush1.msra.mxu0 0.0
  %803 = vmatprep.subr.mxu0 0.0
  %804 = vmatpush1.msra.mxu0 0.0
  %805 = vmatprep.subr.mxu0 0.0
  %806 = vmatpush1.msra.mxu0 0.0
  %807 = vmatprep.subr.mxu0 0.0
  %808 = vmatpush1.msra.mxu0 0.0
  %809 = vmatprep.subr.mxu0 0.0
  %810 = vmatpush1.msra.mxu0 0.0
  %811 = vmatprep.subr.mxu0 0.0
  %812 = vmatpush1.msra.mxu0 0.0
  %813 = vmatprep.subr.mxu0 0.0
  %814 = vmatpush1.msra.mxu0 0.0
  %815 = vmatprep.subr.mxu0 0.0
  %816 = vmatpush1.msra.mxu0 0.0
  %817 = vmatprep.subr.mxu0 0.0
  %818 = vmatpush1.msra.mxu0 0.0
  %819 = vmatprep.subr.mxu0 0.0
  %820 = vmatpush1.msra.mxu0 0.0
  %821 = vmatprep.subr.mxu0 0.0
  %822 = vmatpush1.msra.mxu0 0.0
  %823 = vmatprep.subr.mxu0 0.0
  %824 = vmatpush1.msra.mxu0 0.0
  %825 = vmatprep.subr.mxu0 0.0
  %826 = vmatpush1.msra.mxu0 0.0
  %827 = vmatprep.subr.mxu0 0.0
  %828 = vmatpush1.msra.mxu0 0.0
  %829 = vmatprep.subr.mxu0 0.0
  %830 = vmatpush1.msra.mxu0 0.0
  %831 = vmatprep.subr.mxu0 0.0
  %832 = vmatpush1.msra.mxu0 0.0
  %833 = vmatprep.subr.mxu0 0.0
  %834 = vmatpush1.msra.mxu0 0.0
  %835 = vmatprep.subr.mxu0 0.0
  %836 = vmatpush1.msra.mxu0 0.0
  %837 = vmatprep.subr.mxu0 0.0
  %838 = vmatpush1.msra.mxu0 0.0
  %839 = vmatprep.subr.mxu0 0.0
  %840 = vmatpush1.msra.mxu0 0.0
  %841 = vmatprep.subr.mxu0 0.0
  %842 = vmatpush1.msra.mxu0 0.0
  %843 = vmatprep.subr.mxu0 0.0
  %844 = vmatpush1.msra.mxu0 0.0
  %845 = vmatprep.subr.mxu0 0.0
  %846 = vmatpush1.msra.mxu0 0.0
  %847 = vmatprep.subr.mxu0 0.0
  %848 = vmatpush1.msra.mxu0 0.0
  %849 = vmatprep.mubr.f32.mxu0 0.0
  %850 = vmatmul.mubr.f32.gmra.mrb[0].mxu0 %v783
  %v851 = vpop.f32.mrb[0].mxu0
  %v852 = vadd.f32 0.0, %v851
  %v853 = vpop.f32.mrb[0].mxu0
  %854 = vdwg.mxu0
  %s855 = scalar_lea.vmem %s6, 128
  %v856 = vld [vmem:[%s855] sm:$0xff]
  %v857 = vld [vmem:[%s855 + $0x8] sm:$0xff]
  %v858 = vld [vmem:[%s855 + $0x10] sm:$0xff]
  %v859 = vld [vmem:[%s855 + $0x18] sm:$0xff]
  %v861 = vsel %vm325, %v852, 0
  %863 = vmatprep.subr.mxu0 0.0
  %864 = vmatpush1.msra.mxu0 %v856
  %865 = vmatprep.subr.mxu0 0.0
  %866 = vmatpush1.msra.mxu0 %v857
  %867 = vmatprep.subr.mxu0 0.0
  %868 = vmatpush1.msra.mxu0 %v858
  %869 = vmatprep.subr.mxu0 0.0
  %870 = vmatpush1.msra.mxu0 %v859
  %871 = vmatprep.subr.mxu0 0.0
  %872 = vmatpush1.msra.mxu0 0.0
  %873 = vmatprep.subr.mxu0 0.0
  %874 = vmatpush1.msra.mxu0 0.0
  %875 = vmatprep.subr.mxu0 0.0
  %876 = vmatpush1.msra.mxu0 0.0
  %877 = vmatprep.subr.mxu0 0.0
  %878 = vmatpush1.msra.mxu0 0.0
  %879 = vmatprep.subr.mxu0 0.0
  %880 = vmatpush1.msra.mxu0 0.0
  %881 = vmatprep.subr.mxu0 0.0
  %882 = vmatpush1.msra.mxu0 0.0
  %883 = vmatprep.subr.mxu0 0.0
  %884 = vmatpush1.msra.mxu0 0.0
  %885 = vmatprep.subr.mxu0 0.0
  %886 = vmatpush1.msra.mxu0 0.0
  %887 = vmatprep.subr.mxu0 0.0
  %888 = vmatpush1.msra.mxu0 0.0
  %889 = vmatprep.subr.mxu0 0.0
  %890 = vmatpush1.msra.mxu0 0.0
  %891 = vmatprep.subr.mxu0 0.0
  %892 = vmatpush1.msra.mxu0 0.0
  %893 = vmatprep.subr.mxu0 0.0
  %894 = vmatpush1.msra.mxu0 0.0
  %895 = vmatprep.subr.mxu0 0.0
  %896 = vmatpush1.msra.mxu0 0.0
  %897 = vmatprep.subr.mxu0 0.0
  %898 = vmatpush1.msra.mxu0 0.0
  %899 = vmatprep.subr.mxu0 0.0
  %900 = vmatpush1.msra.mxu0 0.0
  %901 = vmatprep.subr.mxu0 0.0
  %902 = vmatpush1.msra.mxu0 0.0
  %903 = vmatprep.subr.mxu0 0.0
  %904 = vmatpush1.msra.mxu0 0.0
  %905 = vmatprep.subr.mxu0 0.0
  %906 = vmatpush1.msra.mxu0 0.0
  %907 = vmatprep.subr.mxu0 0.0
  %908 = vmatpush1.msra.mxu0 0.0
  %909 = vmatprep.subr.mxu0 0.0
  %910 = vmatpush1.msra.mxu0 0.0
  %911 = vmatprep.subr.mxu0 0.0
  %912 = vmatpush1.msra.mxu0 0.0
  %913 = vmatprep.subr.mxu0 0.0
  %914 = vmatpush1.msra.mxu0 0.0
  %915 = vmatprep.subr.mxu0 0.0
  %916 = vmatpush1.msra.mxu0 0.0
  %917 = vmatprep.subr.mxu0 0.0
  %918 = vmatpush1.msra.mxu0 0.0
  %919 = vmatprep.subr.mxu0 0.0
  %920 = vmatpush1.msra.mxu0 0.0
  %921 = vmatprep.subr.mxu0 0.0
  %922 = vmatpush1.msra.mxu0 0.0
  %923 = vmatprep.subr.mxu0 0.0
  %924 = vmatpush1.msra.mxu0 0.0
  %925 = vmatprep.subr.mxu0 0.0
  %926 = vmatpush1.msra.mxu0 0.0
  %927 = vmatprep.mubr.f32.mxu0 0.0
  %928 = vmatmul.mubr.f32.gmra.mrb[0].mxu0 %v861
  %v929 = vpop.f32.mrb[0].mxu0
  %v930 = vadd.f32 0.0, %v929
  %v931 = vpop.f32.mrb[0].mxu0
  %932 = vdwg.mxu0
  %v933 = vadd.f32 %v779, %v930
  %s934 = scalar_lea.vmem %s5, 40
  %v935 = vld [vmem:[%s934] sm:$0xff]
  %v937 = vsel %vm167, %v935, 0
  %939 = vmatprep.subr.mxu0 0.0
  %940 = vmatpush1.msra.mxu0 %v165
  %941 = vmatprep.subr.mxu0 0.0
  %942 = vmatpush1.msra.mxu0 0.0
  %943 = vmatprep.subr.mxu0 0.0
  %944 = vmatpush1.msra.mxu0 0.0
  %945 = vmatprep.subr.mxu0 0.0
  %946 = vmatpush1.msra.mxu0 0.0
  %947 = vmatprep.subr.mxu0 0.0
  %948 = vmatpush1.msra.mxu0 0.0
  %949 = vmatprep.subr.mxu0 0.0
  %950 = vmatpush1.msra.mxu0 0.0
  %951 = vmatprep.subr.mxu0 0.0
  %952 = vmatpush1.msra.mxu0 0.0
  %953 = vmatprep.subr.mxu0 0.0
  %954 = vmatpush1.msra.mxu0 0.0
  %955 = vmatprep.subr.mxu0 0.0
  %956 = vmatpush1.msra.mxu0 0.0
  %957 = vmatprep.subr.mxu0 0.0
  %958 = vmatpush1.msra.mxu0 0.0
  %959 = vmatprep.subr.mxu0 0.0
  %960 = vmatpush1.msra.mxu0 0.0
  %961 = vmatprep.subr.mxu0 0.0
  %962 = vmatpush1.msra.mxu0 0.0
  %963 = vmatprep.subr.mxu0 0.0
  %964 = vmatpush1.msra.mxu0 0.0
  %965 = vmatprep.subr.mxu0 0.0
  %966 = vmatpush1.msra.mxu0 0.0
  %967 = vmatprep.subr.mxu0 0.0
  %968 = vmatpush1.msra.mxu0 0.0
  %969 = vmatprep.subr.mxu0 0.0
  %970 = vmatpush1.msra.mxu0 0.0
  %971 = vmatprep.subr.mxu0 0.0
  %972 = vmatpush1.msra.mxu0 0.0
  %973 = vmatprep.subr.mxu0 0.0
  %974 = vmatpush1.msra.mxu0 0.0
  %975 = vmatprep.subr.mxu0 0.0
  %976 = vmatpush1.msra.mxu0 0.0
  %977 = vmatprep.subr.mxu0 0.0
  %978 = vmatpush1.msra.mxu0 0.0
  %979 = vmatprep.subr.mxu0 0.0
  %980 = vmatpush1.msra.mxu0 0.0
  %981 = vmatprep.subr.mxu0 0.0
  %982 = vmatpush1.msra.mxu0 0.0
  %983 = vmatprep.subr.mxu0 0.0
  %984 = vmatpush1.msra.mxu0 0.0
  %985 = vmatprep.subr.mxu0 0.0
  %986 = vmatpush1.msra.mxu0 0.0
  %987 = vmatprep.subr.mxu0 0.0
  %988 = vmatpush1.msra.mxu0 0.0
  %989 = vmatprep.subr.mxu0 0.0
  %990 = vmatpush1.msra.mxu0 0.0
  %991 = vmatprep.subr.mxu0 0.0
  %992 = vmatpush1.msra.mxu0 0.0
  %993 = vmatprep.subr.mxu0 0.0
  %994 = vmatpush1.msra.mxu0 0.0
  %995 = vmatprep.subr.mxu0 0.0
  %996 = vmatpush1.msra.mxu0 0.0
  %997 = vmatprep.subr.mxu0 0.0
  %998 = vmatpush1.msra.mxu0 0.0
  %999 = vmatprep.subr.mxu0 0.0
  %1000 = vmatpush1.msra.mxu0 0.0
  %1001 = vmatprep.subr.mxu0 0.0
  %1002 = vmatpush1.msra.mxu0 0.0
  %1003 = vmatprep.mubr.f32.mxu0 0.0
  %1004 = vmatmul.mubr.f32.gmra.mrb[0].mxu0 %v937
  %v1005 = vpop.f32.mrb[0].mxu0
  %v1006 = vadd.f32 0.0, %v1005
  %v1007 = vpop.f32.mrb[0].mxu0
  %1008 = vdwg.mxu0
  %s1009 = scalar_lea.vmem %s6, 160
  %v1010 = vld [vmem:[%s1009] sm:$0xff]
  %v1011 = vld [vmem:[%s1009 + $0x8] sm:$0xff]
  %v1012 = vld [vmem:[%s1009 + $0x10] sm:$0xff]
  %v1013 = vld [vmem:[%s1009 + $0x18] sm:$0xff]
  %v1015 = vsel %vm325, %v1006, 0
  %1017 = vmatprep.subr.mxu0 0.0
  %1018 = vmatpush1.msra.mxu0 %v1010
  %1019 = vmatprep.subr.mxu0 0.0
  %1020 = vmatpush1.msra.mxu0 %v1011
  %1021 = vmatprep.subr.mxu0 0.0
  %1022 = vmatpush1.msra.mxu0 %v1012
  %1023 = vmatprep.subr.mxu0 0.0
  %1024 = vmatpush1.msra.mxu0 %v1013
  %1025 = vmatprep.subr.mxu0 0.0
  %1026 = vmatpush1.msra.mxu0 0.0
  %1027 = vmatprep.subr.mxu0 0.0
  %1028 = vmatpush1.msra.mxu0 0.0
  %1029 = vmatprep.subr.mxu0 0.0
  %1030 = vmatpush1.msra.mxu0 0.0
  %1031 = vmatprep.subr.mxu0 0.0
  %1032 = vmatpush1.msra.mxu0 0.0
  %1033 = vmatprep.subr.mxu0 0.0
  %1034 = vmatpush1.msra.mxu0 0.0
  %1035 = vmatprep.subr.mxu0 0.0
  %1036 = vmatpush1.msra.mxu0 0.0
  %1037 = vmatprep.subr.mxu0 0.0
  %1038 = vmatpush1.msra.mxu0 0.0
  %1039 = vmatprep.subr.mxu0 0.0
  %1040 = vmatpush1.msra.mxu0 0.0
  %1041 = vmatprep.subr.mxu0 0.0
  %1042 = vmatpush1.msra.mxu0 0.0
  %1043 = vmatprep.subr.mxu0 0.0
  %1044 = vmatpush1.msra.mxu0 0.0
  %1045 = vmatprep.subr.mxu0 0.0
  %1046 = vmatpush1.msra.mxu0 0.0
  %1047 = vmatprep.subr.mxu0 0.0
  %1048 = vmatpush1.msra.mxu0 0.0
  %1049 = vmatprep.subr.mxu0 0.0
  %1050 = vmatpush1.msra.mxu0 0.0
  %1051 = vmatprep.subr.mxu0 0.0
  %1052 = vmatpush1.msra.mxu0 0.0
  %1053 = vmatprep.subr.mxu0 0.0
  %1054 = vmatpush1.msra.mxu0 0.0
  %1055 = vmatprep.subr.mxu0 0.0
  %1056 = vmatpush1.msra.mxu0 0.0
  %1057 = vmatprep.subr.mxu0 0.0
  %1058 = vmatpush1.msra.mxu0 0.0
  %1059 = vmatprep.subr.mxu0 0.0
  %1060 = vmatpush1.msra.mxu0 0.0
  %1061 = vmatprep.subr.mxu0 0.0
  %1062 = vmatpush1.msra.mxu0 0.0
  %1063 = vmatprep.subr.mxu0 0.0
  %1064 = vmatpush1.msra.mxu0 0.0
  %1065 = vmatprep.subr.mxu0 0.0
  %1066 = vmatpush1.msra.mxu0 0.0
  %1067 = vmatprep.subr.mxu0 0.0
  %1068 = vmatpush1.msra.mxu0 0.0
  %1069 = vmatprep.subr.mxu0 0.0
  %1070 = vmatpush1.msra.mxu0 0.0
  %1071 = vmatprep.subr.mxu0 0.0
  %1072 = vmatpush1.msra.mxu0 0.0
  %1073 = vmatprep.subr.mxu0 0.0
  %1074 = vmatpush1.msra.mxu0 0.0
  %1075 = vmatprep.subr.mxu0 0.0
  %1076 = vmatpush1.msra.mxu0 0.0
  %1077 = vmatprep.subr.mxu0 0.0
  %1078 = vmatpush1.msra.mxu0 0.0
  %1079 = vmatprep.subr.mxu0 0.0
  %1080 = vmatpush1.msra.mxu0 0.0
  %1081 = vmatprep.mubr.f32.mxu0 0.0
  %1082 = vmatmul.mubr.f32.gmra.mrb[0].mxu0 %v1015
  %v1083 = vpop.f32.mrb[0].mxu0
  %v1084 = vadd.f32 0.0, %v1083
  %v1085 = vpop.f32.mrb[0].mxu0
  %1086 = vdwg.mxu0
  %v1087 = vadd.f32 %v933, %v1084
  %s1088 = scalar_lea.vmem %s5, 48
  %v1089 = vld [vmem:[%s1088] sm:$0xff]
  %v1091 = vsel %vm167, %v1089, 0
  %1093 = vmatprep.subr.mxu0 0.0
  %1094 = vmatpush1.msra.mxu0 %v165
  %1095 = vmatprep.subr.mxu0 0.0
  %1096 = vmatpush1.msra.mxu0 0.0
  %1097 = vmatprep.subr.mxu0 0.0
  %1098 = vmatpush1.msra.mxu0 0.0
  %1099 = vmatprep.subr.mxu0 0.0
  %1100 = vmatpush1.msra.mxu0 0.0
  %1101 = vmatprep.subr.mxu0 0.0
  %1102 = vmatpush1.msra.mxu0 0.0
  %1103 = vmatprep.subr.mxu0 0.0
  %1104 = vmatpush1.msra.mxu0 0.0
  %1105 = vmatprep.subr.mxu0 0.0
  %1106 = vmatpush1.msra.mxu0 0.0
  %1107 = vmatprep.subr.mxu0 0.0
  %1108 = vmatpush1.msra.mxu0 0.0
  %1109 = vmatprep.subr.mxu0 0.0
  %1110 = vmatpush1.msra.mxu0 0.0
  %1111 = vmatprep.subr.mxu0 0.0
  %1112 = vmatpush1.msra.mxu0 0.0
  %1113 = vmatprep.subr.mxu0 0.0
  %1114 = vmatpush1.msra.mxu0 0.0
  %1115 = vmatprep.subr.mxu0 0.0
  %1116 = vmatpush1.msra.mxu0 0.0
  %1117 = vmatprep.subr.mxu0 0.0
  %1118 = vmatpush1.msra.mxu0 0.0
  %1119 = vmatprep.subr.mxu0 0.0
  %1120 = vmatpush1.msra.mxu0 0.0
  %1121 = vmatprep.subr.mxu0 0.0
  %1122 = vmatpush1.msra.mxu0 0.0
  %1123 = vmatprep.subr.mxu0 0.0
  %1124 = vmatpush1.msra.mxu0 0.0
  %1125 = vmatprep.subr.mxu0 0.0
  %1126 = vmatpush1.msra.mxu0 0.0
  %1127 = vmatprep.subr.mxu0 0.0
  %1128 = vmatpush1.msra.mxu0 0.0
  %1129 = vmatprep.subr.mxu0 0.0
  %1130 = vmatpush1.msra.mxu0 0.0
  %1131 = vmatprep.subr.mxu0 0.0
  %1132 = vmatpush1.msra.mxu0 0.0
  %1133 = vmatprep.subr.mxu0 0.0
  %1134 = vmatpush1.msra.mxu0 0.0
  %1135 = vmatprep.subr.mxu0 0.0
  %1136 = vmatpush1.msra.mxu0 0.0
  %1137 = vmatprep.subr.mxu0 0.0
  %1138 = vmatpush1.msra.mxu0 0.0
  %1139 = vmatprep.subr.mxu0 0.0
  %1140 = vmatpush1.msra.mxu0 0.0
  %1141 = vmatprep.subr.mxu0 0.0
  %1142 = vmatpush1.msra.mxu0 0.0
  %1143 = vmatprep.subr.mxu0 0.0
  %1144 = vmatpush1.msra.mxu0 0.0
  %1145 = vmatprep.subr.mxu0 0.0
  %1146 = vmatpush1.msra.mxu0 0.0
  %1147 = vmatprep.subr.mxu0 0.0
  %1148 = vmatpush1.msra.mxu0 0.0
  %1149 = vmatprep.subr.mxu0 0.0
  %1150 = vmatpush1.msra.mxu0 0.0
  %1151 = vmatprep.subr.mxu0 0.0
  %1152 = vmatpush1.msra.mxu0 0.0
  %1153 = vmatprep.subr.mxu0 0.0
  %1154 = vmatpush1.msra.mxu0 0.0
  %1155 = vmatprep.subr.mxu0 0.0
  %1156 = vmatpush1.msra.mxu0 0.0
  %1157 = vmatprep.mubr.f32.mxu0 0.0
  %1158 = vmatmul.mubr.f32.gmra.mrb[0].mxu0 %v1091
  %v1159 = vpop.f32.mrb[0].mxu0
  %v1160 = vadd.f32 0.0, %v1159
  %v1161 = vpop.f32.mrb[0].mxu0
  %1162 = vdwg.mxu0
  %s1163 = scalar_lea.vmem %s6, 192
  %v1164 = vld [vmem:[%s1163] sm:$0xff]
  %v1165 = vld [vmem:[%s1163 + $0x8] sm:$0xff]
  %v1166 = vld [vmem:[%s1163 + $0x10] sm:$0xff]
  %v1167 = vld [vmem:[%s1163 + $0x18] sm:$0xff]
  %v1169 = vsel %vm325, %v1160, 0
  %1171 = vmatprep.subr.mxu0 0.0
  %1172 = vmatpush1.msra.mxu0 %v1164
  %1173 = vmatprep.subr.mxu0 0.0
  %1174 = vmatpush1.msra.mxu0 %v1165
  %1175 = vmatprep.subr.mxu0 0.0
  %1176 = vmatpush1.msra.mxu0 %v1166
  %1177 = vmatprep.subr.mxu0 0.0
  %1178 = vmatpush1.msra.mxu0 %v1167
  %1179 = vmatprep.subr.mxu0 0.0
  %1180 = vmatpush1.msra.mxu0 0.0
  %1181 = vmatprep.subr.mxu0 0.0
  %1182 = vmatpush1.msra.mxu0 0.0
  %1183 = vmatprep.subr.mxu0 0.0
  %1184 = vmatpush1.msra.mxu0 0.0
  %1185 = vmatprep.subr.mxu0 0.0
  %1186 = vmatpush1.msra.mxu0 0.0
  %1187 = vmatprep.subr.mxu0 0.0
  %1188 = vmatpush1.msra.mxu0 0.0
  %1189 = vmatprep.subr.mxu0 0.0
  %1190 = vmatpush1.msra.mxu0 0.0
  %1191 = vmatprep.subr.mxu0 0.0
  %1192 = vmatpush1.msra.mxu0 0.0
  %1193 = vmatprep.subr.mxu0 0.0
  %1194 = vmatpush1.msra.mxu0 0.0
  %1195 = vmatprep.subr.mxu0 0.0
  %1196 = vmatpush1.msra.mxu0 0.0
  %1197 = vmatprep.subr.mxu0 0.0
  %1198 = vmatpush1.msra.mxu0 0.0
  %1199 = vmatprep.subr.mxu0 0.0
  %1200 = vmatpush1.msra.mxu0 0.0
  %1201 = vmatprep.subr.mxu0 0.0
  %1202 = vmatpush1.msra.mxu0 0.0
  %1203 = vmatprep.subr.mxu0 0.0
  %1204 = vmatpush1.msra.mxu0 0.0
  %1205 = vmatprep.subr.mxu0 0.0
  %1206 = vmatpush1.msra.mxu0 0.0
  %1207 = vmatprep.subr.mxu0 0.0
  %1208 = vmatpush1.msra.mxu0 0.0
  %1209 = vmatprep.subr.mxu0 0.0
  %1210 = vmatpush1.msra.mxu0 0.0
  %1211 = vmatprep.subr.mxu0 0.0
  %1212 = vmatpush1.msra.mxu0 0.0
  %1213 = vmatprep.subr.mxu0 0.0
  %1214 = vmatpush1.msra.mxu0 0.0
  %1215 = vmatprep.subr.mxu0 0.0
  %1216 = vmatpush1.msra.mxu0 0.0
  %1217 = vmatprep.subr.mxu0 0.0
  %1218 = vmatpush1.msra.mxu0 0.0
  %1219 = vmatprep.subr.mxu0 0.0
  %1220 = vmatpush1.msra.mxu0 0.0
  %1221 = vmatprep.subr.mxu0 0.0
  %1222 = vmatpush1.msra.mxu0 0.0
  %1223 = vmatprep.subr.mxu0 0.0
  %1224 = vmatpush1.msra.mxu0 0.0
  %1225 = vmatprep.subr.mxu0 0.0
  %1226 = vmatpush1.msra.mxu0 0.0
  %1227 = vmatprep.subr.mxu0 0.0
  %1228 = vmatpush1.msra.mxu0 0.0
  %1229 = vmatprep.subr.mxu0 0.0
  %1230 = vmatpush1.msra.mxu0 0.0
  %1231 = vmatprep.subr.mxu0 0.0
  %1232 = vmatpush1.msra.mxu0 0.0
  %1233 = vmatprep.subr.mxu0 0.0
  %1234 = vmatpush1.msra.mxu0 0.0
  %1235 = vmatprep.mubr.f32.mxu0 0.0
  %1236 = vmatmul.mubr.f32.gmra.mrb[0].mxu0 %v1169
  %v1237 = vpop.f32.mrb[0].mxu0
  %v1238 = vadd.f32 0.0, %v1237
  %v1239 = vpop.f32.mrb[0].mxu0
  %1240 = vdwg.mxu0
  %v1241 = vadd.f32 %v1087, %v1238
  %s1242 = scalar_lea.vmem %s5, 56
  %v1243 = vld [vmem:[%s1242] sm:$0xff]
  %v1245 = vsel %vm167, %v1243, 0
  %1247 = vmatprep.subr.mxu0 0.0
  %1248 = vmatpush1.msra.mxu0 %v165
  %1249 = vmatprep.subr.mxu0 0.0
  %1250 = vmatpush1.msra.mxu0 0.0
  %1251 = vmatprep.subr.mxu0 0.0
  %1252 = vmatpush1.msra.mxu0 0.0
  %1253 = vmatprep.subr.mxu0 0.0
  %1254 = vmatpush1.msra.mxu0 0.0
  %1255 = vmatprep.subr.mxu0 0.0
  %1256 = vmatpush1.msra.mxu0 0.0
  %1257 = vmatprep.subr.mxu0 0.0
  %1258 = vmatpush1.msra.mxu0 0.0
  %1259 = vmatprep.subr.mxu0 0.0
  %1260 = vmatpush1.msra.mxu0 0.0
  %1261 = vmatprep.subr.mxu0 0.0
  %1262 = vmatpush1.msra.mxu0 0.0
  %1263 = vmatprep.subr.mxu0 0.0
  %1264 = vmatpush1.msra.mxu0 0.0
  %1265 = vmatprep.subr.mxu0 0.0
  %1266 = vmatpush1.msra.mxu0 0.0
  %1267 = vmatprep.subr.mxu0 0.0
  %1268 = vmatpush1.msra.mxu0 0.0
  %1269 = vmatprep.subr.mxu0 0.0
  %1270 = vmatpush1.msra.mxu0 0.0
  %1271 = vmatprep.subr.mxu0 0.0
  %1272 = vmatpush1.msra.mxu0 0.0
  %1273 = vmatprep.subr.mxu0 0.0
  %1274 = vmatpush1.msra.mxu0 0.0
  %1275 = vmatprep.subr.mxu0 0.0
  %1276 = vmatpush1.msra.mxu0 0.0
  %1277 = vmatprep.subr.mxu0 0.0
  %1278 = vmatpush1.msra.mxu0 0.0
  %1279 = vmatprep.subr.mxu0 0.0
  %1280 = vmatpush1.msra.mxu0 0.0
  %1281 = vmatprep.subr.mxu0 0.0
  %1282 = vmatpush1.msra.mxu0 0.0
  %1283 = vmatprep.subr.mxu0 0.0
  %1284 = vmatpush1.msra.mxu0 0.0
  %1285 = vmatprep.subr.mxu0 0.0
  %1286 = vmatpush1.msra.mxu0 0.0
  %1287 = vmatprep.subr.mxu0 0.0
  %1288 = vmatpush1.msra.mxu0 0.0
  %1289 = vmatprep.subr.mxu0 0.0
  %1290 = vmatpush1.msra.mxu0 0.0
  %1291 = vmatprep.subr.mxu0 0.0
  %1292 = vmatpush1.msra.mxu0 0.0
  %1293 = vmatprep.subr.mxu0 0.0
  %1294 = vmatpush1.msra.mxu0 0.0
  %1295 = vmatprep.subr.mxu0 0.0
  %1296 = vmatpush1.msra.mxu0 0.0
  %1297 = vmatprep.subr.mxu0 0.0
  %1298 = vmatpush1.msra.mxu0 0.0
  %1299 = vmatprep.subr.mxu0 0.0
  %1300 = vmatpush1.msra.mxu0 0.0
  %1301 = vmatprep.subr.mxu0 0.0
  %1302 = vmatpush1.msra.mxu0 0.0
  %1303 = vmatprep.subr.mxu0 0.0
  %1304 = vmatpush1.msra.mxu0 0.0
  %1305 = vmatprep.subr.mxu0 0.0
  %1306 = vmatpush1.msra.mxu0 0.0
  %1307 = vmatprep.subr.mxu0 0.0
  %1308 = vmatpush1.msra.mxu0 0.0
  %1309 = vmatprep.subr.mxu0 0.0
  %1310 = vmatpush1.msra.mxu0 0.0
  %1311 = vmatprep.mubr.f32.mxu0 0.0
  %1312 = vmatmul.mubr.f32.gmra.mrb[0].mxu0 %v1245
  %v1313 = vpop.f32.mrb[0].mxu0
  %v1314 = vadd.f32 0.0, %v1313
  %v1315 = vpop.f32.mrb[0].mxu0
  %1316 = vdwg.mxu0
  %s1317 = scalar_lea.vmem %s6, 224
  %v1318 = vld [vmem:[%s1317] sm:$0xff]
  %v1319 = vld [vmem:[%s1317 + $0x8] sm:$0xff]
  %v1320 = vld [vmem:[%s1317 + $0x10] sm:$0xff]
  %v1321 = vld [vmem:[%s1317 + $0x18] sm:$0xff]
  %v1323 = vsel %vm325, %v1314, 0
  %1325 = vmatprep.subr.mxu0 0.0
  %1326 = vmatpush1.msra.mxu0 %v1318
  %1327 = vmatprep.subr.mxu0 0.0
  %1328 = vmatpush1.msra.mxu0 %v1319
  %1329 = vmatprep.subr.mxu0 0.0
  %1330 = vmatpush1.msra.mxu0 %v1320
  %1331 = vmatprep.subr.mxu0 0.0
  %1332 = vmatpush1.msra.mxu0 %v1321
  %1333 = vmatprep.subr.mxu0 0.0
  %1334 = vmatpush1.msra.mxu0 0.0
  %1335 = vmatprep.subr.mxu0 0.0
  %1336 = vmatpush1.msra.mxu0 0.0
  %1337 = vmatprep.subr.mxu0 0.0
  %1338 = vmatpush1.msra.mxu0 0.0
  %1339 = vmatprep.subr.mxu0 0.0
  %1340 = vmatpush1.msra.mxu0 0.0
  %1341 = vmatprep.subr.mxu0 0.0
  %1342 = vmatpush1.msra.mxu0 0.0
  %1343 = vmatprep.subr.mxu0 0.0
  %1344 = vmatpush1.msra.mxu0 0.0
  %1345 = vmatprep.subr.mxu0 0.0
  %1346 = vmatpush1.msra.mxu0 0.0
  %1347 = vmatprep.subr.mxu0 0.0
  %1348 = vmatpush1.msra.mxu0 0.0
  %1349 = vmatprep.subr.mxu0 0.0
  %1350 = vmatpush1.msra.mxu0 0.0
  %1351 = vmatprep.subr.mxu0 0.0
  %1352 = vmatpush1.msra.mxu0 0.0
  %1353 = vmatprep.subr.mxu0 0.0
  %1354 = vmatpush1.msra.mxu0 0.0
  %1355 = vmatprep.subr.mxu0 0.0
  %1356 = vmatpush1.msra.mxu0 0.0
  %1357 = vmatprep.subr.mxu0 0.0
  %1358 = vmatpush1.msra.mxu0 0.0
  %1359 = vmatprep.subr.mxu0 0.0
  %1360 = vmatpush1.msra.mxu0 0.0
  %1361 = vmatprep.subr.mxu0 0.0
  %1362 = vmatpush1.msra.mxu0 0.0
  %1363 = vmatprep.subr.mxu0 0.0
  %1364 = vmatpush1.msra.mxu0 0.0
  %1365 = vmatprep.subr.mxu0 0.0
  %1366 = vmatpush1.msra.mxu0 0.0
  %1367 = vmatprep.subr.mxu0 0.0
  %1368 = vmatpush1.msra.mxu0 0.0
  %1369 = vmatprep.subr.mxu0 0.0
  %1370 = vmatpush1.msra.mxu0 0.0
  %1371 = vmatprep.subr.mxu0 0.0
  %1372 = vmatpush1.msra.mxu0 0.0
  %1373 = vmatprep.subr.mxu0 0.0
  %1374 = vmatpush1.msra.mxu0 0.0
  %1375 = vmatprep.subr.mxu0 0.0
  %1376 = vmatpush1.msra.mxu0 0.0
  %1377 = vmatprep.subr.mxu0 0.0
  %1378 = vmatpush1.msra.mxu0 0.0
  %1379 = vmatprep.subr.mxu0 0.0
  %1380 = vmatpush1.msra.mxu0 0.0
  %1381 = vmatprep.subr.mxu0 0.0
  %1382 = vmatpush1.msra.mxu0 0.0
  %1383 = vmatprep.subr.mxu0 0.0
  %1384 = vmatpush1.msra.mxu0 0.0
  %1385 = vmatprep.subr.mxu0 0.0
  %1386 = vmatpush1.msra.mxu0 0.0
  %1387 = vmatprep.subr.mxu0 0.0
  %1388 = vmatpush1.msra.mxu0 0.0
  %1389 = vmatprep.mubr.f32.mxu0 0.0
  %1390 = vmatmul.mubr.f32.gmra.mrb[0].mxu0 %v1323
  %v1391 = vpop.f32.mrb[0].mxu0
  %v1392 = vadd.f32 0.0, %v1391
  %v1393 = vpop.f32.mrb[0].mxu0
  %1394 = vdwg.mxu0
  %v1395 = vadd.f32 %v1241, %v1392
  %s1396 = scalar_lea.vmem %s5, 64
  %v1397 = vld [vmem:[%s1396] sm:$0xff]
  %v1399 = vsel %vm167, %v1397, 0
  %1401 = vmatprep.subr.mxu0 0.0
  %1402 = vmatpush1.msra.mxu0 %v165
  %1403 = vmatprep.subr.mxu0 0.0
  %1404 = vmatpush1.msra.mxu0 0.0
  %1405 = vmatprep.subr.mxu0 0.0
  %1406 = vmatpush1.msra.mxu0 0.0
  %1407 = vmatprep.subr.mxu0 0.0
  %1408 = vmatpush1.msra.mxu0 0.0
  %1409 = vmatprep.subr.mxu0 0.0
  %1410 = vmatpush1.msra.mxu0 0.0
  %1411 = vmatprep.subr.mxu0 0.0
  %1412 = vmatpush1.msra.mxu0 0.0
  %1413 = vmatprep.subr.mxu0 0.0
  %1414 = vmatpush1.msra.mxu0 0.0
  %1415 = vmatprep.subr.mxu0 0.0
  %1416 = vmatpush1.msra.mxu0 0.0
  %1417 = vmatprep.subr.mxu0 0.0
  %1418 = vmatpush1.msra.mxu0 0.0
  %1419 = vmatprep.subr.mxu0 0.0
  %1420 = vmatpush1.msra.mxu0 0.0
  %1421 = vmatprep.subr.mxu0 0.0
  %1422 = vmatpush1.msra.mxu0 0.0
  %1423 = vmatprep.subr.mxu0 0.0
  %1424 = vmatpush1.msra.mxu0 0.0
  %1425 = vmatprep.subr.mxu0 0.0
  %1426 = vmatpush1.msra.mxu0 0.0
  %1427 = vmatprep.subr.mxu0 0.0
  %1428 = vmatpush1.msra.mxu0 0.0
  %1429 = vmatprep.subr.mxu0 0.0
  %1430 = vmatpush1.msra.mxu0 0.0
  %1431 = vmatprep.subr.mxu0 0.0
  %1432 = vmatpush1.msra.mxu0 0.0
  %1433 = vmatprep.subr.mxu0 0.0
  %1434 = vmatpush1.msra.mxu0 0.0
  %1435 = vmatprep.subr.mxu0 0.0
  %1436 = vmatpush1.msra.mxu0 0.0
  %1437 = vmatprep.subr.mxu0 0.0
  %1438 = vmatpush1.msra.mxu0 0.0
  %1439 = vmatprep.subr.mxu0 0.0
  %1440 = vmatpush1.msra.mxu0 0.0
  %1441 = vmatprep.subr.mxu0 0.0
  %1442 = vmatpush1.msra.mxu0 0.0
  %1443 = vmatprep.subr.mxu0 0.0
  %1444 = vmatpush1.msra.mxu0 0.0
  %1445 = vmatprep.subr.mxu0 0.0
  %1446 = vmatpush1.msra.mxu0 0.0
  %1447 = vmatprep.subr.mxu0 0.0
  %1448 = vmatpush1.msra.mxu0 0.0
  %1449 = vmatprep.subr.mxu0 0.0
  %1450 = vmatpush1.msra.mxu0 0.0
  %1451 = vmatprep.subr.mxu0 0.0
  %1452 = vmatpush1.msra.mxu0 0.0
  %1453 = vmatprep.subr.mxu0 0.0
  %1454 = vmatpush1.msra.mxu0 0.0
  %1455 = vmatprep.subr.mxu0 0.0
  %1456 = vmatpush1.msra.mxu0 0.0
  %1457 = vmatprep.subr.mxu0 0.0
  %1458 = vmatpush1.msra.mxu0 0.0
  %1459 = vmatprep.subr.mxu0 0.0
  %1460 = vmatpush1.msra.mxu0 0.0
  %1461 = vmatprep.subr.mxu0 0.0
  %1462 = vmatpush1.msra.mxu0 0.0
  %1463 = vmatprep.subr.mxu0 0.0
  %1464 = vmatpush1.msra.mxu0 0.0
  %1465 = vmatprep.mubr.f32.mxu0 0.0
  %1466 = vmatmul.mubr.f32.gmra.mrb[0].mxu0 %v1399
  %v1467 = vpop.f32.mrb[0].mxu0
  %v1468 = vadd.f32 0.0, %v1467
  %v1469 = vpop.f32.mrb[0].mxu0
  %1470 = vdwg.mxu0
  %s1471 = scalar_lea.vmem %s6, 256
  %v1472 = vld [vmem:[%s1471] sm:$0xff]
  %v1473 = vld [vmem:[%s1471 + $0x8] sm:$0xff]
  %v1474 = vld [vmem:[%s1471 + $0x10] sm:$0xff]
  %v1475 = vld [vmem:[%s1471 + $0x18] sm:$0xff]
  %v1477 = vsel %vm325, %v1468, 0
  %1479 = vmatprep.subr.mxu0 0.0
  %1480 = vmatpush1.msra.mxu0 %v1472
  %1481 = vmatprep.subr.mxu0 0.0
  %1482 = vmatpush1.msra.mxu0 %v1473
  %1483 = vmatprep.subr.mxu0 0.0
  %1484 = vmatpush1.msra.mxu0 %v1474
  %1485 = vmatprep.subr.mxu0 0.0
  %1486 = vmatpush1.msra.mxu0 %v1475
  %1487 = vmatprep.subr.mxu0 0.0
  %1488 = vmatpush1.msra.mxu0 0.0
  %1489 = vmatprep.subr.mxu0 0.0
  %1490 = vmatpush1.msra.mxu0 0.0
  %1491 = vmatprep.subr.mxu0 0.0
  %1492 = vmatpush1.msra.mxu0 0.0
  %1493 = vmatprep.subr.mxu0 0.0
  %1494 = vmatpush1.msra.mxu0 0.0
  %1495 = vmatprep.subr.mxu0 0.0
  %1496 = vmatpush1.msra.mxu0 0.0
  %1497 = vmatprep.subr.mxu0 0.0
  %1498 = vmatpush1.msra.mxu0 0.0
  %1499 = vmatprep.subr.mxu0 0.0
  %1500 = vmatpush1.msra.mxu0 0.0
  %1501 = vmatprep.subr.mxu0 0.0
  %1502 = vmatpush1.msra.mxu0 0.0
  %1503 = vmatprep.subr.mxu0 0.0
  %1504 = vmatpush1.msra.mxu0 0.0
  %1505 = vmatprep.subr.mxu0 0.0
  %1506 = vmatpush1.msra.mxu0 0.0
  %1507 = vmatprep.subr.mxu0 0.0
  %1508 = vmatpush1.msra.mxu0 0.0
  %1509 = vmatprep.subr.mxu0 0.0
  %1510 = vmatpush1.msra.mxu0 0.0
  %1511 = vmatprep.subr.mxu0 0.0
  %1512 = vmatpush1.msra.mxu0 0.0
  %1513 = vmatprep.subr.mxu0 0.0
  %1514 = vmatpush1.msra.mxu0 0.0
  %1515 = vmatprep.subr.mxu0 0.0
  %1516 = vmatpush1.msra.mxu0 0.0
  %1517 = vmatprep.subr.mxu0 0.0
  %1518 = vmatpush1.msra.mxu0 0.0
  %1519 = vmatprep.subr.mxu0 0.0
  %1520 = vmatpush1.msra.mxu0 0.0
  %1521 = vmatprep.subr.mxu0 0.0
  %1522 = vmatpush1.msra.mxu0 0.0
  %1523 = vmatprep.subr.mxu0 0.0
  %1524 = vmatpush1.msra.mxu0 0.0
  %1525 = vmatprep.subr.mxu0 0.0
  %1526 = vmatpush1.msra.mxu0 0.0
  %1527 = vmatprep.subr.mxu0 0.0
  %1528 = vmatpush1.msra.mxu0 0.0
  %1529 = vmatprep.subr.mxu0 0.0
  %1530 = vmatpush1.msra.mxu0 0.0
  %1531 = vmatprep.subr.mxu0 0.0
  %1532 = vmatpush1.msra.mxu0 0.0
  %1533 = vmatprep.subr.mxu0 0.0
  %1534 = vmatpush1.msra.mxu0 0.0
  %1535 = vmatprep.subr.mxu0 0.0
  %1536 = vmatpush1.msra.mxu0 0.0
  %1537 = vmatprep.subr.mxu0 0.0
  %1538 = vmatpush1.msra.mxu0 0.0
  %1539 = vmatprep.subr.mxu0 0.0
  %1540 = vmatpush1.msra.mxu0 0.0
  %1541 = vmatprep.subr.mxu0 0.0
  %1542 = vmatpush1.msra.mxu0 0.0
  %1543 = vmatprep.mubr.f32.mxu0 0.0
  %1544 = vmatmul.mubr.f32.gmra.mrb[0].mxu0 %v1477
  %v1545 = vpop.f32.mrb[0].mxu0
  %v1546 = vadd.f32 0.0, %v1545
  %v1547 = vpop.f32.mrb[0].mxu0
  %1548 = vdwg.mxu0
  %v1549 = vadd.f32 %v1395, %v1546
  %v1550 = vld [vmem:[%s7] sm:$0x1]
  %v1552 = vlaneseq
  %v1553 = vshrl.u32 %v1552, 7
  %v1554 = vsub.s32 0, %v1553
  %v1555 = vrot.slane %v1550, %v1554
  %v1557 = vadd.f32 %v1549, %v1555
  %v1558 = vmax.f32 %v1557, 0.0
  %v1559 = vld [vmem:[%s8] sm:$0xff]
  %v1560 = vld [vmem:[%s9] sm:$0xff]
  %v1561 = vld [vmem:[%s9 + $0x8] sm:$0xff]
  %vm1562 = vcmask 130048
  %v1564 = vsel %vm1562, %v1559, 0
  %1566 = vmatprep.subr.mxu0 0.0
  %1567 = vmatpush1.msra.mxu0 %v1560
  %1568 = vmatprep.subr.mxu0 0.0
  %1569 = vmatpush1.msra.mxu0 %v1561
  %1570 = vmatprep.subr.mxu0 0.0
  %1571 = vmatpush1.msra.mxu0 0.0
  %1572 = vmatprep.subr.mxu0 0.0
  %1573 = vmatpush1.msra.mxu0 0.0
  %1574 = vmatprep.subr.mxu0 0.0
  %1575 = vmatpush1.msra.mxu0 0.0
  %1576 = vmatprep.subr.mxu0 0.0
  %1577 = vmatpush1.msra.mxu0 0.0
  %1578 = vmatprep.subr.mxu0 0.0
  %1579 = vmatpush1.msra.mxu0 0.0
  %1580 = vmatprep.subr.mxu0 0.0
  %1581 = vmatpush1.msra.mxu0 0.0
  %1582 = vmatprep.subr.mxu0 0.0
  %1583 = vmatpush1.msra.mxu0 0.0
  %1584 = vmatprep.subr.mxu0 0.0
  %1585 = vmatpush1.msra.mxu0 0.0
  %1586 = vmatprep.subr.mxu0 0.0
  %1587 = vmatpush1.msra.mxu0 0.0
  %1588 = vmatprep.subr.mxu0 0.0
  %1589 = vmatpush1.msra.mxu0 0.0
  %1590 = vmatprep.subr.mxu0 0.0
  %1591 = vmatpush1.msra.mxu0 0.0
  %1592 = vmatprep.subr.mxu0 0.0
  %1593 = vmatpush1.msra.mxu0 0.0
  %1594 = vmatprep.subr.mxu0 0.0
  %1595 = vmatpush1.msra.mxu0 0.0
  %1596 = vmatprep.subr.mxu0 0.0
  %1597 = vmatpush1.msra.mxu0 0.0
  %1598 = vmatprep.subr.mxu0 0.0
  %1599 = vmatpush1.msra.mxu0 0.0
  %1600 = vmatprep.subr.mxu0 0.0
  %1601 = vmatpush1.msra.mxu0 0.0
  %1602 = vmatprep.subr.mxu0 0.0
  %1603 = vmatpush1.msra.mxu0 0.0
  %1604 = vmatprep.subr.mxu0 0.0
  %1605 = vmatpush1.msra.mxu0 0.0
  %1606 = vmatprep.subr.mxu0 0.0
  %1607 = vmatpush1.msra.mxu0 0.0
  %1608 = vmatprep.subr.mxu0 0.0
  %1609 = vmatpush1.msra.mxu0 0.0
  %1610 = vmatprep.subr.mxu0 0.0
  %1611 = vmatpush1.msra.mxu0 0.0
  %1612 = vmatprep.subr.mxu0 0.0
  %1613 = vmatpush1.msra.mxu0 0.0
  %1614 = vmatprep.subr.mxu0 0.0
  %1615 = vmatpush1.msra.mxu0 0.0
  %1616 = vmatprep.subr.mxu0 0.0
  %1617 = vmatpush1.msra.mxu0 0.0
  %1618 = vmatprep.subr.mxu0 0.0
  %1619 = vmatpush1.msra.mxu0 0.0
  %1620 = vmatprep.subr.mxu0 0.0
  %1621 = vmatpush1.msra.mxu0 0.0
  %1622 = vmatprep.subr.mxu0 0.0
  %1623 = vmatpush1.msra.mxu0 0.0
  %1624 = vmatprep.subr.mxu0 0.0
  %1625 = vmatpush1.msra.mxu0 0.0
  %1626 = vmatprep.subr.mxu0 0.0
  %1627 = vmatpush1.msra.mxu0 0.0
  %1628 = vmatprep.subr.mxu0 0.0
  %1629 = vmatpush1.msra.mxu0 0.0
  %1630 = vmatprep.mubr.f32.mxu0 0.0
  %1631 = vmatmul.mubr.f32.gmra.mrb[0].mxu0 %v1564
  %v1632 = vpop.f32.mrb[0].mxu0
  %v1633 = vadd.f32 0.0, %v1632
  %v1634 = vpop.f32.mrb[0].mxu0
  %1635 = vdwg.mxu0
  %v1636 = vadd.f32 %v1558, %v1633
  %v1637 = vld [vmem:[%s10] sm:$0x1]
  %v1639 = vlaneseq
  %v1640 = vshrl.u32 %v1639, 7
  %v1641 = vsub.s32 0, %v1640
  %v1642 = vrot.slane %v1637, %v1641
  %v1644 = vadd.f32 %v1636, %v1642
  %1645 = vst [vmem:[%s11] sm:$0xff] %v1644
  // Predicated region
  $region46: #{resnet_forward.8} parent=0 // pred_check
    _
  $region47: #{resnet_forward.8} parent=0 // pred_check_branch
    %1647 = sbr.rel (0) target = $region49
  $region48: #{resnet_forward.8} parent=0 // pred_region
    _
  $region49: #{resnet_forward.8} parent=0 // pred_fallthru
    _
  // Predicated region
  $region50: #{resnet_forward.8} parent=0 // pred_check
    _
  $region51: #{resnet_forward.8} parent=0 // pred_check_branch
    %1649 = sbr.rel (0) target = $region53
  $region52: #{resnet_forward.8} parent=0 // pred_region
    _
  $region53: #{resnet_forward.8} parent=0 // pred_fallthru
    _

// kernel: resnet_forward.9
$region0: #{resnet_forward.9}
  #allocation0 [shape = 'u32[]', space=smem, size = 0x4, offset = 0x4, fixed_abs, tag = 'smem constant byte address 0x4 - core index']
  #allocation1 [shape = 'u32[144,128]{1,0:T(1,128)}', space=vmem, size = 0x12000, scoped, tag = 'internal scratch']
  %s0 = inlined_call_operand.vmem [shape: f32[2,512], index: 0, kind: input, shape index: {}]
  %s1 = inlined_call_operand.vmem [shape: f32[512,128], index: 1, kind: input, shape index: {}]
  %s2 = inlined_call_operand.vmem [shape: f32[1,128], index: 2, kind: input, shape index: {}]
  %s3 = inlined_call_operand.hbm [shape: f32[2,128], index: 3, kind: output, shape index: {}]
  %s4 = sld [smem:[#allocation0]]
  $region22: #{resnet_forward.9} parent=0
    _
  %s6 = ssub.s32 1, %s4
  %s7 = scalar_select 0, %s6, %s4
  $region1: #{resnet_forward.9} parent=0
    #allocation2 [shape = 'u8[1024]{0}', space=vmem, size = 0x400, scoped, tag = 'output window, operand 0, single buffered']
    #allocation3 [shape = 's32[1]{0}', space=sflag, size = 0x4, scoped, tag = 'scoped memory for resnet_forward.9']
    %8 = vsyncpa [#allocation3], 0
    // Predicated region
    $region2: #{resnet_forward.9} parent=1 // pred_check
      _
    $region3: #{resnet_forward.9} parent=1 // pred_check_branch
      %10 = sbr.rel (0) target = $region5
    $region4: #{resnet_forward.9} parent=1 // pred_region
      _
    $region5: #{resnet_forward.9} parent=1 // pred_fallthru
      _
    // Predicated region
    $region6: #{resnet_forward.9} parent=1 // pred_check
      _
    $region7: #{resnet_forward.9} parent=1 // pred_check_branch
      %12 = sbr.rel (0) target = $region9
    $region8: #{resnet_forward.9} parent=1 // pred_region
      _
    $region9: #{resnet_forward.9} parent=1 // pred_fallthru
      _
    // Predicated region
    $region10: #{resnet_forward.9} parent=1 // pred_check
      _
    $region11: #{resnet_forward.9} parent=1 // pred_check_branch
      %14 = sbr.rel (0) target = $region13
    $region12: #{resnet_forward.9} parent=1 // pred_region
      _
    $region13: #{resnet_forward.9} parent=1 // pred_fallthru
      _
    %v15 = vld [vmem:[%s0] sm:$0xff]
    %v16 = vld [vmem:[%s1] sm:$0xff]
    %v17 = vld [vmem:[%s1 + $0x8] sm:$0xff]
    %v18 = vld [vmem:[%s1 + $0x10] sm:$0xff]
    %v19 = vld [vmem:[%s1 + $0x18] sm:$0xff]
    %v20 = vld [vmem:[%s1 + $0x20] sm:$0xff]
    %v21 = vld [vmem:[%s1 + $0x28] sm:$0xff]
    %v22 = vld [vmem:[%s1 + $0x30] sm:$0xff]
    %v23 = vld [vmem:[%s1 + $0x38] sm:$0xff]
    %v24 = vld [vmem:[%s1 + $0x40] sm:$0xff]
    %v25 = vld [vmem:[%s1 + $0x48] sm:$0xff]
    %v26 = vld [vmem:[%s1 + $0x50] sm:$0xff]
    %v27 = vld [vmem:[%s1 + $0x58] sm:$0xff]
    %v28 = vld [vmem:[%s1 + $0x60] sm:$0xff]
    %v29 = vld [vmem:[%s1 + $0x68] sm:$0xff]
    %v30 = vld [vmem:[%s1 + $0x70] sm:$0xff]
    %v31 = vld [vmem:[%s1 + $0x78] sm:$0xff]
    %v32 = vld [vmem:[%s1 + $0x80] sm:$0xff]
    %v33 = vld [vmem:[%s1 + $0x88] sm:$0xff]
    %v34 = vld [vmem:[%s1 + $0x90] sm:$0xff]
    %v35 = vld [vmem:[%s1 + $0x98] sm:$0xff]
    %v36 = vld [vmem:[%s1 + $0xa0] sm:$0xff]
    %v37 = vld [vmem:[%s1 + $0xa8] sm:$0xff]
    %v38 = vld [vmem:[%s1 + $0xb0] sm:$0xff]
    %v39 = vld [vmem:[%s1 + $0xb8] sm:$0xff]
    %v40 = vld [vmem:[%s1 + $0xc0] sm:$0xff]
    %v41 = vld [vmem:[%s1 + $0xc8] sm:$0xff]
    %v42 = vld [vmem:[%s1 + $0xd0] sm:$0xff]
    %v43 = vld [vmem:[%s1 + $0xd8] sm:$0xff]
    %v44 = vld [vmem:[%s1 + $0xe0] sm:$0xff]
    %v45 = vld [vmem:[%s1 + $0xe8] sm:$0xff]
    %v46 = vld [vmem:[%s1 + $0xf0] sm:$0xff]
    %v47 = vld [vmem:[%s1 + $0xf8] sm:$0xff]
    %v48 = vld [vmem:[%s1 + $0x100] sm:$0xff]
    %v49 = vld [vmem:[%s1 + $0x108] sm:$0xff]
    %v50 = vld [vmem:[%s1 + $0x110] sm:$0xff]
    %v51 = vld [vmem:[%s1 + $0x118] sm:$0xff]
    %v52 = vld [vmem:[%s1 + $0x120] sm:$0xff]
    %v53 = vld [vmem:[%s1 + $0x128] sm:$0xff]
    %v54 = vld [vmem:[%s1 + $0x130] sm:$0xff]
    %v55 = vld [vmem:[%s1 + $0x138] sm:$0xff]
    %v56 = vld [vmem:[%s1 + $0x140] sm:$0xff]
    %v57 = vld [vmem:[%s1 + $0x148] sm:$0xff]
    %v58 = vld [vmem:[%s1 + $0x150] sm:$0xff]
    %v59 = vld [vmem:[%s1 + $0x158] sm:$0xff]
    %v60 = vld [vmem:[%s1 + $0x160] sm:$0xff]
    %v61 = vld [vmem:[%s1 + $0x168] sm:$0xff]
    %v62 = vld [vmem:[%s1 + $0x170] sm:$0xff]
    %v63 = vld [vmem:[%s1 + $0x178] sm:$0xff]
    %v64 = vld [vmem:[%s1 + $0x180] sm:$0xff]
    %v65 = vld [vmem:[%s1 + $0x188] sm:$0xff]
    %v66 = vld [vmem:[%s1 + $0x190] sm:$0xff]
    %v67 = vld [vmem:[%s1 + $0x198] sm:$0xff]
    %v68 = vld [vmem:[%s1 + $0x1a0] sm:$0xff]
    %v69 = vld [vmem:[%s1 + $0x1a8] sm:$0xff]
    %v70 = vld [vmem:[%s1 + $0x1b0] sm:$0xff]
    %v71 = vld [vmem:[%s1 + $0x1b8] sm:$0xff]
    %v72 = vld [vmem:[%s1 + $0x1c0] sm:$0xff]
    %v73 = vld [vmem:[%s1 + $0x1c8] sm:$0xff]
    %v74 = vld [vmem:[%s1 + $0x1d0] sm:$0xff]
    %v75 = vld [vmem:[%s1 + $0x1d8] sm:$0xff]
    %v76 = vld [vmem:[%s1 + $0x1e0] sm:$0xff]
    %v77 = vld [vmem:[%s1 + $0x1e8] sm:$0xff]
    %v78 = vld [vmem:[%s1 + $0x1f0] sm:$0xff]
    %v79 = vld [vmem:[%s1 + $0x1f8] sm:$0xff]
    %v80 = vld [vmem:[%s2] sm:$0x1]
    %v82 = vlaneseq
    %v83 = vshrl.u32 %v82, 7
    %v84 = vsub.s32 0, %v83
    %v85 = vrot.slane %v80, %v84
    %v88 = vcombine.high %v15, %v15
    %v90 = vunpack.c.l.s4 1983009808
    %v91 = vunpack.c.0.s8 %v90
    %v92 = vlaneseq
    %v93 = vshrl.u32 %v92, 7
    %v94 = vsub.s32 %v91, %v93
    %v95 = vrot.slane %v15, %v94
    %v97 = vunpack.c.l.s4 1983009808
    %v98 = vunpack.c.0.s8 %v97
    %v99 = vlaneseq
    %v100 = vshrl.u32 %v99, 7
    %v101 = vsub.s32 %v98, %v100
    %v102 = vrot.slane %v88, %v101
    %v103 = vcombine.high %v95, %v95
    %v104 = vcombine.high %v102, %v102
    %109 = vmatprep.subr.mxu0 0.0
    %110 = vmatpush1.msra.mxu0 %v16
    %111 = vmatprep.subr.mxu0 0.0
    %112 = vmatpush1.msra.mxu0 %v17
    %113 = vmatprep.subr.mxu0 0.0
    %114 = vmatpush1.msra.mxu0 %v18
    %115 = vmatprep.subr.mxu0 0.0
    %116 = vmatpush1.msra.mxu0 %v19
    %117 = vmatprep.subr.mxu0 0.0
    %118 = vmatpush1.msra.mxu0 %v20
    %119 = vmatprep.subr.mxu0 0.0
    %120 = vmatpush1.msra.mxu0 %v21
    %121 = vmatprep.subr.mxu0 0.0
    %122 = vmatpush1.msra.mxu0 %v22
    %123 = vmatprep.subr.mxu0 0.0
    %124 = vmatpush1.msra.mxu0 %v23
    %125 = vmatprep.subr.mxu0 0.0
    %126 = vmatpush1.msra.mxu0 %v24
    %127 = vmatprep.subr.mxu0 0.0
    %128 = vmatpush1.msra.mxu0 %v25
    %129 = vmatprep.subr.mxu0 0.0
    %130 = vmatpush1.msra.mxu0 %v26
    %131 = vmatprep.subr.mxu0 0.0
    %132 = vmatpush1.msra.mxu0 %v27
    %133 = vmatprep.subr.mxu0 0.0
    %134 = vmatpush1.msra.mxu0 %v28
    %135 = vmatprep.subr.mxu0 0.0
    %136 = vmatpush1.msra.mxu0 %v29
    %137 = vmatprep.subr.mxu0 0.0
    %138 = vmatpush1.msra.mxu0 %v30
    %139 = vmatprep.subr.mxu0 0.0
    %140 = vmatpush1.msra.mxu0 %v31
    %141 = vmatprep.subr.mxu0 0.0
    %142 = vmatpush1.msra.mxu0 %v32
    %143 = vmatprep.subr.mxu0 0.0
    %144 = vmatpush1.msra.mxu0 %v33
    %145 = vmatprep.subr.mxu0 0.0
    %146 = vmatpush1.msra.mxu0 %v34
    %147 = vmatprep.subr.mxu0 0.0
    %148 = vmatpush1.msra.mxu0 %v35
    %149 = vmatprep.subr.mxu0 0.0
    %150 = vmatpush1.msra.mxu0 %v36
    %151 = vmatprep.subr.mxu0 0.0
    %152 = vmatpush1.msra.mxu0 %v37
    %153 = vmatprep.subr.mxu0 0.0
    %154 = vmatpush1.msra.mxu0 %v38
    %155 = vmatprep.subr.mxu0 0.0
    %156 = vmatpush1.msra.mxu0 %v39
    %157 = vmatprep.subr.mxu0 0.0
    %158 = vmatpush1.msra.mxu0 %v40
    %159 = vmatprep.subr.mxu0 0.0
    %160 = vmatpush1.msra.mxu0 %v41
    %161 = vmatprep.subr.mxu0 0.0
    %162 = vmatpush1.msra.mxu0 %v42
    %163 = vmatprep.subr.mxu0 0.0
    %164 = vmatpush1.msra.mxu0 %v43
    %165 = vmatprep.subr.mxu0 0.0
    %166 = vmatpush1.msra.mxu0 %v44
    %167 = vmatprep.subr.mxu0 0.0
    %168 = vmatpush1.msra.mxu0 %v45
    %169 = vmatprep.subr.mxu0 0.0
    %170 = vmatpush1.msra.mxu0 %v46
    %171 = vmatprep.subr.mxu0 0.0
    %172 = vmatpush1.msra.mxu0 %v47
    %173 = vmatprep.mubr.f32.mxu0 %v103
    %174 = vmatmul.mubr.f32.gmra.mrb[0].mxu0 %v95
    %v175 = vpop.f32.mrb[0].mxu0
    %v176 = vadd.f32 %v85, %v175
    %v177 = vpop.f32.mrb[0].mxu0
    %178 = vdwg.mxu0
    %179 = vmatprep.subr.mxu0 0.0
    %180 = vmatpush1.msra.mxu0 %v48
    %181 = vmatprep.subr.mxu0 0.0
    %182 = vmatpush1.msra.mxu0 %v49
    %183 = vmatprep.subr.mxu0 0.0
    %184 = vmatpush1.msra.mxu0 %v50
    %185 = vmatprep.subr.mxu0 0.0
    %186 = vmatpush1.msra.mxu0 %v51
    %187 = vmatprep.subr.mxu0 0.0
    %188 = vmatpush1.msra.mxu0 %v52
    %189 = vmatprep.subr.mxu0 0.0
    %190 = vmatpush1.msra.mxu0 %v53
    %191 = vmatprep.subr.mxu0 0.0
    %192 = vmatpush1.msra.mxu0 %v54
    %193 = vmatprep.subr.mxu0 0.0
    %194 = vmatpush1.msra.mxu0 %v55
    %195 = vmatprep.subr.mxu0 0.0
    %196 = vmatpush1.msra.mxu0 %v56
    %197 = vmatprep.subr.mxu0 0.0
    %198 = vmatpush1.msra.mxu0 %v57
    %199 = vmatprep.subr.mxu0 0.0
    %200 = vmatpush1.msra.mxu0 %v58
    %201 = vmatprep.subr.mxu0 0.0
    %202 = vmatpush1.msra.mxu0 %v59
    %203 = vmatprep.subr.mxu0 0.0
    %204 = vmatpush1.msra.mxu0 %v60
    %205 = vmatprep.subr.mxu0 0.0
    %206 = vmatpush1.msra.mxu0 %v61
    %207 = vmatprep.subr.mxu0 0.0
    %208 = vmatpush1.msra.mxu0 %v62
    %209 = vmatprep.subr.mxu0 0.0
    %210 = vmatpush1.msra.mxu0 %v63
    %211 = vmatprep.subr.mxu0 0.0
    %212 = vmatpush1.msra.mxu0 %v64
    %213 = vmatprep.subr.mxu0 0.0
    %214 = vmatpush1.msra.mxu0 %v65
    %215 = vmatprep.subr.mxu0 0.0
    %216 = vmatpush1.msra.mxu0 %v66
    %217 = vmatprep.subr.mxu0 0.0
    %218 = vmatpush1.msra.mxu0 %v67
    %219 = vmatprep.subr.mxu0 0.0
    %220 = vmatpush1.msra.mxu0 %v68
    %221 = vmatprep.subr.mxu0 0.0
    %222 = vmatpush1.msra.mxu0 %v69
    %223 = vmatprep.subr.mxu0 0.0
    %224 = vmatpush1.msra.mxu0 %v70
    %225 = vmatprep.subr.mxu0 0.0
    %226 = vmatpush1.msra.mxu0 %v71
    %227 = vmatprep.subr.mxu0 0.0
    %228 = vmatpush1.msra.mxu0 %v72
    %229 = vmatprep.subr.mxu0 0.0
    %230 = vmatpush1.msra.mxu0 %v73
    %231 = vmatprep.subr.mxu0 0.0
    %232 = vmatpush1.msra.mxu0 %v74
    %233 = vmatprep.subr.mxu0 0.0
    %234 = vmatpush1.msra.mxu0 %v75
    %235 = vmatprep.subr.mxu0 0.0
    %236 = vmatpush1.msra.mxu0 %v76
    %237 = vmatprep.subr.mxu0 0.0
    %238 = vmatpush1.msra.mxu0 %v77
    %239 = vmatprep.subr.mxu0 0.0
    %240 = vmatpush1.msra.mxu0 %v78
    %241 = vmatprep.subr.mxu0 0.0
    %242 = vmatpush1.msra.mxu0 %v79
    %243 = vmatprep.mubr.f32.mxu0 %v104
    %244 = vmatmul.mubr.f32.gmra.mrb[0].mxu0 %v102
    %v245 = vpop.f32.mrb[0].mxu0
    %v246 = vadd.f32 %v176, %v245
    %v247 = vpop.f32.mrb[0].mxu0
    %248 = vdwg.mxu0
    %249 = vst [vmem:[#allocation2] sm:$0x3] %v246
    // Predicated region
    $region14: #{resnet_forward.9} parent=1 // pred_check
      _
    $region15: #{resnet_forward.9} parent=1 // pred_check_branch
      %251 = sbr.rel (0) target = $region17
    $region16: #{resnet_forward.9} parent=1 // pred_region
      %s253 = ssub.s32 32, 32
      %254 = vsyncadd [#allocation3], %s253
      %s256 = sshll.u32 [#allocation2], 4
      %s257 = int_to_ptr.vmem [resolvable:$true] %s256
      %259 = dma.vmem_to_hbm [thread:$0]  %s257, 32, %s3, [#allocation3]
    $region17: #{resnet_forward.9} parent=1 // pred_fallthru
      _
    // Predicated region
    $region18: #{resnet_forward.9} parent=1 // pred_check
      _
    $region19: #{resnet_forward.9} parent=1 // pred_check_branch
      %261 = sbr.rel (0) target = $region21
    $region20: #{resnet_forward.9} parent=1 // pred_region
      %262 = dma.done [#allocation3], 32
    $region21: #{resnet_forward.9} parent=1 // pred_fallthru
      _
    %263 = vsyncpa [#allocation3], 1

</llo_original>
